<compile_context>
chip_gen: v5e
topology: v5e:2x2
jax: 0.10.0
libtpu: 0.0.40
codegen_flags: <defaults>
</compile_context>

<pallas_src>
import numpy as np
import jax
import jax.numpy as jnp
from jax import lax
from jax.experimental import pallas as pl
from jax.experimental.pallas import tpu as pltpu

NEG_SLOPE = 0.01  # nn.LeakyReLU default


def _leaky(v):
    return jnp.where(v >= 0, v, NEG_SLOPE * v)


def _zero_halo(xp, H, W):
    """Zero ONLY the 1-pixel halo ring of an (H+2, W+2, C) scratch (per step)."""
    C = xp.shape[-1]
    xp[0:1, :, :] = jnp.zeros((1, W + 2, C), jnp.float32)
    xp[H + 1:H + 2, :, :] = jnp.zeros((1, W + 2, C), jnp.float32)
    xp[:, 0:1, :] = jnp.zeros((H + 2, 1, C), jnp.float32)
    xp[:, W + 1:W + 2, :] = jnp.zeros((H + 2, 1, C), jnp.float32)


def _dwconv3x3(xpad_ref, w, H, W):
    """Depthwise 3x3 over a zero-halo (H+2, W+2, C) VMEM scratch ref.

    Only the 3 W-shifted (sublane-shifted) slabs are materialised; the 3 H
    offsets per slab are free outer-dim slices.  `w` is (9, C) with the BN
    scale already folded in, tap order dh*3 + dw.
    """
    xw = [xpad_ref[:, d:d + W, :] for d in range(3)]     # each (H+2, W, C)
    C = xw[0].shape[-1]
    acc = jnp.zeros((H, W, C), jnp.float32)
    for dh in range(3):
        for dw in range(3):
            acc = acc + xw[dw][dh:dh + H] * w[dh * 3 + dw]
    return acc


# ----------------------------------------------------------------------------
# Fused kernel: block1 -> block2 -> separable 2x bilinear upsample, one image
# per grid step.
# ----------------------------------------------------------------------------
def mcm_fused_kernel(x_ref, dw1_ref, b1_ref, pw1_ref, b2_ref,
                     dw2_ref, b3_ref, pw2_ref, b4_ref, uw_ref,
                     out_ref, xp1, tp2):
    H, W, Cin = x_ref.shape[1], x_ref.shape[2], x_ref.shape[3]
    Ho, Wo, Cout = out_ref.shape[1], out_ref.shape[2], out_ref.shape[3]

    # ---- block 1: dw3x3 (BN folded) + LeakyReLU + 1x1 (BN folded) + LeakyReLU
    _zero_halo(xp1, H, W)                                  # halo ring only
    xp1[1:H + 1, 1:W + 1, :] = x_ref[0]

    y1 = _leaky(_dwconv3x3(xp1, dw1_ref[...], H, W) + b1_ref[0])   # (H, W, Cin)

    # 1x1 conv == channel matmul.  K = Cin is tiny here -> keep f32.
    z1 = jnp.dot(y1.reshape(H * W, Cin), pw1_ref[...],
                 preferred_element_type=jnp.float32) + b2_ref[0]
    z1 = _leaky(z1)                                        # (H*W, Cout)

    # ---- block 2: the intermediate never leaves VMEM
    _zero_halo(tp2, H, W)
    tp2[1:H + 1, 1:W + 1, :] = z1.reshape(H, W, Cout)

    y2 = _leaky(_dwconv3x3(tp2, dw2_ref[...], H, W) + b3_ref[0])   # (H, W, Cout)

    # K = Cout = 128: bf16 operands, f32 accumulation on the MXU.
    z2 = jnp.dot(y2.reshape(H * W, Cout).astype(jnp.bfloat16), pw2_ref[...],
                 preferred_element_type=jnp.float32) + b4_ref[0]
    z2 = _leaky(z2)                                        # (H*W, Cout)

    # ---- separable bilinear 2x upsample epilogue -----------------------------
    # W direction: per-row MXU matmul with the (2W, W) bf16 interpolation
    # matrix (lerp + even/odd column interleave in one shot, no relayouts).
    z3 = z2.reshape(H, W, Cout).astype(jnp.bfloat16)       # reshape is a no-op (W%8==0)
    uw_b = jnp.broadcast_to(uw_ref[...], (H, Wo, W))
    zw = jnp.einsum('how,hwc->hoc', uw_b, z3,
                    preferred_element_type=jnp.float32)    # (H, 2W, Cout) f32

    # H direction (align_corners=False, scale=2): even rows = .75*cur + .25*prev,
    # odd rows = .75*cur + .25*next, edges clamp.  Outer-dim slices are free and
    # the even/odd interleave is an outer-dim stack+reshape (layout no-op).
    prev = jnp.concatenate([zw[:1], zw[:H - 1]], axis=0)
    nxt = jnp.concatenate([zw[1:], zw[H - 1:]], axis=0)
    even = 0.75 * zw + 0.25 * prev
    odd = 0.75 * zw + 0.25 * nxt
    out_ref[0] = jnp.stack([even, odd], axis=1).reshape(Ho, Wo, Cout)


def mismatch_correction_forward_nhwc(x_nhwc, fp, uw_bf16):
    """Fused MCM forward.  x_nhwc: (B, H, W, Cin); returns (B, 2H, 2W, Cout) f32."""
    B, H, W, Cin = x_nhwc.shape
    Cout = fp['pw2'].shape[1]
    Ho, Wo = 2 * H, 2 * W

    return pl.pallas_call(
        mcm_fused_kernel,
        out_shape=jax.ShapeDtypeStruct((B, Ho, Wo, Cout), jnp.float32),
        grid=(B,),
        in_specs=[
            pl.BlockSpec((1, H, W, Cin), lambda b: (b, 0, 0, 0)),
            pl.BlockSpec((9, Cin), lambda b: (0, 0)),
            pl.BlockSpec((1, Cin), lambda b: (0, 0)),
            pl.BlockSpec((Cin, Cout), lambda b: (0, 0)),
            pl.BlockSpec((1, Cout), lambda b: (0, 0)),
            pl.BlockSpec((9, Cout), lambda b: (0, 0)),
            pl.BlockSpec((1, Cout), lambda b: (0, 0)),
            pl.BlockSpec((Cout, Cout), lambda b: (0, 0)),
            pl.BlockSpec((1, Cout), lambda b: (0, 0)),
            pl.BlockSpec((Wo, W), lambda b: (0, 0)),         # (2W, W) bf16 interp
        ],
        out_specs=pl.BlockSpec((1, Ho, Wo, Cout), lambda b: (b, 0, 0, 0)),
        scratch_shapes=[
            pltpu.VMEM((H + 2, W + 2, Cin), jnp.float32),    # padded block-1 input
            pltpu.VMEM((H + 2, W + 2, Cout), jnp.float32),   # padded block-1 output
        ],
        compiler_params=pltpu.CompilerParams(
            dimension_semantics=("parallel",),               # batch iters independent
            vmem_limit_bytes=32 * 1024 * 1024),
    )(x_nhwc, fp['dw1'], fp['b1'], fp['pw1'], fp['b2'],
      fp['dw2'], fp['b3'], fp['pw2'], fp['b4'], uw_bf16)


def mismatch_correction_forward(x_nchw, fp, uw_bf16):
    x = jnp.transpose(x_nchw, (0, 2, 3, 1))                  # NCHW -> NHWC
    out = mismatch_correction_forward_nhwc(x, fp, uw_bf16)
    # TODO(synk): keep the surrounding graph NHWC to drop this extra HBM pass.
    return jnp.transpose(out, (0, 3, 1, 2))                  # NHWC -> NCHW


# ----------------------------------------------------------------------------
# Parameter construction / folding (glue)
# ----------------------------------------------------------------------------
def bilinear_matrix_np(n_in, scale=2):
    """(scale*n_in, n_in) interpolation weights, PyTorch align_corners=False."""
    n_out = n_in * scale
    m = np.zeros((n_out, n_in), np.float32)
    for o in range(n_out):
        src = max((o + 0.5) / scale - 0.5, 0.0)
        i0 = int(np.floor(src))
        frac = src - i0
        i1 = min(i0 + 1, n_in - 1)
        i0 = min(i0, n_in - 1)
        m[o, i0] += 1.0 - frac
        m[o, i1] += frac
    return m


def bn_fold(key, C, eps=1e-5):
    """Deterministic synthetic eval-mode BN -> per-channel scale/bias."""
    k1, k2, k3, k4 = jax.random.split(key, 4)
    gamma = 1.0 + 0.1 * jax.random.normal(k1, (C,), jnp.float32)
    beta = 0.1 * jax.random.normal(k2, (C,), jnp.float32)
    mean = 0.1 * jax.random.normal(k3, (C,), jnp.float32)
    var = 0.5 + jax.random.uniform(k4, (C,), jnp.float32)
    scale = gamma / jnp.sqrt(var + eps)
    bias = beta - mean * scale
    return scale.reshape(1, C), bias.reshape(1, C)


def fold_params(p):
    """Fold BN scales into the conv weights; keep only additive biases."""
    return dict(
        dw1=p['dw1'] * p['s11'],                         # (9, Cin)
        b1=p['b11'],
        pw1=p['pw1'] * p['s12'],                         # (Cin, Cout)  f32 (tiny K)
        b2=p['b12'],
        dw2=p['dw2'] * p['s21'],                         # (9, Cout)
        b3=p['b21'],
        pw2=(p['pw2'] * p['s22']).astype(jnp.bfloat16),  # (Cout, Cout) bf16 for MXU
        b4=p['b22'],
    )


# ----------------------------------------------------------------------------
# Pure-JAX reference (sanity check).  Mirrors the kernel's deliberate precision
# choices (BN folded into weights, bf16 operands for the K=128 matmul and the
# W-direction upsample matmul) so the assert isolates implementation bugs.
# ----------------------------------------------------------------------------
def _ref_sep_block(x, dwf, b1, pwf, b2, matmul_bf16):
    C = x.shape[-1]
    rhs = dwf.reshape(3, 3, 1, C)
    y = lax.conv_general_dilated(
        x, rhs, (1, 1), 'SAME',
        dimension_numbers=('NHWC', 'HWIO', 'NHWC'), feature_group_count=C)
    y = _leaky(y + b1)
    a = y.astype(jnp.bfloat16) if matmul_bf16 else y
    z = jnp.einsum('bhwc,cd->bhwd', a, pwf,
                   preferred_element_type=jnp.float32)
    return _leaky(z + b2)


def ref_forward(x_nchw, fp, uh, uw):
    x = jnp.transpose(x_nchw, (0, 2, 3, 1))
    x = _ref_sep_block(x, fp['dw1'], fp['b1'], fp['pw1'], fp['b2'], False)
    x = _ref_sep_block(x, fp['dw2'], fp['b3'], fp['pw2'], fp['b4'], True)
    # separable bilinear 2x; mirror the kernel's bf16 W-direction operands
    zw = jnp.einsum('ow,bhwc->bhoc', uw.astype(jnp.bfloat16),
                    x.astype(jnp.bfloat16), preferred_element_type=jnp.float32)
    out = jnp.einsum('ph,bhoc->bpoc', uh, zw)
    return jnp.transpose(out, (0, 3, 1, 2))


if __name__ == "__main__":
    B, Cin, H, W = 2, 4, 16, 16
    Cout = 128

    key = jax.random.PRNGKey(0)
    ks = jax.random.split(key, 9)

    x_nchw = jax.random.normal(ks[0], (B, Cin, H, W), jnp.float32)

    raw = {}
    # block 1
    raw['dw1'] = 0.2 * jax.random.normal(ks[1], (9, Cin), jnp.float32)
    raw['pw1'] = 0.2 * jax.random.normal(ks[2], (Cin, Cout), jnp.float32)
    raw['s11'], raw['b11'] = bn_fold(ks[3], Cin)
    raw['s12'], raw['b12'] = bn_fold(ks[4], Cout)
    # block 2
    raw['dw2'] = 0.2 * jax.random.normal(ks[5], (9, Cout), jnp.float32)
    raw['pw2'] = 0.2 * jax.random.normal(ks[6], (Cout, Cout), jnp.float32)
    raw['s21'], raw['b21'] = bn_fold(ks[7], Cout)
    raw['s22'], raw['b22'] = bn_fold(ks[8], Cout)

    fp = fold_params(raw)

    uh_np = bilinear_matrix_np(H, 2)      # (2H, H): reference only (kernel lerps H)
    uw_np = bilinear_matrix_np(W, 2)      # (2W, W): kernel W-direction matmul
    uw_bf16 = jnp.asarray(uw_np).astype(jnp.bfloat16)   # 0/.25/.75/1 exact in bf16

    out = mismatch_correction_forward(x_nchw, fp, uw_bf16)
    out = jax.block_until_ready(out)
    assert out.shape == (B, Cout, 2 * H, 2 * W), out.shape

    ref = jax.block_until_ready(
        ref_forward(x_nchw, fp, jnp.asarray(uh_np), jnp.asarray(uw_np)))
    np.testing.assert_allclose(np.asarray(out), np.asarray(ref),
                               rtol=2e-2, atol=2e-3)

    print("KERNEL_OK")
</pallas_src>

<mosaic_0001>
module attributes {stable_mosaic.version = 11 : i64} {
  func.func @mcm_fused_kernel(%arg0: i32, %arg1: memref<1x16x16x4xf32, #tpu.memory_space<vmem>>, %arg2: memref<9x4xf32, #tpu.memory_space<vmem>>, %arg3: memref<1x4xf32, #tpu.memory_space<vmem>>, %arg4: memref<4x128xf32, #tpu.memory_space<vmem>>, %arg5: memref<1x128xf32, #tpu.memory_space<vmem>>, %arg6: memref<9x128xf32, #tpu.memory_space<vmem>>, %arg7: memref<1x128xf32, #tpu.memory_space<vmem>>, %arg8: memref<128x128xbf16, #tpu.memory_space<vmem>>, %arg9: memref<1x128xf32, #tpu.memory_space<vmem>>, %arg10: memref<32x16xbf16, #tpu.memory_space<vmem>>, %arg11: memref<1x32x32x128xf32, #tpu.memory_space<vmem>>, %arg12: memref<18x18x4xf32, #tpu.memory_space<vmem>>, %arg13: memref<18x18x128xf32, #tpu.memory_space<vmem>>) attributes {dimension_semantics = [#tpu.dimension_semantics<parallel>], iteration_bounds = array<i64: 2>, scalar_prefetch = 0 : i64, scratch_operands = 2 : i64, tpu.core_type = #tpu.core_type<tc>, window_params = [{transform_indices = @transform_0, window_bounds = array<i64: 1, 16, 16, 4>}, {pipeline_mode = #tpu.pipeline_mode<synchronous>, transform_indices = @transform_1, window_bounds = array<i64: 9, 4>}, {pipeline_mode = #tpu.pipeline_mode<synchronous>, transform_indices = @transform_2, window_bounds = array<i64: 1, 4>}, {pipeline_mode = #tpu.pipeline_mode<synchronous>, transform_indices = @transform_3, window_bounds = array<i64: 4, 128>}, {pipeline_mode = #tpu.pipeline_mode<synchronous>, transform_indices = @transform_4, window_bounds = array<i64: 1, 128>}, {pipeline_mode = #tpu.pipeline_mode<synchronous>, transform_indices = @transform_5, window_bounds = array<i64: 9, 128>}, {pipeline_mode = #tpu.pipeline_mode<synchronous>, transform_indices = @transform_6, window_bounds = array<i64: 1, 128>}, {pipeline_mode = #tpu.pipeline_mode<synchronous>, transform_indices = @transform_7, window_bounds = array<i64: 128, 128>}, {pipeline_mode = #tpu.pipeline_mode<synchronous>, transform_indices = @transform_8, window_bounds = array<i64: 1, 128>}, {pipeline_mode = #tpu.pipeline_mode<synchronous>, transform_indices = @transform_9, window_bounds = array<i64: 32, 16>}, {transform_indices = @transform_10, window_bounds = array<i64: 1, 32, 32, 128>}]} {
    %cst = arith.constant 0.000000e+00 : f32
    %0 = vector.broadcast %cst : f32 to vector<1x18x4xf32>
    %c0 = arith.constant 0 : index
    %c0_0 = arith.constant 0 : index
    %c0_1 = arith.constant 0 : index
    %1 = vector.load %arg12[%c0, %c0_0, %c0_1] : memref<18x18x4xf32, #tpu.memory_space<vmem>>, vector<1x18x4xf32>
    tpu.vector_store %arg12[%c0, %c0_0, %c0_1], %0 {strides = array<i32>} : memref<18x18x4xf32, #tpu.memory_space<vmem>>, vector<1x18x4xf32>,
    %cst_2 = arith.constant 0.000000e+00 : f32
    %2 = vector.broadcast %cst_2 : f32 to vector<1x18x4xf32>
    %c17 = arith.constant 17 : index
    %c0_3 = arith.constant 0 : index
    %c0_4 = arith.constant 0 : index
    %3 = vector.load %arg12[%c17, %c0_3, %c0_4] : memref<18x18x4xf32, #tpu.memory_space<vmem>>, vector<1x18x4xf32>
    tpu.vector_store %arg12[%c17, %c0_3, %c0_4], %2 {strides = array<i32>} : memref<18x18x4xf32, #tpu.memory_space<vmem>>, vector<1x18x4xf32>,
    %cst_5 = arith.constant 0.000000e+00 : f32
    %4 = vector.broadcast %cst_5 : f32 to vector<18x1x4xf32>
    %c0_6 = arith.constant 0 : index
    %c0_7 = arith.constant 0 : index
    %c0_8 = arith.constant 0 : index
    %5 = vector.load %arg12[%c0_6, %c0_7, %c0_8] : memref<18x18x4xf32, #tpu.memory_space<vmem>>, vector<18x1x4xf32>
    tpu.vector_store %arg12[%c0_6, %c0_7, %c0_8], %4 {strides = array<i32>} : memref<18x18x4xf32, #tpu.memory_space<vmem>>, vector<18x1x4xf32>,
    %cst_9 = arith.constant 0.000000e+00 : f32
    %6 = vector.broadcast %cst_9 : f32 to vector<18x1x4xf32>
    %c0_10 = arith.constant 0 : index
    %c17_11 = arith.constant 17 : index
    %c0_12 = arith.constant 0 : index
    %7 = vector.load %arg12[%c0_10, %c17_11, %c0_12] : memref<18x18x4xf32, #tpu.memory_space<vmem>>, vector<18x1x4xf32>
    tpu.vector_store %arg12[%c0_10, %c17_11, %c0_12], %6 {strides = array<i32>} : memref<18x18x4xf32, #tpu.memory_space<vmem>>, vector<18x1x4xf32>,
    %c0_13 = arith.constant 0 : index
    %c0_14 = arith.constant 0 : index
    %c0_15 = arith.constant 0 : index
    %c0_16 = arith.constant 0 : index
    %8 = vector.load %arg1[%c0_13, %c0_14, %c0_15, %c0_16] : memref<1x16x16x4xf32, #tpu.memory_space<vmem>>, vector<1x16x16x4xf32>
    %9 = vector.shape_cast %8 : vector<1x16x16x4xf32> to vector<16x16x4xf32>
    %c1 = arith.constant 1 : index
    %c1_17 = arith.constant 1 : index
    %c0_18 = arith.constant 0 : index
    %10 = vector.load %arg12[%c1, %c1_17, %c0_18] : memref<18x18x4xf32, #tpu.memory_space<vmem>>, vector<16x16x4xf32>
    tpu.vector_store %arg12[%c1, %c1_17, %c0_18], %9 {strides = array<i32>} : memref<18x18x4xf32, #tpu.memory_space<vmem>>, vector<16x16x4xf32>,
    %c0_19 = arith.constant 0 : index
    %c0_20 = arith.constant 0 : index
    %11 = vector.load %arg2[%c0_19, %c0_20] : memref<9x4xf32, #tpu.memory_space<vmem>>, vector<9x4xf32>
    %c0_21 = arith.constant 0 : index
    %c0_22 = arith.constant 0 : index
    %c0_23 = arith.constant 0 : index
    %12 = vector.load %arg12[%c0_21, %c0_22, %c0_23] : memref<18x18x4xf32, #tpu.memory_space<vmem>>, vector<18x16x4xf32>
    %c0_24 = arith.constant 0 : index
    %c1_25 = arith.constant 1 : index
    %c0_26 = arith.constant 0 : index
    %13 = vector.load %arg12[%c0_24, %c1_25, %c0_26] : memref<18x18x4xf32, #tpu.memory_space<vmem>>, vector<18x16x4xf32>
    %c0_27 = arith.constant 0 : index
    %c2 = arith.constant 2 : index
    %c0_28 = arith.constant 0 : index
    %14 = vector.load %arg12[%c0_27, %c2, %c0_28] : memref<18x18x4xf32, #tpu.memory_space<vmem>>, vector<18x16x4xf32>
    %cst_29 = arith.constant 0.000000e+00 : f32
    %15 = vector.broadcast %cst_29 : f32 to vector<16x16x4xf32>
    %16 = vector.extract_strided_slice %12 {offsets = [0, 0, 0], sizes = [16, 16, 4], strides = [1, 1, 1]} : vector<18x16x4xf32> to vector<16x16x4xf32>
    %17 = vector.extract_strided_slice %11 {offsets = [0, 0], sizes = [1, 4], strides = [1, 1]} : vector<9x4xf32> to vector<1x4xf32>
    %18 = vector.shape_cast %17 : vector<1x4xf32> to vector<4xf32>
    %19 = vector.shape_cast %18 : vector<4xf32> to vector<1x1x4xf32>
    %20 = vector.broadcast %19 : vector<1x1x4xf32> to vector<16x16x4xf32>
    %21 = arith.mulf %16, %20 : vector<16x16x4xf32>
    %22 = arith.addf %15, %21 : vector<16x16x4xf32>
    %23 = vector.extract_strided_slice %13 {offsets = [0, 0, 0], sizes = [16, 16, 4], strides = [1, 1, 1]} : vector<18x16x4xf32> to vector<16x16x4xf32>
    %24 = vector.extract_strided_slice %11 {offsets = [1, 0], sizes = [1, 4], strides = [1, 1]} : vector<9x4xf32> to vector<1x4xf32>
    %25 = vector.shape_cast %24 : vector<1x4xf32> to vector<4xf32>
    %26 = vector.shape_cast %25 : vector<4xf32> to vector<1x1x4xf32>
    %27 = vector.broadcast %26 : vector<1x1x4xf32> to vector<16x16x4xf32>
    %28 = arith.mulf %23, %27 : vector<16x16x4xf32>
    %29 = arith.addf %22, %28 : vector<16x16x4xf32>
    %30 = vector.extract_strided_slice %14 {offsets = [0, 0, 0], sizes = [16, 16, 4], strides = [1, 1, 1]} : vector<18x16x4xf32> to vector<16x16x4xf32>
    %31 = vector.extract_strided_slice %11 {offsets = [2, 0], sizes = [1, 4], strides = [1, 1]} : vector<9x4xf32> to vector<1x4xf32>
    %32 = vector.shape_cast %31 : vector<1x4xf32> to vector<4xf32>
    %33 = vector.shape_cast %32 : vector<4xf32> to vector<1x1x4xf32>
    %34 = vector.broadcast %33 : vector<1x1x4xf32> to vector<16x16x4xf32>
    %35 = arith.mulf %30, %34 : vector<16x16x4xf32>
    %36 = arith.addf %29, %35 : vector<16x16x4xf32>
    %37 = vector.extract_strided_slice %12 {offsets = [1, 0, 0], sizes = [16, 16, 4], strides = [1, 1, 1]} : vector<18x16x4xf32> to vector<16x16x4xf32>
    %38 = vector.extract_strided_slice %11 {offsets = [3, 0], sizes = [1, 4], strides = [1, 1]} : vector<9x4xf32> to vector<1x4xf32>
    %39 = vector.shape_cast %38 : vector<1x4xf32> to vector<4xf32>
    %40 = vector.shape_cast %39 : vector<4xf32> to vector<1x1x4xf32>
    %41 = vector.broadcast %40 : vector<1x1x4xf32> to vector<16x16x4xf32>
    %42 = arith.mulf %37, %41 : vector<16x16x4xf32>
    %43 = arith.addf %36, %42 : vector<16x16x4xf32>
    %44 = vector.extract_strided_slice %13 {offsets = [1, 0, 0], sizes = [16, 16, 4], strides = [1, 1, 1]} : vector<18x16x4xf32> to vector<16x16x4xf32>
    %45 = vector.extract_strided_slice %11 {offsets = [4, 0], sizes = [1, 4], strides = [1, 1]} : vector<9x4xf32> to vector<1x4xf32>
    %46 = vector.shape_cast %45 : vector<1x4xf32> to vector<4xf32>
    %47 = vector.shape_cast %46 : vector<4xf32> to vector<1x1x4xf32>
    %48 = vector.broadcast %47 : vector<1x1x4xf32> to vector<16x16x4xf32>
    %49 = arith.mulf %44, %48 : vector<16x16x4xf32>
    %50 = arith.addf %43, %49 : vector<16x16x4xf32>
    %51 = vector.extract_strided_slice %14 {offsets = [1, 0, 0], sizes = [16, 16, 4], strides = [1, 1, 1]} : vector<18x16x4xf32> to vector<16x16x4xf32>
    %52 = vector.extract_strided_slice %11 {offsets = [5, 0], sizes = [1, 4], strides = [1, 1]} : vector<9x4xf32> to vector<1x4xf32>
    %53 = vector.shape_cast %52 : vector<1x4xf32> to vector<4xf32>
    %54 = vector.shape_cast %53 : vector<4xf32> to vector<1x1x4xf32>
    %55 = vector.broadcast %54 : vector<1x1x4xf32> to vector<16x16x4xf32>
    %56 = arith.mulf %51, %55 : vector<16x16x4xf32>
    %57 = arith.addf %50, %56 : vector<16x16x4xf32>
    %58 = vector.extract_strided_slice %12 {offsets = [2, 0, 0], sizes = [16, 16, 4], strides = [1, 1, 1]} : vector<18x16x4xf32> to vector<16x16x4xf32>
    %59 = vector.extract_strided_slice %11 {offsets = [6, 0], sizes = [1, 4], strides = [1, 1]} : vector<9x4xf32> to vector<1x4xf32>
    %60 = vector.shape_cast %59 : vector<1x4xf32> to vector<4xf32>
    %61 = vector.shape_cast %60 : vector<4xf32> to vector<1x1x4xf32>
    %62 = vector.broadcast %61 : vector<1x1x4xf32> to vector<16x16x4xf32>
    %63 = arith.mulf %58, %62 : vector<16x16x4xf32>
    %64 = arith.addf %57, %63 : vector<16x16x4xf32>
    %65 = vector.extract_strided_slice %13 {offsets = [2, 0, 0], sizes = [16, 16, 4], strides = [1, 1, 1]} : vector<18x16x4xf32> to vector<16x16x4xf32>
    %66 = vector.extract_strided_slice %11 {offsets = [7, 0], sizes = [1, 4], strides = [1, 1]} : vector<9x4xf32> to vector<1x4xf32>
    %67 = vector.shape_cast %66 : vector<1x4xf32> to vector<4xf32>
    %68 = vector.shape_cast %67 : vector<4xf32> to vector<1x1x4xf32>
    %69 = vector.broadcast %68 : vector<1x1x4xf32> to vector<16x16x4xf32>
    %70 = arith.mulf %65, %69 : vector<16x16x4xf32>
    %71 = arith.addf %64, %70 : vector<16x16x4xf32>
    %72 = vector.extract_strided_slice %14 {offsets = [2, 0, 0], sizes = [16, 16, 4], strides = [1, 1, 1]} : vector<18x16x4xf32> to vector<16x16x4xf32>
    %73 = vector.extract_strided_slice %11 {offsets = [8, 0], sizes = [1, 4], strides = [1, 1]} : vector<9x4xf32> to vector<1x4xf32>
    %74 = vector.shape_cast %73 : vector<1x4xf32> to vector<4xf32>
    %75 = vector.shape_cast %74 : vector<4xf32> to vector<1x1x4xf32>
    %76 = vector.broadcast %75 : vector<1x1x4xf32> to vector<16x16x4xf32>
    %77 = arith.mulf %72, %76 : vector<16x16x4xf32>
    %78 = arith.addf %71, %77 : vector<16x16x4xf32>
    %c0_30 = arith.constant 0 : index
    %c0_31 = arith.constant 0 : index
    %79 = vector.load %arg3[%c0_30, %c0_31] : memref<1x4xf32, #tpu.memory_space<vmem>>, vector<1x4xf32>
    %80 = vector.shape_cast %79 : vector<1x4xf32> to vector<4xf32>
    %81 = vector.shape_cast %80 : vector<4xf32> to vector<1x1x4xf32>
    %82 = vector.broadcast %81 : vector<1x1x4xf32> to vector<16x16x4xf32>
    %83 = arith.addf %78, %82 : vector<16x16x4xf32>
    %cst_32 = arith.constant 0.000000e+00 : f32
    %84 = vector.broadcast %cst_32 : f32 to vector<16x16x4xf32>
    %85 = arith.cmpf oge, %83, %84 : vector<16x16x4xf32>
    %cst_33 = arith.constant 0.00999999977 : f32
    %86 = vector.broadcast %cst_33 : f32 to vector<16x16x4xf32>
    %87 = arith.mulf %86, %83 : vector<16x16x4xf32>
    %88 = arith.select %85, %83, %87 : vector<16x16x4xi1>, vector<16x16x4xf32>
    %89 = vector.shape_cast %88 : vector<16x16x4xf32> to vector<256x4xf32>
    %c0_34 = arith.constant 0 : index
    %c0_35 = arith.constant 0 : index
    %90 = vector.load %arg4[%c0_34, %c0_35] : memref<4x128xf32, #tpu.memory_space<vmem>>, vector<4x128xf32>
    %cst_36 = arith.constant dense<0.000000e+00> : vector<256x128xf32>
    %91 = tpu.matmul %89, %90, %cst_36 {dimension_numbers = #tpu.dot_dimension_numbers<[1], [0], [0], [1], [0, 0, 1, 1], [], []>} : vector<256x4xf32>, vector<4x128xf32>, vector<256x128xf32> -> vector<256x128xf32>
    %c0_37 = arith.constant 0 : index
    %c0_38 = arith.constant 0 : index
    %92 = vector.load %arg5[%c0_37, %c0_38] : memref<1x128xf32, #tpu.memory_space<vmem>>, vector<1x128xf32>
    %93 = vector.shape_cast %92 : vector<1x128xf32> to vector<128xf32>
    %94 = vector.shape_cast %93 : vector<128xf32> to vector<1x128xf32>
    %95 = vector.broadcast %94 : vector<1x128xf32> to vector<256x128xf32>
    %96 = arith.addf %91, %95 : vector<256x128xf32>
    %cst_39 = arith.constant 0.000000e+00 : f32
    %97 = vector.broadcast %cst_39 : f32 to vector<256x128xf32>
    %98 = arith.cmpf oge, %96, %97 : vector<256x128xf32>
    %cst_40 = arith.constant 0.00999999977 : f32
    %99 = vector.broadcast %cst_40 : f32 to vector<256x128xf32>
    %100 = arith.mulf %99, %96 : vector<256x128xf32>
    %101 = arith.select %98, %96, %100 : vector<256x128xi1>, vector<256x128xf32>
    %cst_41 = arith.constant 0.000000e+00 : f32
    %102 = vector.broadcast %cst_41 : f32 to vector<1x18x128xf32>
    %c0_42 = arith.constant 0 : index
    %c0_43 = arith.constant 0 : index
    %c0_44 = arith.constant 0 : index
    %103 = vector.load %arg13[%c0_42, %c0_43, %c0_44] : memref<18x18x128xf32, #tpu.memory_space<vmem>>, vector<1x18x128xf32>
    tpu.vector_store %arg13[%c0_42, %c0_43, %c0_44], %102 {strides = array<i32>} : memref<18x18x128xf32, #tpu.memory_space<vmem>>, vector<1x18x128xf32>,
    %cst_45 = arith.constant 0.000000e+00 : f32
    %104 = vector.broadcast %cst_45 : f32 to vector<1x18x128xf32>
    %c17_46 = arith.constant 17 : index
    %c0_47 = arith.constant 0 : index
    %c0_48 = arith.constant 0 : index
    %105 = vector.load %arg13[%c17_46, %c0_47, %c0_48] : memref<18x18x128xf32, #tpu.memory_space<vmem>>, vector<1x18x128xf32>
    tpu.vector_store %arg13[%c17_46, %c0_47, %c0_48], %104 {strides = array<i32>} : memref<18x18x128xf32, #tpu.memory_space<vmem>>, vector<1x18x128xf32>,
    %cst_49 = arith.constant 0.000000e+00 : f32
    %106 = vector.broadcast %cst_49 : f32 to vector<18x1x128xf32>
    %c0_50 = arith.constant 0 : index
    %c0_51 = arith.constant 0 : index
    %c0_52 = arith.constant 0 : index
    %107 = vector.load %arg13[%c0_50, %c0_51, %c0_52] : memref<18x18x128xf32, #tpu.memory_space<vmem>>, vector<18x1x128xf32>
    tpu.vector_store %arg13[%c0_50, %c0_51, %c0_52], %106 {strides = array<i32>} : memref<18x18x128xf32, #tpu.memory_space<vmem>>, vector<18x1x128xf32>,
    %cst_53 = arith.constant 0.000000e+00 : f32
    %108 = vector.broadcast %cst_53 : f32 to vector<18x1x128xf32>
    %c0_54 = arith.constant 0 : index
    %c17_55 = arith.constant 17 : index
    %c0_56 = arith.constant 0 : index
    %109 = vector.load %arg13[%c0_54, %c17_55, %c0_56] : memref<18x18x128xf32, #tpu.memory_space<vmem>>, vector<18x1x128xf32>
    tpu.vector_store %arg13[%c0_54, %c17_55, %c0_56], %108 {strides = array<i32>} : memref<18x18x128xf32, #tpu.memory_space<vmem>>, vector<18x1x128xf32>,
    %110 = vector.shape_cast %101 : vector<256x128xf32> to vector<16x16x128xf32>
    %c1_57 = arith.constant 1 : index
    %c1_58 = arith.constant 1 : index
    %c0_59 = arith.constant 0 : index
    %111 = vector.load %arg13[%c1_57, %c1_58, %c0_59] : memref<18x18x128xf32, #tpu.memory_space<vmem>>, vector<16x16x128xf32>
    tpu.vector_store %arg13[%c1_57, %c1_58, %c0_59], %110 {strides = array<i32>} : memref<18x18x128xf32, #tpu.memory_space<vmem>>, vector<16x16x128xf32>,
    %c0_60 = arith.constant 0 : index
    %c0_61 = arith.constant 0 : index
    %112 = vector.load %arg6[%c0_60, %c0_61] : memref<9x128xf32, #tpu.memory_space<vmem>>, vector<9x128xf32>
    %c0_62 = arith.constant 0 : index
    %c0_63 = arith.constant 0 : index
    %c0_64 = arith.constant 0 : index
    %113 = vector.load %arg13[%c0_62, %c0_63, %c0_64] : memref<18x18x128xf32, #tpu.memory_space<vmem>>, vector<18x16x128xf32>
    %c0_65 = arith.constant 0 : index
    %c1_66 = arith.constant 1 : index
    %c0_67 = arith.constant 0 : index
    %114 = vector.load %arg13[%c0_65, %c1_66, %c0_67] : memref<18x18x128xf32, #tpu.memory_space<vmem>>, vector<18x16x128xf32>
    %c0_68 = arith.constant 0 : index
    %c2_69 = arith.constant 2 : index
    %c0_70 = arith.constant 0 : index
    %115 = vector.load %arg13[%c0_68, %c2_69, %c0_70] : memref<18x18x128xf32, #tpu.memory_space<vmem>>, vector<18x16x128xf32>
    %cst_71 = arith.constant 0.000000e+00 : f32
    %116 = vector.broadcast %cst_71 : f32 to vector<16x16x128xf32>
    %117 = vector.extract_strided_slice %113 {offsets = [0, 0, 0], sizes = [16, 16, 128], strides = [1, 1, 1]} : vector<18x16x128xf32> to vector<16x16x128xf32>
    %118 = vector.extract_strided_slice %112 {offsets = [0, 0], sizes = [1, 128], strides = [1, 1]} : vector<9x128xf32> to vector<1x128xf32>
    %119 = vector.shape_cast %118 : vector<1x128xf32> to vector<128xf32>
    %120 = vector.shape_cast %119 : vector<128xf32> to vector<1x1x128xf32>
    %121 = vector.broadcast %120 : vector<1x1x128xf32> to vector<16x16x128xf32>
    %122 = arith.mulf %117, %121 : vector<16x16x128xf32>
    %123 = arith.addf %116, %122 : vector<16x16x128xf32>
    %124 = vector.extract_strided_slice %114 {offsets = [0, 0, 0], sizes = [16, 16, 128], strides = [1, 1, 1]} : vector<18x16x128xf32> to vector<16x16x128xf32>
    %125 = vector.extract_strided_slice %112 {offsets = [1, 0], sizes = [1, 128], strides = [1, 1]} : vector<9x128xf32> to vector<1x128xf32>
    %126 = vector.shape_cast %125 : vector<1x128xf32> to vector<128xf32>
    %127 = vector.shape_cast %126 : vector<128xf32> to vector<1x1x128xf32>
    %128 = vector.broadcast %127 : vector<1x1x128xf32> to vector<16x16x128xf32>
    %129 = arith.mulf %124, %128 : vector<16x16x128xf32>
    %130 = arith.addf %123, %129 : vector<16x16x128xf32>
    %131 = vector.extract_strided_slice %115 {offsets = [0, 0, 0], sizes = [16, 16, 128], strides = [1, 1, 1]} : vector<18x16x128xf32> to vector<16x16x128xf32>
    %132 = vector.extract_strided_slice %112 {offsets = [2, 0], sizes = [1, 128], strides = [1, 1]} : vector<9x128xf32> to vector<1x128xf32>
    %133 = vector.shape_cast %132 : vector<1x128xf32> to vector<128xf32>
    %134 = vector.shape_cast %133 : vector<128xf32> to vector<1x1x128xf32>
    %135 = vector.broadcast %134 : vector<1x1x128xf32> to vector<16x16x128xf32>
    %136 = arith.mulf %131, %135 : vector<16x16x128xf32>
    %137 = arith.addf %130, %136 : vector<16x16x128xf32>
    %138 = vector.extract_strided_slice %113 {offsets = [1, 0, 0], sizes = [16, 16, 128], strides = [1, 1, 1]} : vector<18x16x128xf32> to vector<16x16x128xf32>
    %139 = vector.extract_strided_slice %112 {offsets = [3, 0], sizes = [1, 128], strides = [1, 1]} : vector<9x128xf32> to vector<1x128xf32>
    %140 = vector.shape_cast %139 : vector<1x128xf32> to vector<128xf32>
    %141 = vector.shape_cast %140 : vector<128xf32> to vector<1x1x128xf32>
    %142 = vector.broadcast %141 : vector<1x1x128xf32> to vector<16x16x128xf32>
    %143 = arith.mulf %138, %142 : vector<16x16x128xf32>
    %144 = arith.addf %137, %143 : vector<16x16x128xf32>
    %145 = vector.extract_strided_slice %114 {offsets = [1, 0, 0], sizes = [16, 16, 128], strides = [1, 1, 1]} : vector<18x16x128xf32> to vector<16x16x128xf32>
    %146 = vector.extract_strided_slice %112 {offsets = [4, 0], sizes = [1, 128], strides = [1, 1]} : vector<9x128xf32> to vector<1x128xf32>
    %147 = vector.shape_cast %146 : vector<1x128xf32> to vector<128xf32>
    %148 = vector.shape_cast %147 : vector<128xf32> to vector<1x1x128xf32>
    %149 = vector.broadcast %148 : vector<1x1x128xf32> to vector<16x16x128xf32>
    %150 = arith.mulf %145, %149 : vector<16x16x128xf32>
    %151 = arith.addf %144, %150 : vector<16x16x128xf32>
    %152 = vector.extract_strided_slice %115 {offsets = [1, 0, 0], sizes = [16, 16, 128], strides = [1, 1, 1]} : vector<18x16x128xf32> to vector<16x16x128xf32>
    %153 = vector.extract_strided_slice %112 {offsets = [5, 0], sizes = [1, 128], strides = [1, 1]} : vector<9x128xf32> to vector<1x128xf32>
    %154 = vector.shape_cast %153 : vector<1x128xf32> to vector<128xf32>
    %155 = vector.shape_cast %154 : vector<128xf32> to vector<1x1x128xf32>
    %156 = vector.broadcast %155 : vector<1x1x128xf32> to vector<16x16x128xf32>
    %157 = arith.mulf %152, %156 : vector<16x16x128xf32>
    %158 = arith.addf %151, %157 : vector<16x16x128xf32>
    %159 = vector.extract_strided_slice %113 {offsets = [2, 0, 0], sizes = [16, 16, 128], strides = [1, 1, 1]} : vector<18x16x128xf32> to vector<16x16x128xf32>
    %160 = vector.extract_strided_slice %112 {offsets = [6, 0], sizes = [1, 128], strides = [1, 1]} : vector<9x128xf32> to vector<1x128xf32>
    %161 = vector.shape_cast %160 : vector<1x128xf32> to vector<128xf32>
    %162 = vector.shape_cast %161 : vector<128xf32> to vector<1x1x128xf32>
    %163 = vector.broadcast %162 : vector<1x1x128xf32> to vector<16x16x128xf32>
    %164 = arith.mulf %159, %163 : vector<16x16x128xf32>
    %165 = arith.addf %158, %164 : vector<16x16x128xf32>
    %166 = vector.extract_strided_slice %114 {offsets = [2, 0, 0], sizes = [16, 16, 128], strides = [1, 1, 1]} : vector<18x16x128xf32> to vector<16x16x128xf32>
    %167 = vector.extract_strided_slice %112 {offsets = [7, 0], sizes = [1, 128], strides = [1, 1]} : vector<9x128xf32> to vector<1x128xf32>
    %168 = vector.shape_cast %167 : vector<1x128xf32> to vector<128xf32>
    %169 = vector.shape_cast %168 : vector<128xf32> to vector<1x1x128xf32>
    %170 = vector.broadcast %169 : vector<1x1x128xf32> to vector<16x16x128xf32>
    %171 = arith.mulf %166, %170 : vector<16x16x128xf32>
    %172 = arith.addf %165, %171 : vector<16x16x128xf32>
    %173 = vector.extract_strided_slice %115 {offsets = [2, 0, 0], sizes = [16, 16, 128], strides = [1, 1, 1]} : vector<18x16x128xf32> to vector<16x16x128xf32>
    %174 = vector.extract_strided_slice %112 {offsets = [8, 0], sizes = [1, 128], strides = [1, 1]} : vector<9x128xf32> to vector<1x128xf32>
    %175 = vector.shape_cast %174 : vector<1x128xf32> to vector<128xf32>
    %176 = vector.shape_cast %175 : vector<128xf32> to vector<1x1x128xf32>
    %177 = vector.broadcast %176 : vector<1x1x128xf32> to vector<16x16x128xf32>
    %178 = arith.mulf %173, %177 : vector<16x16x128xf32>
    %179 = arith.addf %172, %178 : vector<16x16x128xf32>
    %c0_72 = arith.constant 0 : index
    %c0_73 = arith.constant 0 : index
    %180 = vector.load %arg7[%c0_72, %c0_73] : memref<1x128xf32, #tpu.memory_space<vmem>>, vector<1x128xf32>
    %181 = vector.shape_cast %180 : vector<1x128xf32> to vector<128xf32>
    %182 = vector.shape_cast %181 : vector<128xf32> to vector<1x1x128xf32>
    %183 = vector.broadcast %182 : vector<1x1x128xf32> to vector<16x16x128xf32>
    %184 = arith.addf %179, %183 : vector<16x16x128xf32>
    %cst_74 = arith.constant 0.000000e+00 : f32
    %185 = vector.broadcast %cst_74 : f32 to vector<16x16x128xf32>
    %186 = arith.cmpf oge, %184, %185 : vector<16x16x128xf32>
    %cst_75 = arith.constant 0.00999999977 : f32
    %187 = vector.broadcast %cst_75 : f32 to vector<16x16x128xf32>
    %188 = arith.mulf %187, %184 : vector<16x16x128xf32>
    %189 = arith.select %186, %184, %188 : vector<16x16x128xi1>, vector<16x16x128xf32>
    %190 = vector.shape_cast %189 : vector<16x16x128xf32> to vector<256x128xf32>
    %191 = arith.truncf %190 : vector<256x128xf32> to vector<256x128xbf16>
    %c0_76 = arith.constant 0 : index
    %c0_77 = arith.constant 0 : index
    %192 = vector.load %arg8[%c0_76, %c0_77] : memref<128x128xbf16, #tpu.memory_space<vmem>>, vector<128x128xbf16>
    %cst_78 = arith.constant dense<0.000000e+00> : vector<256x128xf32>
    %193 = tpu.matmul %191, %192, %cst_78 {dimension_numbers = #tpu.dot_dimension_numbers<[1], [0], [0], [1], [0, 0, 1, 1], [], []>} : vector<256x128xbf16>, vector<128x128xbf16>, vector<256x128xf32> -> vector<256x128xf32>
    %c0_79 = arith.constant 0 : index
    %c0_80 = arith.constant 0 : index
    %194 = vector.load %arg9[%c0_79, %c0_80] : memref<1x128xf32, #tpu.memory_space<vmem>>, vector<1x128xf32>
    %195 = vector.shape_cast %194 : vector<1x128xf32> to vector<128xf32>
    %196 = vector.shape_cast %195 : vector<128xf32> to vector<1x128xf32>
    %197 = vector.broadcast %196 : vector<1x128xf32> to vector<256x128xf32>
    %198 = arith.addf %193, %197 : vector<256x128xf32>
    %cst_81 = arith.constant 0.000000e+00 : f32
    %199 = vector.broadcast %cst_81 : f32 to vector<256x128xf32>
    %200 = arith.cmpf oge, %198, %199 : vector<256x128xf32>
    %cst_82 = arith.constant 0.00999999977 : f32
    %201 = vector.broadcast %cst_82 : f32 to vector<256x128xf32>
    %202 = arith.mulf %201, %198 : vector<256x128xf32>
    %203 = arith.select %200, %198, %202 : vector<256x128xi1>, vector<256x128xf32>
    %204 = vector.shape_cast %203 : vector<256x128xf32> to vector<16x16x128xf32>
    %205 = arith.truncf %204 : vector<16x16x128xf32> to vector<16x16x128xbf16>
    %c0_83 = arith.constant 0 : index
    %c0_84 = arith.constant 0 : index
    %206 = vector.load %arg10[%c0_83, %c0_84] : memref<32x16xbf16, #tpu.memory_space<vmem>>, vector<32x16xbf16>
    %207 = vector.shape_cast %206 : vector<32x16xbf16> to vector<1x32x16xbf16>
    %208 = vector.broadcast %207 : vector<1x32x16xbf16> to vector<16x32x16xbf16>
    "tpu.trace_start"() <{level = 10 : i32, message = "how,hwc->hoc"}> : () -> ()
    %cst_85 = arith.constant dense<0.000000e+00> : vector<16x32x128xf32>
    %209 = tpu.matmul %208, %205, %cst_85 {dimension_numbers = #tpu.dot_dimension_numbers<[2], [1], [1], [2], [0, 0, 0, 1, 1, 2], [0], [0]>} : vector<16x32x16xbf16>, vector<16x16x128xbf16>, vector<16x32x128xf32> -> vector<16x32x128xf32>
    "tpu.trace_stop"() : () -> ()
    %210 = vector.extract_strided_slice %209 {offsets = [0, 0, 0], sizes = [1, 32, 128], strides = [1, 1, 1]} : vector<16x32x128xf32> to vector<1x32x128xf32>
    %211 = vector.extract_strided_slice %209 {offsets = [0, 0, 0], sizes = [15, 32, 128], strides = [1, 1, 1]} : vector<16x32x128xf32> to vector<15x32x128xf32>
    %212 = tpu.concatenate %210, %211 in 0 : vector<1x32x128xf32>, vector<15x32x128xf32> -> vector<16x32x128xf32>
    %213 = vector.extract_strided_slice %209 {offsets = [1, 0, 0], sizes = [15, 32, 128], strides = [1, 1, 1]} : vector<16x32x128xf32> to vector<15x32x128xf32>
    %214 = vector.extract_strided_slice %209 {offsets = [15, 0, 0], sizes = [1, 32, 128], strides = [1, 1, 1]} : vector<16x32x128xf32> to vector<1x32x128xf32>
    %215 = tpu.concatenate %213, %214 in 0 : vector<15x32x128xf32>, vector<1x32x128xf32> -> vector<16x32x128xf32>
    %cst_86 = arith.constant 7.500000e-01 : f32
    %216 = vector.broadcast %cst_86 : f32 to vector<16x32x128xf32>
    %217 = arith.mulf %216, %209 : vector<16x32x128xf32>
    %cst_87 = arith.constant 2.500000e-01 : f32
    %218 = vector.broadcast %cst_87 : f32 to vector<16x32x128xf32>
    %219 = arith.mulf %218, %212 : vector<16x32x128xf32>
    %220 = arith.addf %217, %219 : vector<16x32x128xf32>
    %cst_88 = arith.constant 7.500000e-01 : f32
    %221 = vector.broadcast %cst_88 : f32 to vector<16x32x128xf32>
    %222 = arith.mulf %221, %209 : vector<16x32x128xf32>
    %cst_89 = arith.constant 2.500000e-01 : f32
    %223 = vector.broadcast %cst_89 : f32 to vector<16x32x128xf32>
    %224 = arith.mulf %223, %215 : vector<16x32x128xf32>
    %225 = arith.addf %222, %224 : vector<16x32x128xf32>
    %226 = vector.shape_cast %220 : vector<16x32x128xf32> to vector<16x1x32x128xf32>
    %227 = vector.shape_cast %225 : vector<16x32x128xf32> to vector<16x1x32x128xf32>
    %228 = tpu.concatenate %226, %227 in 1 : vector<16x1x32x128xf32>, vector<16x1x32x128xf32> -> vector<16x2x32x128xf32>
    %229 = vector.shape_cast %228 : vector<16x2x32x128xf32> to vector<32x32x128xf32>
    %c0_90 = arith.constant 0 : index
    %c0_91 = arith.constant 0 : index
    %c0_92 = arith.constant 0 : index
    %c0_93 = arith.constant 0 : index
    %230 = vector.load %arg11[%c0_90, %c0_91, %c0_92, %c0_93] : memref<1x32x32x128xf32, #tpu.memory_space<vmem>>, vector<1x32x32x128xf32>
    %231 = vector.shape_cast %230 : vector<1x32x32x128xf32> to vector<32x32x128xf32>
    %232 = vector.shape_cast %229 : vector<32x32x128xf32> to vector<1x32x32x128xf32>
    tpu.vector_store %arg11[%c0_90, %c0_91, %c0_92, %c0_93], %232 {strides = array<i32>} : memref<1x32x32x128xf32, #tpu.memory_space<vmem>>, vector<1x32x32x128xf32>,
    return
  }
  func.func @transform_0(%arg0: i32) -> (i32, i32, i32, i32) {
    %c0_i32 = arith.constant 0 : i32
    %c0_i32_0 = arith.constant 0 : i32
    %c0_i32_1 = arith.constant 0 : i32
    %c0_i32_2 = arith.constant 0 : i32
    return %arg0, %c0_i32, %c0_i32_0, %c0_i32_1 : i32, i32, i32, i32
  }
  func.func @transform_1(%arg0: i32) -> (i32, i32) {
    %c0_i32 = arith.constant 0 : i32
    %c0_i32_0 = arith.constant 0 : i32
    %c0_i32_1 = arith.constant 0 : i32
    return %c0_i32, %c0_i32_0 : i32, i32
  }
  func.func @transform_2(%arg0: i32) -> (i32, i32) {
    %c0_i32 = arith.constant 0 : i32
    %c0_i32_0 = arith.constant 0 : i32
    %c0_i32_1 = arith.constant 0 : i32
    return %c0_i32, %c0_i32_0 : i32, i32
  }
  func.func @transform_3(%arg0: i32) -> (i32, i32) {
    %c0_i32 = arith.constant 0 : i32
    %c0_i32_0 = arith.constant 0 : i32
    %c0_i32_1 = arith.constant 0 : i32
    return %c0_i32, %c0_i32_0 : i32, i32
  }
  func.func @transform_4(%arg0: i32) -> (i32, i32) {
    %c0_i32 = arith.constant 0 : i32
    %c0_i32_0 = arith.constant 0 : i32
    %c0_i32_1 = arith.constant 0 : i32
    return %c0_i32, %c0_i32_0 : i32, i32
  }
  func.func @transform_5(%arg0: i32) -> (i32, i32) {
    %c0_i32 = arith.constant 0 : i32
    %c0_i32_0 = arith.constant 0 : i32
    %c0_i32_1 = arith.constant 0 : i32
    return %c0_i32, %c0_i32_0 : i32, i32
  }
  func.func @transform_6(%arg0: i32) -> (i32, i32) {
    %c0_i32 = arith.constant 0 : i32
    %c0_i32_0 = arith.constant 0 : i32
    %c0_i32_1 = arith.constant 0 : i32
    return %c0_i32, %c0_i32_0 : i32, i32
  }
  func.func @transform_7(%arg0: i32) -> (i32, i32) {
    %c0_i32 = arith.constant 0 : i32
    %c0_i32_0 = arith.constant 0 : i32
    %c0_i32_1 = arith.constant 0 : i32
    return %c0_i32, %c0_i32_0 : i32, i32
  }
  func.func @transform_8(%arg0: i32) -> (i32, i32) {
    %c0_i32 = arith.constant 0 : i32
    %c0_i32_0 = arith.constant 0 : i32
    %c0_i32_1 = arith.constant 0 : i32
    return %c0_i32, %c0_i32_0 : i32, i32
  }
  func.func @transform_9(%arg0: i32) -> (i32, i32) {
    %c0_i32 = arith.constant 0 : i32
    %c0_i32_0 = arith.constant 0 : i32
    %c0_i32_1 = arith.constant 0 : i32
    return %c0_i32, %c0_i32_0 : i32, i32
  }
  func.func @transform_10(%arg0: i32) -> (i32, i32, i32, i32) {
    %c0_i32 = arith.constant 0 : i32
    %c0_i32_0 = arith.constant 0 : i32
    %c0_i32_1 = arith.constant 0 : i32
    %c0_i32_2 = arith.constant 0 : i32
    return %arg0, %c0_i32, %c0_i32_0, %c0_i32_1 : i32, i32, i32, i32
  }
}

</mosaic_0001>

<llo_original>
// kernel: tpu_custom_call.1
$region0: #{tpu_custom_call.1}
  #allocation0 [shape = 'u32[]', space=smem, size = 0x4, offset = 0x4, fixed_abs, tag = 'smem constant byte address 0x4 - core index']
  #allocation1 [shape = 'u32[72,128]{1,0:T(1,128)}', space=vmem, size = 0x9000, scoped, tag = 'internal scratch']
  #allocation2 [shape = 'f32[18,18,4]{2,1,0:T(8,128)}', space=vmem, size = 0x36000, scoped, tag = 'scratch operand']
  #allocation3 [shape = 'f32[18,18,128]{2,1,0:T(8,128)}', space=vmem, size = 0x36000, scoped, tag = 'scratch operand']
  %s0 = inlined_call_operand.vmem [shape: f32[2,16,16,4], index: 0, kind: input, shape index: {}]
  %s1 = inlined_call_operand.vmem [shape: f32[9,4], index: 1, kind: input, shape index: {}]
  %s2 = inlined_call_operand.vmem [shape: f32[1,4], index: 2, kind: input, shape index: {}]
  %s3 = inlined_call_operand.vmem [shape: f32[4,128], index: 3, kind: input, shape index: {}]
  %s4 = inlined_call_operand.vmem [shape: f32[1,128], index: 4, kind: input, shape index: {}]
  %s5 = inlined_call_operand.vmem [shape: f32[9,128], index: 5, kind: input, shape index: {}]
  %s6 = inlined_call_operand.vmem [shape: f32[1,128], index: 6, kind: input, shape index: {}]
  %s7 = inlined_call_operand.vmem [shape: bf16[128,128], index: 7, kind: input, shape index: {}]
  %s8 = inlined_call_operand.vmem [shape: f32[1,128], index: 8, kind: input, shape index: {}]
  %s9 = inlined_call_operand.vmem [shape: bf16[32,16], index: 9, kind: input, shape index: {}]
  %s10 = inlined_call_operand.hbm [shape: f32[2,32,32,128], index: 10, kind: output, shape index: {}]
  %s11 = sld [smem:[#allocation0]]
  $region73: #{tpu_custom_call.1} parent=0
    _
  %s13 = ssub.s32 1, %s11
  %s14 = scalar_select 0, %s13, %s11
  $region1: #{tpu_custom_call.1} parent=0
    #allocation4 [shape = 'u8[1048576]{0}', space=vmem, size = 0x100000, scoped, tag = 'output window, operand 0']
    #allocation5 [shape = 's32[2]{0}', space=sflag, size = 0x8, scoped, tag = 'scoped memory for tpu_custom_call.1']
    %15 = vsyncpa [#allocation5], 0
    %s16 = scalar_lea.sflag [#allocation5], 1
    %17 = vsyncpa %s16, 0
    loop: start=0, step=1, limit=4
    $region2: #{tpu_custom_call.1} parent=1 // loop_pre_header
      _
    $region3: #{tpu_custom_call.1} parent=1 // loop_header
      %s19 = sphi 0, %s23
      %p20 = scmp.ge.s32.totalorder %s19, 4
      %s29 = sphi 0, %s31
      %s32 = sphi 0, %s29
      %s33 = sphi 0, %s32
      %s49 = sphi 0, %s33
      %s53 = sphi 0, %s53
      %s55 = sphi 0, %s53
      %s56 = sphi 0, %s55
      %s70 = sphi 0, %s56
      %s74 = sphi 0, %s74
      %s76 = sphi 0, %s74
      %s77 = sphi 0, %s76
      %s91 = sphi 0, %s77
      %s95 = sphi 0, %s95
      %s97 = sphi 0, %s95
      %s98 = sphi 0, %s97
      %s112 = sphi 0, %s98
      %s116 = sphi 0, %s116
      %s118 = sphi 0, %s116
      %s119 = sphi 0, %s118
      %s133 = sphi 0, %s119
      %s137 = sphi 0, %s137
      %s139 = sphi 0, %s137
      %s140 = sphi 0, %s139
      %s154 = sphi 0, %s140
      %s158 = sphi 0, %s158
      %s160 = sphi 0, %s158
      %s161 = sphi 0, %s160
      %s175 = sphi 0, %s161
      %s179 = sphi 0, %s179
      %s181 = sphi 0, %s179
      %s182 = sphi 0, %s181
      %s196 = sphi 0, %s182
      %s200 = sphi 0, %s200
      %s202 = sphi 0, %s200
      %s203 = sphi 0, %s202
      %s217 = sphi 0, %s203
      %s221 = sphi 0, %s221
      %s223 = sphi 0, %s221
      %s224 = sphi 0, %s223
      %s238 = sphi 0, %s224
      %s244 = sphi 0, %s246
      %s247 = sphi 0, %s244
      %s248 = sphi 0, %s247
      %s264 = sphi 0, %s248
    $region4: #{tpu_custom_call.1} parent=1 // loop_header_branch
      %22 = sbr.rel (%p20) target = $region8
    $region5: #{tpu_custom_call.1} parent=1 // loop_body
      %s24 = ssub.s32 %s19, 1
      %s25 = ssub.s32 %s19, 2
      %s26 = sadd.s32 %s19, 1
      %s27 = ssub.s32 %s19, %s26
      %p28 = scmp.eq.s32.totalorder %s27, 0
      %s30 = sadd.s32 %s29, 1
      %s31 = scalar_select %p28, %s29, %s30
      %p34 = pneg %p28
      %p35 = scmp.eq.s32.totalorder %s19, 1
      %p36 = por %p34, %p35
      %p37 = scmp.ne.s32.totalorder %s29, %s32
      %p38 = scmp.eq.s32.totalorder %s19, 0
      %p39 = por %p37, %p38
      %p40 = scmp.ne.s32.totalorder %s29, %s32
      %p41 = scmp.eq.s32.totalorder %s24, 1
      %p42 = por %p40, %p41
      %p43 = scmp.ne.s32.totalorder %s32, %s33
      %p44 = scmp.eq.s32.totalorder %s24, 0
      %p45 = por %p43, %p44
      %p46 = scmp.ne.s32.totalorder %s32, %s33
      %p47 = scmp.eq.s32.totalorder %s25, 1
      %p48 = por %p46, %p47
      %p50 = scmp.ne.s32.totalorder %s33, %s49
      %p51 = scmp.eq.s32.totalorder %s25, 0
      %p52 = por %p50, %p51
      %s54 = sadd.s32 %s53, 1
      %p57 = scmp.eq.s32.totalorder %s19, 1
      %p58 = scmp.ne.s32.totalorder %s53, %s55
      %p59 = scmp.eq.s32.totalorder %s19, 0
      %p60 = por %p58, %p59
      %p61 = scmp.ne.s32.totalorder %s53, %s55
      %p62 = scmp.eq.s32.totalorder %s24, 1
      %p63 = por %p61, %p62
      %p64 = scmp.ne.s32.totalorder %s55, %s56
      %p65 = scmp.eq.s32.totalorder %s24, 0
      %p66 = por %p64, %p65
      %p67 = scmp.ne.s32.totalorder %s55, %s56
      %p68 = scmp.eq.s32.totalorder %s25, 1
      %p69 = por %p67, %p68
      %p71 = scmp.ne.s32.totalorder %s56, %s70
      %p72 = scmp.eq.s32.totalorder %s25, 0
      %p73 = por %p71, %p72
      %s75 = sadd.s32 %s74, 1
      %p78 = scmp.eq.s32.totalorder %s19, 1
      %p79 = scmp.ne.s32.totalorder %s74, %s76
      %p80 = scmp.eq.s32.totalorder %s19, 0
      %p81 = por %p79, %p80
      %p82 = scmp.ne.s32.totalorder %s74, %s76
      %p83 = scmp.eq.s32.totalorder %s24, 1
      %p84 = por %p82, %p83
      %p85 = scmp.ne.s32.totalorder %s76, %s77
      %p86 = scmp.eq.s32.totalorder %s24, 0
      %p87 = por %p85, %p86
      %p88 = scmp.ne.s32.totalorder %s76, %s77
      %p89 = scmp.eq.s32.totalorder %s25, 1
      %p90 = por %p88, %p89
      %p92 = scmp.ne.s32.totalorder %s77, %s91
      %p93 = scmp.eq.s32.totalorder %s25, 0
      %p94 = por %p92, %p93
      %s96 = sadd.s32 %s95, 1
      %p99 = scmp.eq.s32.totalorder %s19, 1
      %p100 = scmp.ne.s32.totalorder %s95, %s97
      %p101 = scmp.eq.s32.totalorder %s19, 0
      %p102 = por %p100, %p101
      %p103 = scmp.ne.s32.totalorder %s95, %s97
      %p104 = scmp.eq.s32.totalorder %s24, 1
      %p105 = por %p103, %p104
      %p106 = scmp.ne.s32.totalorder %s97, %s98
      %p107 = scmp.eq.s32.totalorder %s24, 0
      %p108 = por %p106, %p107
      %p109 = scmp.ne.s32.totalorder %s97, %s98
      %p110 = scmp.eq.s32.totalorder %s25, 1
      %p111 = por %p109, %p110
      %p113 = scmp.ne.s32.totalorder %s98, %s112
      %p114 = scmp.eq.s32.totalorder %s25, 0
      %p115 = por %p113, %p114
      %s117 = sadd.s32 %s116, 1
      %p120 = scmp.eq.s32.totalorder %s19, 1
      %p121 = scmp.ne.s32.totalorder %s116, %s118
      %p122 = scmp.eq.s32.totalorder %s19, 0
      %p123 = por %p121, %p122
      %p124 = scmp.ne.s32.totalorder %s116, %s118
      %p125 = scmp.eq.s32.totalorder %s24, 1
      %p126 = por %p124, %p125
      %p127 = scmp.ne.s32.totalorder %s118, %s119
      %p128 = scmp.eq.s32.totalorder %s24, 0
      %p129 = por %p127, %p128
      %p130 = scmp.ne.s32.totalorder %s118, %s119
      %p131 = scmp.eq.s32.totalorder %s25, 1
      %p132 = por %p130, %p131
      %p134 = scmp.ne.s32.totalorder %s119, %s133
      %p135 = scmp.eq.s32.totalorder %s25, 0
      %p136 = por %p134, %p135
      %s138 = sadd.s32 %s137, 1
      %p141 = scmp.eq.s32.totalorder %s19, 1
      %p142 = scmp.ne.s32.totalorder %s137, %s139
      %p143 = scmp.eq.s32.totalorder %s19, 0
      %p144 = por %p142, %p143
      %p145 = scmp.ne.s32.totalorder %s137, %s139
      %p146 = scmp.eq.s32.totalorder %s24, 1
      %p147 = por %p145, %p146
      %p148 = scmp.ne.s32.totalorder %s139, %s140
      %p149 = scmp.eq.s32.totalorder %s24, 0
      %p150 = por %p148, %p149
      %p151 = scmp.ne.s32.totalorder %s139, %s140
      %p152 = scmp.eq.s32.totalorder %s25, 1
      %p153 = por %p151, %p152
      %p155 = scmp.ne.s32.totalorder %s140, %s154
      %p156 = scmp.eq.s32.totalorder %s25, 0
      %p157 = por %p155, %p156
      %s159 = sadd.s32 %s158, 1
      %p162 = scmp.eq.s32.totalorder %s19, 1
      %p163 = scmp.ne.s32.totalorder %s158, %s160
      %p164 = scmp.eq.s32.totalorder %s19, 0
      %p165 = por %p163, %p164
      %p166 = scmp.ne.s32.totalorder %s158, %s160
      %p167 = scmp.eq.s32.totalorder %s24, 1
      %p168 = por %p166, %p167
      %p169 = scmp.ne.s32.totalorder %s160, %s161
      %p170 = scmp.eq.s32.totalorder %s24, 0
      %p171 = por %p169, %p170
      %p172 = scmp.ne.s32.totalorder %s160, %s161
      %p173 = scmp.eq.s32.totalorder %s25, 1
      %p174 = por %p172, %p173
      %p176 = scmp.ne.s32.totalorder %s161, %s175
      %p177 = scmp.eq.s32.totalorder %s25, 0
      %p178 = por %p176, %p177
      %s180 = sadd.s32 %s179, 1
      %p183 = scmp.eq.s32.totalorder %s19, 1
      %p184 = scmp.ne.s32.totalorder %s179, %s181
      %p185 = scmp.eq.s32.totalorder %s19, 0
      %p186 = por %p184, %p185
      %p187 = scmp.ne.s32.totalorder %s179, %s181
      %p188 = scmp.eq.s32.totalorder %s24, 1
      %p189 = por %p187, %p188
      %p190 = scmp.ne.s32.totalorder %s181, %s182
      %p191 = scmp.eq.s32.totalorder %s24, 0
      %p192 = por %p190, %p191
      %p193 = scmp.ne.s32.totalorder %s181, %s182
      %p194 = scmp.eq.s32.totalorder %s25, 1
      %p195 = por %p193, %p194
      %p197 = scmp.ne.s32.totalorder %s182, %s196
      %p198 = scmp.eq.s32.totalorder %s25, 0
      %p199 = por %p197, %p198
      %s201 = sadd.s32 %s200, 1
      %p204 = scmp.eq.s32.totalorder %s19, 1
      %p205 = scmp.ne.s32.totalorder %s200, %s202
      %p206 = scmp.eq.s32.totalorder %s19, 0
      %p207 = por %p205, %p206
      %p208 = scmp.ne.s32.totalorder %s200, %s202
      %p209 = scmp.eq.s32.totalorder %s24, 1
      %p210 = por %p208, %p209
      %p211 = scmp.ne.s32.totalorder %s202, %s203
      %p212 = scmp.eq.s32.totalorder %s24, 0
      %p213 = por %p211, %p212
      %p214 = scmp.ne.s32.totalorder %s202, %s203
      %p215 = scmp.eq.s32.totalorder %s25, 1
      %p216 = por %p214, %p215
      %p218 = scmp.ne.s32.totalorder %s203, %s217
      %p219 = scmp.eq.s32.totalorder %s25, 0
      %p220 = por %p218, %p219
      %s222 = sadd.s32 %s221, 1
      %p225 = scmp.eq.s32.totalorder %s19, 1
      %p226 = scmp.ne.s32.totalorder %s221, %s223
      %p227 = scmp.eq.s32.totalorder %s19, 0
      %p228 = por %p226, %p227
      %p229 = scmp.ne.s32.totalorder %s221, %s223
      %p230 = scmp.eq.s32.totalorder %s24, 1
      %p231 = por %p229, %p230
      %p232 = scmp.ne.s32.totalorder %s223, %s224
      %p233 = scmp.eq.s32.totalorder %s24, 0
      %p234 = por %p232, %p233
      %p235 = scmp.ne.s32.totalorder %s223, %s224
      %p236 = scmp.eq.s32.totalorder %s25, 1
      %p237 = por %p235, %p236
      %p239 = scmp.ne.s32.totalorder %s224, %s238
      %p240 = scmp.eq.s32.totalorder %s25, 0
      %p241 = por %p239, %p240
      %s242 = ssub.s32 %s19, %s26
      %p243 = scmp.eq.s32.totalorder %s242, 0
      %s245 = sadd.s32 %s244, 1
      %s246 = scalar_select %p243, %s244, %s245
      %p249 = pneg %p243
      %p250 = scmp.eq.s32.totalorder %s19, 1
      %p251 = por %p249, %p250
      %p252 = scmp.ne.s32.totalorder %s244, %s247
      %p253 = scmp.eq.s32.totalorder %s19, 0
      %p254 = por %p252, %p253
      %p255 = scmp.ne.s32.totalorder %s244, %s247
      %p256 = scmp.eq.s32.totalorder %s24, 1
      %p257 = por %p255, %p256
      %p258 = scmp.ne.s32.totalorder %s247, %s248
      %p259 = scmp.eq.s32.totalorder %s24, 0
      %p260 = por %p258, %p259
      %p261 = scmp.ne.s32.totalorder %s247, %s248
      %p262 = scmp.eq.s32.totalorder %s25, 1
      %p263 = por %p261, %p262
      %p265 = scmp.ne.s32.totalorder %s248, %s264
      %p266 = scmp.eq.s32.totalorder %s25, 0
      %p267 = por %p265, %p266
      %p268 = scmp.le.s32.totalorder 1, %s19
      %p269 = scmp.lt.s32.totalorder %s19, 3
      %p270 = pnand %p268, %p269
      %p271 = pneg %p270
      // Predicated region
      $region9: #{tpu_custom_call.1} parent=5 // pred_check
        _
      $region10: #{tpu_custom_call.1} parent=5 // pred_check_branch
        %273 = sbr.rel (%p270) target = $region12
      $region11: #{tpu_custom_call.1} parent=5 // pred_region
        %s274 = ssub.s32 %s19, 1
        // Predicated region
        $region13: #{tpu_custom_call.1} parent=11 // pred_check
          %p275 = pneg %p66
        $region14: #{tpu_custom_call.1} parent=11 // pred_check_branch
          %277 = sbr.rel (%p275) target = $region16
        $region15: #{tpu_custom_call.1} parent=11 // pred_region
          _
        $region16: #{tpu_custom_call.1} parent=11 // pred_fallthru
          _
        // Predicated region
        $region17: #{tpu_custom_call.1} parent=11 // pred_check
          %p278 = pneg %p87
        $region18: #{tpu_custom_call.1} parent=11 // pred_check_branch
          %280 = sbr.rel (%p278) target = $region20
        $region19: #{tpu_custom_call.1} parent=11 // pred_region
          _
        $region20: #{tpu_custom_call.1} parent=11 // pred_fallthru
          _
        // Predicated region
        $region21: #{tpu_custom_call.1} parent=11 // pred_check
          %p281 = pneg %p108
        $region22: #{tpu_custom_call.1} parent=11 // pred_check_branch
          %283 = sbr.rel (%p281) target = $region24
        $region23: #{tpu_custom_call.1} parent=11 // pred_region
          _
        $region24: #{tpu_custom_call.1} parent=11 // pred_fallthru
          _
        // Predicated region
        $region25: #{tpu_custom_call.1} parent=11 // pred_check
          %p284 = pneg %p129
        $region26: #{tpu_custom_call.1} parent=11 // pred_check_branch
          %286 = sbr.rel (%p284) target = $region28
        $region27: #{tpu_custom_call.1} parent=11 // pred_region
          _
        $region28: #{tpu_custom_call.1} parent=11 // pred_fallthru
          _
        // Predicated region
        $region29: #{tpu_custom_call.1} parent=11 // pred_check
          %p287 = pneg %p150
        $region30: #{tpu_custom_call.1} parent=11 // pred_check_branch
          %289 = sbr.rel (%p287) target = $region32
        $region31: #{tpu_custom_call.1} parent=11 // pred_region
          _
        $region32: #{tpu_custom_call.1} parent=11 // pred_fallthru
          _
        // Predicated region
        $region33: #{tpu_custom_call.1} parent=11 // pred_check
          %p290 = pneg %p171
        $region34: #{tpu_custom_call.1} parent=11 // pred_check_branch
          %292 = sbr.rel (%p290) target = $region36
        $region35: #{tpu_custom_call.1} parent=11 // pred_region
          _
        $region36: #{tpu_custom_call.1} parent=11 // pred_fallthru
          _
        // Predicated region
        $region37: #{tpu_custom_call.1} parent=11 // pred_check
          %p293 = pneg %p192
        $region38: #{tpu_custom_call.1} parent=11 // pred_check_branch
          %295 = sbr.rel (%p293) target = $region40
        $region39: #{tpu_custom_call.1} parent=11 // pred_region
          _
        $region40: #{tpu_custom_call.1} parent=11 // pred_fallthru
          _
        // Predicated region
        $region41: #{tpu_custom_call.1} parent=11 // pred_check
          %p296 = pneg %p213
        $region42: #{tpu_custom_call.1} parent=11 // pred_check_branch
          %298 = sbr.rel (%p296) target = $region44
        $region43: #{tpu_custom_call.1} parent=11 // pred_region
          _
        $region44: #{tpu_custom_call.1} parent=11 // pred_fallthru
          _
        // Predicated region
        $region45: #{tpu_custom_call.1} parent=11 // pred_check
          %p299 = pneg %p234
        $region46: #{tpu_custom_call.1} parent=11 // pred_check_branch
          %301 = sbr.rel (%p299) target = $region48
        $region47: #{tpu_custom_call.1} parent=11 // pred_region
          _
        $region48: #{tpu_custom_call.1} parent=11 // pred_fallthru
          _
      $region12: #{tpu_custom_call.1} parent=5 // pred_fallthru
        _
      %p302 = scmp.lt.s32.totalorder %s19, 2
      // Predicated region
      $region49: #{tpu_custom_call.1} parent=5 // pred_check
        %p303 = pneg %p302
      $region50: #{tpu_custom_call.1} parent=5 // pred_check_branch
        %305 = sbr.rel (%p303) target = $region52
      $region51: #{tpu_custom_call.1} parent=5 // pred_region
        // Predicated region
        $region53: #{tpu_custom_call.1} parent=51 // pred_check
          %p306 = pneg %p39
        $region54: #{tpu_custom_call.1} parent=51 // pred_check_branch
          %308 = sbr.rel (%p306) target = $region56
        $region55: #{tpu_custom_call.1} parent=51 // pred_region
          %p309 = scmp.lt.s32.totalorder %s19, 1
          %s310 = scalar_select %p309, %s19, 1
          %s311 = smul.addr %s310, 32
          %s312 = smul.addr %s311, 8
          %s313 = scalar_lea.vmem %s0, %s312
        $region56: #{tpu_custom_call.1} parent=51 // pred_fallthru
          _
      $region52: #{tpu_custom_call.1} parent=5 // pred_fallthru
        _
      %p314 = scmp.le.s32.totalorder 1, %s19
      %p315 = scmp.lt.s32.totalorder %s19, 3
      %p316 = pnand %p314, %p315
      %p317 = pneg %p316
      // Predicated region
      $region57: #{tpu_custom_call.1} parent=5 // pred_check
        _
      $region58: #{tpu_custom_call.1} parent=5 // pred_check_branch
        %319 = sbr.rel (%p316) target = $region60
      $region59: #{tpu_custom_call.1} parent=5 // pred_region
        %s320 = ssub.s32 %s19, 1
        %p321 = scmp.lt.s32.totalorder %s24, 1
        %s322 = scalar_select %p321, %s24, 1
        %s323 = smul.addr %s322, 32
        %s324 = smul.addr %s323, 8
        %s325 = scalar_lea.vmem %s0, %s324
        %p326 = pneg %p45
        %p327 = pneg %p42
        %p328 = pneg %p66
        %p329 = pneg %p63
        %p330 = pneg %p87
        %p331 = pneg %p84
        %p332 = pneg %p108
        %p333 = pneg %p105
        %p334 = pneg %p129
        %p335 = pneg %p126
        %p336 = pneg %p150
        %p337 = pneg %p147
        %p338 = pneg %p171
        %p339 = pneg %p168
        %p340 = pneg %p192
        %p341 = pneg %p189
        %p342 = pneg %p213
        %p343 = pneg %p210
        %p344 = pneg %p234
        %p345 = pneg %p231
        %p346 = pneg %p260
        %p347 = pneg %p257
        %s348 = sand.u32 %s247, 1
        %s349 = scalar_lea.sflag [#allocation5], %s348
        %s350 = sand.u32 %s247, 1
        %s351 = smul.addr %s350, 1024
        %s352 = scalar_lea.vmem [#allocation4], %s351
        %p353 = scmp.lt.s32.totalorder %s24, 1
        %s354 = scalar_select %p353, %s24, 1
        %s355 = smul.addr %s354, 32
        %s356 = smul.addr %s355, 8
        %s357 = scalar_lea.vmem %s0, %s356
        %vm359 = vcmask 31744
        %360 = vst.msk [vmem:[#allocation2] sm:$0xff] %vm359, 0.0
        %361 = vst.msk [vmem:[#allocation2 + $0x8] sm:$0xff] %vm359, 0.0
        %vm362 = vcmask 25600
        %363 = vst.msk [vmem:[#allocation2 + $0x10] sm:$0x3] %vm362, 0.0
        %s364 = scalar_lea.vmem [#allocation2], 408
        %365 = vst.msk [vmem:[%s364] sm:$0xff] %vm359, 0.0
        %366 = vst.msk [vmem:[%s364 + $0x8] sm:$0xff] %vm359, 0.0
        %367 = vst.msk [vmem:[%s364 + $0x10] sm:$0x3] %vm362, 0.0
        %vm368 = vcmask 24576
        %369 = vst.msk [vmem:[#allocation2] sm:$0x1] %vm368, 0.0
        %370 = vst.msk [vmem:[#allocation2 + $0x18] sm:$0x1] %vm368, 0.0
        %371 = vst.msk [vmem:[#allocation2 + $0x30] sm:$0x1] %vm368, 0.0
        %372 = vst.msk [vmem:[#allocation2 + $0x48] sm:$0x1] %vm368, 0.0
        %373 = vst.msk [vmem:[#allocation2 + $0x60] sm:$0x1] %vm368, 0.0
        %374 = vst.msk [vmem:[#allocation2 + $0x78] sm:$0x1] %vm368, 0.0
        %375 = vst.msk [vmem:[#allocation2 + $0x90] sm:$0x1] %vm368, 0.0
        %376 = vst.msk [vmem:[#allocation2 + $0xa8] sm:$0x1] %vm368, 0.0
        %377 = vst.msk [vmem:[#allocation2 + $0xc0] sm:$0x1] %vm368, 0.0
        %378 = vst.msk [vmem:[#allocation2 + $0xd8] sm:$0x1] %vm368, 0.0
        %379 = vst.msk [vmem:[#allocation2 + $0xf0] sm:$0x1] %vm368, 0.0
        %380 = vst.msk [vmem:[#allocation2 + $0x108] sm:$0x1] %vm368, 0.0
        %381 = vst.msk [vmem:[#allocation2 + $0x120] sm:$0x1] %vm368, 0.0
        %382 = vst.msk [vmem:[#allocation2 + $0x138] sm:$0x1] %vm368, 0.0
        %383 = vst.msk [vmem:[#allocation2 + $0x150] sm:$0x1] %vm368, 0.0
        %384 = vst.msk [vmem:[#allocation2 + $0x168] sm:$0x1] %vm368, 0.0
        %385 = vst.msk [vmem:[#allocation2 + $0x180] sm:$0x1] %vm368, 0.0
        %386 = vst.msk [vmem:[#allocation2 + $0x198] sm:$0x1] %vm368, 0.0
        %387 = vst.msk [vmem:[#allocation2 + $0x11] sm:$0x1] %vm368, 0.0
        %388 = vst.msk [vmem:[#allocation2 + $0x29] sm:$0x1] %vm368, 0.0
        %389 = vst.msk [vmem:[#allocation2 + $0x41] sm:$0x1] %vm368, 0.0
        %390 = vst.msk [vmem:[#allocation2 + $0x59] sm:$0x1] %vm368, 0.0
        %391 = vst.msk [vmem:[#allocation2 + $0x71] sm:$0x1] %vm368, 0.0
        %392 = vst.msk [vmem:[#allocation2 + $0x89] sm:$0x1] %vm368, 0.0
        %393 = vst.msk [vmem:[#allocation2 + $0xa1] sm:$0x1] %vm368, 0.0
        %394 = vst.msk [vmem:[#allocation2 + $0xb9] sm:$0x1] %vm368, 0.0
        %395 = vst.msk [vmem:[#allocation2 + $0xd1] sm:$0x1] %vm368, 0.0
        %396 = vst.msk [vmem:[#allocation2 + $0xe9] sm:$0x1] %vm368, 0.0
        %397 = vst.msk [vmem:[#allocation2 + $0x101] sm:$0x1] %vm368, 0.0
        %398 = vst.msk [vmem:[#allocation2 + $0x119] sm:$0x1] %vm368, 0.0
        %399 = vst.msk [vmem:[#allocation2 + $0x131] sm:$0x1] %vm368, 0.0
        %400 = vst.msk [vmem:[#allocation2 + $0x149] sm:$0x1] %vm368, 0.0
        %401 = vst.msk [vmem:[#allocation2 + $0x161] sm:$0x1] %vm368, 0.0
        %402 = vst.msk [vmem:[#allocation2 + $0x179] sm:$0x1] %vm368, 0.0
        %403 = vst.msk [vmem:[#allocation2 + $0x191] sm:$0x1] %vm368, 0.0
        %404 = vst.msk [vmem:[#allocation2 + $0x1a9] sm:$0x1] %vm368, 0.0
        %v405 = vld [vmem:[%s357] sm:$0xff]
        %v406 = vld [vmem:[%s357 + $0x8] sm:$0xff]
        %v407 = vld [vmem:[%s357 + $0x10] sm:$0xff]
        %v408 = vld [vmem:[%s357 + $0x18] sm:$0xff]
        %v409 = vld [vmem:[%s357 + $0x20] sm:$0xff]
        %v410 = vld [vmem:[%s357 + $0x28] sm:$0xff]
        %v411 = vld [vmem:[%s357 + $0x30] sm:$0xff]
        %v412 = vld [vmem:[%s357 + $0x38] sm:$0xff]
        %v413 = vld [vmem:[%s357 + $0x40] sm:$0xff]
        %v414 = vld [vmem:[%s357 + $0x48] sm:$0xff]
        %v415 = vld [vmem:[%s357 + $0x50] sm:$0xff]
        %v416 = vld [vmem:[%s357 + $0x58] sm:$0xff]
        %v417 = vld [vmem:[%s357 + $0x60] sm:$0xff]
        %v418 = vld [vmem:[%s357 + $0x68] sm:$0xff]
        %v419 = vld [vmem:[%s357 + $0x70] sm:$0xff]
        %v420 = vld [vmem:[%s357 + $0x78] sm:$0xff]
        %v421 = vld [vmem:[%s357 + $0x80] sm:$0xff]
        %v422 = vld [vmem:[%s357 + $0x88] sm:$0xff]
        %v423 = vld [vmem:[%s357 + $0x90] sm:$0xff]
        %v424 = vld [vmem:[%s357 + $0x98] sm:$0xff]
        %v425 = vld [vmem:[%s357 + $0xa0] sm:$0xff]
        %v426 = vld [vmem:[%s357 + $0xa8] sm:$0xff]
        %v427 = vld [vmem:[%s357 + $0xb0] sm:$0xff]
        %v428 = vld [vmem:[%s357 + $0xb8] sm:$0xff]
        %v429 = vld [vmem:[%s357 + $0xc0] sm:$0xff]
        %v430 = vld [vmem:[%s357 + $0xc8] sm:$0xff]
        %v431 = vld [vmem:[%s357 + $0xd0] sm:$0xff]
        %v432 = vld [vmem:[%s357 + $0xd8] sm:$0xff]
        %v433 = vld [vmem:[%s357 + $0xe0] sm:$0xff]
        %v434 = vld [vmem:[%s357 + $0xe8] sm:$0xff]
        %v435 = vld [vmem:[%s357 + $0xf0] sm:$0xff]
        %v436 = vld [vmem:[%s357 + $0xf8] sm:$0xff]
        %s437 = scalar_lea.vmem [#allocation2], 24
        %438 = vst.msk [vmem:[%s437 + $0x1] sm:$0xff] %vm359, %v405
        %439 = vst.msk [vmem:[%s437 + $0x9] sm:$0xff] %vm359, %v406
        %440 = vst.msk [vmem:[%s437 + $0x19] sm:$0xff] %vm359, %v407
        %441 = vst.msk [vmem:[%s437 + $0x21] sm:$0xff] %vm359, %v408
        %442 = vst.msk [vmem:[%s437 + $0x31] sm:$0xff] %vm359, %v409
        %443 = vst.msk [vmem:[%s437 + $0x39] sm:$0xff] %vm359, %v410
        %444 = vst.msk [vmem:[%s437 + $0x49] sm:$0xff] %vm359, %v411
        %445 = vst.msk [vmem:[%s437 + $0x51] sm:$0xff] %vm359, %v412
        %446 = vst.msk [vmem:[%s437 + $0x61] sm:$0xff] %vm359, %v413
        %447 = vst.msk [vmem:[%s437 + $0x69] sm:$0xff] %vm359, %v414
        %448 = vst.msk [vmem:[%s437 + $0x79] sm:$0xff] %vm359, %v415
        %449 = vst.msk [vmem:[%s437 + $0x81] sm:$0xff] %vm359, %v416
        %450 = vst.msk [vmem:[%s437 + $0x91] sm:$0xff] %vm359, %v417
        %451 = vst.msk [vmem:[%s437 + $0x99] sm:$0xff] %vm359, %v418
        %452 = vst.msk [vmem:[%s437 + $0xa9] sm:$0xff] %vm359, %v419
        %453 = vst.msk [vmem:[%s437 + $0xb1] sm:$0xff] %vm359, %v420
        %454 = vst.msk [vmem:[%s437 + $0xc1] sm:$0xff] %vm359, %v421
        %455 = vst.msk [vmem:[%s437 + $0xc9] sm:$0xff] %vm359, %v422
        %456 = vst.msk [vmem:[%s437 + $0xd9] sm:$0xff] %vm359, %v423
        %457 = vst.msk [vmem:[%s437 + $0xe1] sm:$0xff] %vm359, %v424
        %458 = vst.msk [vmem:[%s437 + $0xf1] sm:$0xff] %vm359, %v425
        %459 = vst.msk [vmem:[%s437 + $0xf9] sm:$0xff] %vm359, %v426
        %460 = vst.msk [vmem:[%s437 + $0x109] sm:$0xff] %vm359, %v427
        %461 = vst.msk [vmem:[%s437 + $0x111] sm:$0xff] %vm359, %v428
        %462 = vst.msk [vmem:[%s437 + $0x121] sm:$0xff] %vm359, %v429
        %463 = vst.msk [vmem:[%s437 + $0x129] sm:$0xff] %vm359, %v430
        %464 = vst.msk [vmem:[%s437 + $0x139] sm:$0xff] %vm359, %v431
        %465 = vst.msk [vmem:[%s437 + $0x141] sm:$0xff] %vm359, %v432
        %466 = vst.msk [vmem:[%s437 + $0x151] sm:$0xff] %vm359, %v433
        %467 = vst.msk [vmem:[%s437 + $0x159] sm:$0xff] %vm359, %v434
        %468 = vst.msk [vmem:[%s437 + $0x169] sm:$0xff] %vm359, %v435
        %469 = vst.msk [vmem:[%s437 + $0x171] sm:$0xff] %vm359, %v436
        %v470 = vld [vmem:[%s1] sm:$0xff]
        %v471 = vld [vmem:[%s1 + $0x8] sm:$0x1]
        %v472 = vld [vmem:[#allocation2] sm:$0xff]
        %v473 = vld [vmem:[#allocation2 + $0x8] sm:$0xff]
        %v474 = vld [vmem:[#allocation2 + $0x18] sm:$0xff]
        %v475 = vld [vmem:[#allocation2 + $0x20] sm:$0xff]
        %v476 = vld [vmem:[#allocation2 + $0x30] sm:$0xff]
        %v477 = vld [vmem:[#allocation2 + $0x38] sm:$0xff]
        %v478 = vld [vmem:[#allocation2 + $0x48] sm:$0xff]
        %v479 = vld [vmem:[#allocation2 + $0x50] sm:$0xff]
        %v480 = vld [vmem:[#allocation2 + $0x60] sm:$0xff]
        %v481 = vld [vmem:[#allocation2 + $0x68] sm:$0xff]
        %v482 = vld [vmem:[#allocation2 + $0x78] sm:$0xff]
        %v483 = vld [vmem:[#allocation2 + $0x80] sm:$0xff]
        %v484 = vld [vmem:[#allocation2 + $0x90] sm:$0xff]
        %v485 = vld [vmem:[#allocation2 + $0x98] sm:$0xff]
        %v486 = vld [vmem:[#allocation2 + $0xa8] sm:$0xff]
        %v487 = vld [vmem:[#allocation2 + $0xb0] sm:$0xff]
        %v488 = vld [vmem:[#allocation2 + $0xc0] sm:$0xff]
        %v489 = vld [vmem:[#allocation2 + $0xc8] sm:$0xff]
        %v490 = vld [vmem:[#allocation2 + $0xd8] sm:$0xff]
        %v491 = vld [vmem:[#allocation2 + $0xe0] sm:$0xff]
        %v492 = vld [vmem:[#allocation2 + $0xf0] sm:$0xff]
        %v493 = vld [vmem:[#allocation2 + $0xf8] sm:$0xff]
        %v494 = vld [vmem:[#allocation2 + $0x108] sm:$0xff]
        %v495 = vld [vmem:[#allocation2 + $0x110] sm:$0xff]
        %v496 = vld [vmem:[#allocation2 + $0x120] sm:$0xff]
        %v497 = vld [vmem:[#allocation2 + $0x128] sm:$0xff]
        %v498 = vld [vmem:[#allocation2 + $0x138] sm:$0xff]
        %v499 = vld [vmem:[#allocation2 + $0x140] sm:$0xff]
        %v500 = vld [vmem:[#allocation2 + $0x150] sm:$0xff]
        %v501 = vld [vmem:[#allocation2 + $0x158] sm:$0xff]
        %v502 = vld [vmem:[#allocation2 + $0x168] sm:$0xff]
        %v503 = vld [vmem:[#allocation2 + $0x170] sm:$0xff]
        %v504 = vld [vmem:[#allocation2 + $0x180] sm:$0xff]
        %v505 = vld [vmem:[#allocation2 + $0x188] sm:$0xff]
        %v506 = vld [vmem:[#allocation2 + $0x198] sm:$0xff]
        %v507 = vld [vmem:[#allocation2 + $0x1a0] sm:$0xff]
        %v508 = vld [vmem:[#allocation2 + $0x1] sm:$0xff]
        %v509 = vld [vmem:[#allocation2 + $0x9] sm:$0xff]
        %v510 = vld [vmem:[#allocation2 + $0x19] sm:$0xff]
        %v511 = vld [vmem:[#allocation2 + $0x21] sm:$0xff]
        %v512 = vld [vmem:[#allocation2 + $0x31] sm:$0xff]
        %v513 = vld [vmem:[#allocation2 + $0x39] sm:$0xff]
        %v514 = vld [vmem:[#allocation2 + $0x49] sm:$0xff]
        %v515 = vld [vmem:[#allocation2 + $0x51] sm:$0xff]
        %v516 = vld [vmem:[#allocation2 + $0x61] sm:$0xff]
        %v517 = vld [vmem:[#allocation2 + $0x69] sm:$0xff]
        %v518 = vld [vmem:[#allocation2 + $0x79] sm:$0xff]
        %v519 = vld [vmem:[#allocation2 + $0x81] sm:$0xff]
        %v520 = vld [vmem:[#allocation2 + $0x91] sm:$0xff]
        %v521 = vld [vmem:[#allocation2 + $0x99] sm:$0xff]
        %v522 = vld [vmem:[#allocation2 + $0xa9] sm:$0xff]
        %v523 = vld [vmem:[#allocation2 + $0xb1] sm:$0xff]
        %v524 = vld [vmem:[#allocation2 + $0xc1] sm:$0xff]
        %v525 = vld [vmem:[#allocation2 + $0xc9] sm:$0xff]
        %v526 = vld [vmem:[#allocation2 + $0xd9] sm:$0xff]
        %v527 = vld [vmem:[#allocation2 + $0xe1] sm:$0xff]
        %v528 = vld [vmem:[#allocation2 + $0xf1] sm:$0xff]
        %v529 = vld [vmem:[#allocation2 + $0xf9] sm:$0xff]
        %v530 = vld [vmem:[#allocation2 + $0x109] sm:$0xff]
        %v531 = vld [vmem:[#allocation2 + $0x111] sm:$0xff]
        %v532 = vld [vmem:[#allocation2 + $0x121] sm:$0xff]
        %v533 = vld [vmem:[#allocation2 + $0x129] sm:$0xff]
        %v534 = vld [vmem:[#allocation2 + $0x139] sm:$0xff]
        %v535 = vld [vmem:[#allocation2 + $0x141] sm:$0xff]
        %v536 = vld [vmem:[#allocation2 + $0x151] sm:$0xff]
        %v537 = vld [vmem:[#allocation2 + $0x159] sm:$0xff]
        %v538 = vld [vmem:[#allocation2 + $0x169] sm:$0xff]
        %v539 = vld [vmem:[#allocation2 + $0x171] sm:$0xff]
        %v540 = vld [vmem:[#allocation2 + $0x181] sm:$0xff]
        %v541 = vld [vmem:[#allocation2 + $0x189] sm:$0xff]
        %v542 = vld [vmem:[#allocation2 + $0x199] sm:$0xff]
        %v543 = vld [vmem:[#allocation2 + $0x1a1] sm:$0xff]
        %v544 = vld [vmem:[#allocation2 + $0x2] sm:$0xff]
        %v545 = vld [vmem:[#allocation2 + $0xa] sm:$0xff]
        %v546 = vld [vmem:[#allocation2 + $0x1a] sm:$0xff]
        %v547 = vld [vmem:[#allocation2 + $0x22] sm:$0xff]
        %v548 = vld [vmem:[#allocation2 + $0x32] sm:$0xff]
        %v549 = vld [vmem:[#allocation2 + $0x3a] sm:$0xff]
        %v550 = vld [vmem:[#allocation2 + $0x4a] sm:$0xff]
        %v551 = vld [vmem:[#allocation2 + $0x52] sm:$0xff]
        %v552 = vld [vmem:[#allocation2 + $0x62] sm:$0xff]
        %v553 = vld [vmem:[#allocation2 + $0x6a] sm:$0xff]
        %v554 = vld [vmem:[#allocation2 + $0x7a] sm:$0xff]
        %v555 = vld [vmem:[#allocation2 + $0x82] sm:$0xff]
        %v556 = vld [vmem:[#allocation2 + $0x92] sm:$0xff]
        %v557 = vld [vmem:[#allocation2 + $0x9a] sm:$0xff]
        %v558 = vld [vmem:[#allocation2 + $0xaa] sm:$0xff]
        %v559 = vld [vmem:[#allocation2 + $0xb2] sm:$0xff]
        %v560 = vld [vmem:[#allocation2 + $0xc2] sm:$0xff]
        %v561 = vld [vmem:[#allocation2 + $0xca] sm:$0xff]
        %v562 = vld [vmem:[#allocation2 + $0xda] sm:$0xff]
        %v563 = vld [vmem:[#allocation2 + $0xe2] sm:$0xff]
        %v564 = vld [vmem:[#allocation2 + $0xf2] sm:$0xff]
        %v565 = vld [vmem:[#allocation2 + $0xfa] sm:$0xff]
        %v566 = vld [vmem:[#allocation2 + $0x10a] sm:$0xff]
        %v567 = vld [vmem:[#allocation2 + $0x112] sm:$0xff]
        %v568 = vld [vmem:[#allocation2 + $0x122] sm:$0xff]
        %v569 = vld [vmem:[#allocation2 + $0x12a] sm:$0xff]
        %v570 = vld [vmem:[#allocation2 + $0x13a] sm:$0xff]
        %v571 = vld [vmem:[#allocation2 + $0x142] sm:$0xff]
        %v572 = vld [vmem:[#allocation2 + $0x152] sm:$0xff]
        %v573 = vld [vmem:[#allocation2 + $0x15a] sm:$0xff]
        %v574 = vld [vmem:[#allocation2 + $0x16a] sm:$0xff]
        %v575 = vld [vmem:[#allocation2 + $0x172] sm:$0xff]
        %v576 = vld [vmem:[#allocation2 + $0x182] sm:$0xff]
        %v577 = vld [vmem:[#allocation2 + $0x18a] sm:$0xff]
        %v578 = vld [vmem:[#allocation2 + $0x19a] sm:$0xff]
        %v579 = vld [vmem:[#allocation2 + $0x1a2] sm:$0xff]
        %v580 = vperm.slane %v470, 0
        %v581 = vmul.f32 %v472, %v580
        %v582 = vmul.f32 %v473, %v580
        %v583 = vmul.f32 %v474, %v580
        %v584 = vmul.f32 %v475, %v580
        %v585 = vmul.f32 %v476, %v580
        %v586 = vmul.f32 %v477, %v580
        %v587 = vmul.f32 %v478, %v580
        %v588 = vmul.f32 %v479, %v580
        %v589 = vmul.f32 %v480, %v580
        %v590 = vmul.f32 %v481, %v580
        %v591 = vmul.f32 %v482, %v580
        %v592 = vmul.f32 %v483, %v580
        %v593 = vmul.f32 %v484, %v580
        %v594 = vmul.f32 %v485, %v580
        %v595 = vmul.f32 %v486, %v580
        %v596 = vmul.f32 %v487, %v580
        %v597 = vmul.f32 %v488, %v580
        %v598 = vmul.f32 %v489, %v580
        %v599 = vmul.f32 %v490, %v580
        %v600 = vmul.f32 %v491, %v580
        %v601 = vmul.f32 %v492, %v580
        %v602 = vmul.f32 %v493, %v580
        %v603 = vmul.f32 %v494, %v580
        %v604 = vmul.f32 %v495, %v580
        %v605 = vmul.f32 %v496, %v580
        %v606 = vmul.f32 %v497, %v580
        %v607 = vmul.f32 %v498, %v580
        %v608 = vmul.f32 %v499, %v580
        %v609 = vmul.f32 %v500, %v580
        %v610 = vmul.f32 %v501, %v580
        %v611 = vmul.f32 %v502, %v580
        %v612 = vmul.f32 %v503, %v580
        %v613 = vadd.f32 %v581, 0.0
        %v614 = vadd.f32 %v582, 0.0
        %v615 = vadd.f32 %v583, 0.0
        %v616 = vadd.f32 %v584, 0.0
        %v617 = vadd.f32 %v585, 0.0
        %v618 = vadd.f32 %v586, 0.0
        %v619 = vadd.f32 %v587, 0.0
        %v620 = vadd.f32 %v588, 0.0
        %v621 = vadd.f32 %v589, 0.0
        %v622 = vadd.f32 %v590, 0.0
        %v623 = vadd.f32 %v591, 0.0
        %v624 = vadd.f32 %v592, 0.0
        %v625 = vadd.f32 %v593, 0.0
        %v626 = vadd.f32 %v594, 0.0
        %v627 = vadd.f32 %v595, 0.0
        %v628 = vadd.f32 %v596, 0.0
        %v629 = vadd.f32 %v597, 0.0
        %v630 = vadd.f32 %v598, 0.0
        %v631 = vadd.f32 %v599, 0.0
        %v632 = vadd.f32 %v600, 0.0
        %v633 = vadd.f32 %v601, 0.0
        %v634 = vadd.f32 %v602, 0.0
        %v635 = vadd.f32 %v603, 0.0
        %v636 = vadd.f32 %v604, 0.0
        %v637 = vadd.f32 %v605, 0.0
        %v638 = vadd.f32 %v606, 0.0
        %v639 = vadd.f32 %v607, 0.0
        %v640 = vadd.f32 %v608, 0.0
        %v641 = vadd.f32 %v609, 0.0
        %v642 = vadd.f32 %v610, 0.0
        %v643 = vadd.f32 %v611, 0.0
        %v644 = vadd.f32 %v612, 0.0
        %v645 = vperm.slane %v470, 1
        %v646 = vmul.f32 %v508, %v645
        %v647 = vmul.f32 %v509, %v645
        %v648 = vmul.f32 %v510, %v645
        %v649 = vmul.f32 %v511, %v645
        %v650 = vmul.f32 %v512, %v645
        %v651 = vmul.f32 %v513, %v645
        %v652 = vmul.f32 %v514, %v645
        %v653 = vmul.f32 %v515, %v645
        %v654 = vmul.f32 %v516, %v645
        %v655 = vmul.f32 %v517, %v645
        %v656 = vmul.f32 %v518, %v645
        %v657 = vmul.f32 %v519, %v645
        %v658 = vmul.f32 %v520, %v645
        %v659 = vmul.f32 %v521, %v645
        %v660 = vmul.f32 %v522, %v645
        %v661 = vmul.f32 %v523, %v645
        %v662 = vmul.f32 %v524, %v645
        %v663 = vmul.f32 %v525, %v645
        %v664 = vmul.f32 %v526, %v645
        %v665 = vmul.f32 %v527, %v645
        %v666 = vmul.f32 %v528, %v645
        %v667 = vmul.f32 %v529, %v645
        %v668 = vmul.f32 %v530, %v645
        %v669 = vmul.f32 %v531, %v645
        %v670 = vmul.f32 %v532, %v645
        %v671 = vmul.f32 %v533, %v645
        %v672 = vmul.f32 %v534, %v645
        %v673 = vmul.f32 %v535, %v645
        %v674 = vmul.f32 %v536, %v645
        %v675 = vmul.f32 %v537, %v645
        %v676 = vmul.f32 %v538, %v645
        %v677 = vmul.f32 %v539, %v645
        %v678 = vadd.f32 %v613, %v646
        %v679 = vadd.f32 %v614, %v647
        %v680 = vadd.f32 %v615, %v648
        %v681 = vadd.f32 %v616, %v649
        %v682 = vadd.f32 %v617, %v650
        %v683 = vadd.f32 %v618, %v651
        %v684 = vadd.f32 %v619, %v652
        %v685 = vadd.f32 %v620, %v653
        %v686 = vadd.f32 %v621, %v654
        %v687 = vadd.f32 %v622, %v655
        %v688 = vadd.f32 %v623, %v656
        %v689 = vadd.f32 %v624, %v657
        %v690 = vadd.f32 %v625, %v658
        %v691 = vadd.f32 %v626, %v659
        %v692 = vadd.f32 %v627, %v660
        %v693 = vadd.f32 %v628, %v661
        %v694 = vadd.f32 %v629, %v662
        %v695 = vadd.f32 %v630, %v663
        %v696 = vadd.f32 %v631, %v664
        %v697 = vadd.f32 %v632, %v665
        %v698 = vadd.f32 %v633, %v666
        %v699 = vadd.f32 %v634, %v667
        %v700 = vadd.f32 %v635, %v668
        %v701 = vadd.f32 %v636, %v669
        %v702 = vadd.f32 %v637, %v670
        %v703 = vadd.f32 %v638, %v671
        %v704 = vadd.f32 %v639, %v672
        %v705 = vadd.f32 %v640, %v673
        %v706 = vadd.f32 %v641, %v674
        %v707 = vadd.f32 %v642, %v675
        %v708 = vadd.f32 %v643, %v676
        %v709 = vadd.f32 %v644, %v677
        %v710 = vperm.slane %v470, 2
        %v711 = vmul.f32 %v544, %v710
        %v712 = vmul.f32 %v545, %v710
        %v713 = vmul.f32 %v546, %v710
        %v714 = vmul.f32 %v547, %v710
        %v715 = vmul.f32 %v548, %v710
        %v716 = vmul.f32 %v549, %v710
        %v717 = vmul.f32 %v550, %v710
        %v718 = vmul.f32 %v551, %v710
        %v719 = vmul.f32 %v552, %v710
        %v720 = vmul.f32 %v553, %v710
        %v721 = vmul.f32 %v554, %v710
        %v722 = vmul.f32 %v555, %v710
        %v723 = vmul.f32 %v556, %v710
        %v724 = vmul.f32 %v557, %v710
        %v725 = vmul.f32 %v558, %v710
        %v726 = vmul.f32 %v559, %v710
        %v727 = vmul.f32 %v560, %v710
        %v728 = vmul.f32 %v561, %v710
        %v729 = vmul.f32 %v562, %v710
        %v730 = vmul.f32 %v563, %v710
        %v731 = vmul.f32 %v564, %v710
        %v732 = vmul.f32 %v565, %v710
        %v733 = vmul.f32 %v566, %v710
        %v734 = vmul.f32 %v567, %v710
        %v735 = vmul.f32 %v568, %v710
        %v736 = vmul.f32 %v569, %v710
        %v737 = vmul.f32 %v570, %v710
        %v738 = vmul.f32 %v571, %v710
        %v739 = vmul.f32 %v572, %v710
        %v740 = vmul.f32 %v573, %v710
        %v741 = vmul.f32 %v574, %v710
        %v742 = vmul.f32 %v575, %v710
        %v743 = vadd.f32 %v678, %v711
        %v744 = vadd.f32 %v679, %v712
        %v745 = vadd.f32 %v680, %v713
        %v746 = vadd.f32 %v681, %v714
        %v747 = vadd.f32 %v682, %v715
        %v748 = vadd.f32 %v683, %v716
        %v749 = vadd.f32 %v684, %v717
        %v750 = vadd.f32 %v685, %v718
        %v751 = vadd.f32 %v686, %v719
        %v752 = vadd.f32 %v687, %v720
        %v753 = vadd.f32 %v688, %v721
        %v754 = vadd.f32 %v689, %v722
        %v755 = vadd.f32 %v690, %v723
        %v756 = vadd.f32 %v691, %v724
        %v757 = vadd.f32 %v692, %v725
        %v758 = vadd.f32 %v693, %v726
        %v759 = vadd.f32 %v694, %v727
        %v760 = vadd.f32 %v695, %v728
        %v761 = vadd.f32 %v696, %v729
        %v762 = vadd.f32 %v697, %v730
        %v763 = vadd.f32 %v698, %v731
        %v764 = vadd.f32 %v699, %v732
        %v765 = vadd.f32 %v700, %v733
        %v766 = vadd.f32 %v701, %v734
        %v767 = vadd.f32 %v702, %v735
        %v768 = vadd.f32 %v703, %v736
        %v769 = vadd.f32 %v704, %v737
        %v770 = vadd.f32 %v705, %v738
        %v771 = vadd.f32 %v706, %v739
        %v772 = vadd.f32 %v707, %v740
        %v773 = vadd.f32 %v708, %v741
        %v774 = vadd.f32 %v709, %v742
        %v775 = vperm.slane %v470, 3
        %v776 = vmul.f32 %v474, %v775
        %v777 = vmul.f32 %v475, %v775
        %v778 = vmul.f32 %v476, %v775
        %v779 = vmul.f32 %v477, %v775
        %v780 = vmul.f32 %v478, %v775
        %v781 = vmul.f32 %v479, %v775
        %v782 = vmul.f32 %v480, %v775
        %v783 = vmul.f32 %v481, %v775
        %v784 = vmul.f32 %v482, %v775
        %v785 = vmul.f32 %v483, %v775
        %v786 = vmul.f32 %v484, %v775
        %v787 = vmul.f32 %v485, %v775
        %v788 = vmul.f32 %v486, %v775
        %v789 = vmul.f32 %v487, %v775
        %v790 = vmul.f32 %v488, %v775
        %v791 = vmul.f32 %v489, %v775
        %v792 = vmul.f32 %v490, %v775
        %v793 = vmul.f32 %v491, %v775
        %v794 = vmul.f32 %v492, %v775
        %v795 = vmul.f32 %v493, %v775
        %v796 = vmul.f32 %v494, %v775
        %v797 = vmul.f32 %v495, %v775
        %v798 = vmul.f32 %v496, %v775
        %v799 = vmul.f32 %v497, %v775
        %v800 = vmul.f32 %v498, %v775
        %v801 = vmul.f32 %v499, %v775
        %v802 = vmul.f32 %v500, %v775
        %v803 = vmul.f32 %v501, %v775
        %v804 = vmul.f32 %v502, %v775
        %v805 = vmul.f32 %v503, %v775
        %v806 = vmul.f32 %v504, %v775
        %v807 = vmul.f32 %v505, %v775
        %v808 = vadd.f32 %v743, %v776
        %v809 = vadd.f32 %v744, %v777
        %v810 = vadd.f32 %v745, %v778
        %v811 = vadd.f32 %v746, %v779
        %v812 = vadd.f32 %v747, %v780
        %v813 = vadd.f32 %v748, %v781
        %v814 = vadd.f32 %v749, %v782
        %v815 = vadd.f32 %v750, %v783
        %v816 = vadd.f32 %v751, %v784
        %v817 = vadd.f32 %v752, %v785
        %v818 = vadd.f32 %v753, %v786
        %v819 = vadd.f32 %v754, %v787
        %v820 = vadd.f32 %v755, %v788
        %v821 = vadd.f32 %v756, %v789
        %v822 = vadd.f32 %v757, %v790
        %v823 = vadd.f32 %v758, %v791
        %v824 = vadd.f32 %v759, %v792
        %v825 = vadd.f32 %v760, %v793
        %v826 = vadd.f32 %v761, %v794
        %v827 = vadd.f32 %v762, %v795
        %v828 = vadd.f32 %v763, %v796
        %v829 = vadd.f32 %v764, %v797
        %v830 = vadd.f32 %v765, %v798
        %v831 = vadd.f32 %v766, %v799
        %v832 = vadd.f32 %v767, %v800
        %v833 = vadd.f32 %v768, %v801
        %v834 = vadd.f32 %v769, %v802
        %v835 = vadd.f32 %v770, %v803
        %v836 = vadd.f32 %v771, %v804
        %v837 = vadd.f32 %v772, %v805
        %v838 = vadd.f32 %v773, %v806
        %v839 = vadd.f32 %v774, %v807
        %v840 = vperm.slane %v470, 4
        %v841 = vmul.f32 %v510, %v840
        %v842 = vmul.f32 %v511, %v840
        %v843 = vmul.f32 %v512, %v840
        %v844 = vmul.f32 %v513, %v840
        %v845 = vmul.f32 %v514, %v840
        %v846 = vmul.f32 %v515, %v840
        %v847 = vmul.f32 %v516, %v840
        %v848 = vmul.f32 %v517, %v840
        %v849 = vmul.f32 %v518, %v840
        %v850 = vmul.f32 %v519, %v840
        %v851 = vmul.f32 %v520, %v840
        %v852 = vmul.f32 %v521, %v840
        %v853 = vmul.f32 %v522, %v840
        %v854 = vmul.f32 %v523, %v840
        %v855 = vmul.f32 %v524, %v840
        %v856 = vmul.f32 %v525, %v840
        %v857 = vmul.f32 %v526, %v840
        %v858 = vmul.f32 %v527, %v840
        %v859 = vmul.f32 %v528, %v840
        %v860 = vmul.f32 %v529, %v840
        %v861 = vmul.f32 %v530, %v840
        %v862 = vmul.f32 %v531, %v840
        %v863 = vmul.f32 %v532, %v840
        %v864 = vmul.f32 %v533, %v840
        %v865 = vmul.f32 %v534, %v840
        %v866 = vmul.f32 %v535, %v840
        %v867 = vmul.f32 %v536, %v840
        %v868 = vmul.f32 %v537, %v840
        %v869 = vmul.f32 %v538, %v840
        %v870 = vmul.f32 %v539, %v840
        %v871 = vmul.f32 %v540, %v840
        %v872 = vmul.f32 %v541, %v840
        %v873 = vadd.f32 %v808, %v841
        %v874 = vadd.f32 %v809, %v842
        %v875 = vadd.f32 %v810, %v843
        %v876 = vadd.f32 %v811, %v844
        %v877 = vadd.f32 %v812, %v845
        %v878 = vadd.f32 %v813, %v846
        %v879 = vadd.f32 %v814, %v847
        %v880 = vadd.f32 %v815, %v848
        %v881 = vadd.f32 %v816, %v849
        %v882 = vadd.f32 %v817, %v850
        %v883 = vadd.f32 %v818, %v851
        %v884 = vadd.f32 %v819, %v852
        %v885 = vadd.f32 %v820, %v853
        %v886 = vadd.f32 %v821, %v854
        %v887 = vadd.f32 %v822, %v855
        %v888 = vadd.f32 %v823, %v856
        %v889 = vadd.f32 %v824, %v857
        %v890 = vadd.f32 %v825, %v858
        %v891 = vadd.f32 %v826, %v859
        %v892 = vadd.f32 %v827, %v860
        %v893 = vadd.f32 %v828, %v861
        %v894 = vadd.f32 %v829, %v862
        %v895 = vadd.f32 %v830, %v863
        %v896 = vadd.f32 %v831, %v864
        %v897 = vadd.f32 %v832, %v865
        %v898 = vadd.f32 %v833, %v866
        %v899 = vadd.f32 %v834, %v867
        %v900 = vadd.f32 %v835, %v868
        %v901 = vadd.f32 %v836, %v869
        %v902 = vadd.f32 %v837, %v870
        %v903 = vadd.f32 %v838, %v871
        %v904 = vadd.f32 %v839, %v872
        %v905 = vperm.slane %v470, 5
        %v906 = vmul.f32 %v546, %v905
        %v907 = vmul.f32 %v547, %v905
        %v908 = vmul.f32 %v548, %v905
        %v909 = vmul.f32 %v549, %v905
        %v910 = vmul.f32 %v550, %v905
        %v911 = vmul.f32 %v551, %v905
        %v912 = vmul.f32 %v552, %v905
        %v913 = vmul.f32 %v553, %v905
        %v914 = vmul.f32 %v554, %v905
        %v915 = vmul.f32 %v555, %v905
        %v916 = vmul.f32 %v556, %v905
        %v917 = vmul.f32 %v557, %v905
        %v918 = vmul.f32 %v558, %v905
        %v919 = vmul.f32 %v559, %v905
        %v920 = vmul.f32 %v560, %v905
        %v921 = vmul.f32 %v561, %v905
        %v922 = vmul.f32 %v562, %v905
        %v923 = vmul.f32 %v563, %v905
        %v924 = vmul.f32 %v564, %v905
        %v925 = vmul.f32 %v565, %v905
        %v926 = vmul.f32 %v566, %v905
        %v927 = vmul.f32 %v567, %v905
        %v928 = vmul.f32 %v568, %v905
        %v929 = vmul.f32 %v569, %v905
        %v930 = vmul.f32 %v570, %v905
        %v931 = vmul.f32 %v571, %v905
        %v932 = vmul.f32 %v572, %v905
        %v933 = vmul.f32 %v573, %v905
        %v934 = vmul.f32 %v574, %v905
        %v935 = vmul.f32 %v575, %v905
        %v936 = vmul.f32 %v576, %v905
        %v937 = vmul.f32 %v577, %v905
        %v938 = vadd.f32 %v873, %v906
        %v939 = vadd.f32 %v874, %v907
        %v940 = vadd.f32 %v875, %v908
        %v941 = vadd.f32 %v876, %v909
        %v942 = vadd.f32 %v877, %v910
        %v943 = vadd.f32 %v878, %v911
        %v944 = vadd.f32 %v879, %v912
        %v945 = vadd.f32 %v880, %v913
        %v946 = vadd.f32 %v881, %v914
        %v947 = vadd.f32 %v882, %v915
        %v948 = vadd.f32 %v883, %v916
        %v949 = vadd.f32 %v884, %v917
        %v950 = vadd.f32 %v885, %v918
        %v951 = vadd.f32 %v886, %v919
        %v952 = vadd.f32 %v887, %v920
        %v953 = vadd.f32 %v888, %v921
        %v954 = vadd.f32 %v889, %v922
        %v955 = vadd.f32 %v890, %v923
        %v956 = vadd.f32 %v891, %v924
        %v957 = vadd.f32 %v892, %v925
        %v958 = vadd.f32 %v893, %v926
        %v959 = vadd.f32 %v894, %v927
        %v960 = vadd.f32 %v895, %v928
        %v961 = vadd.f32 %v896, %v929
        %v962 = vadd.f32 %v897, %v930
        %v963 = vadd.f32 %v898, %v931
        %v964 = vadd.f32 %v899, %v932
        %v965 = vadd.f32 %v900, %v933
        %v966 = vadd.f32 %v901, %v934
        %v967 = vadd.f32 %v902, %v935
        %v968 = vadd.f32 %v903, %v936
        %v969 = vadd.f32 %v904, %v937
        %v970 = vperm.slane %v470, 6
        %v971 = vmul.f32 %v476, %v970
        %v972 = vmul.f32 %v477, %v970
        %v973 = vmul.f32 %v478, %v970
        %v974 = vmul.f32 %v479, %v970
        %v975 = vmul.f32 %v480, %v970
        %v976 = vmul.f32 %v481, %v970
        %v977 = vmul.f32 %v482, %v970
        %v978 = vmul.f32 %v483, %v970
        %v979 = vmul.f32 %v484, %v970
        %v980 = vmul.f32 %v485, %v970
        %v981 = vmul.f32 %v486, %v970
        %v982 = vmul.f32 %v487, %v970
        %v983 = vmul.f32 %v488, %v970
        %v984 = vmul.f32 %v489, %v970
        %v985 = vmul.f32 %v490, %v970
        %v986 = vmul.f32 %v491, %v970
        %v987 = vmul.f32 %v492, %v970
        %v988 = vmul.f32 %v493, %v970
        %v989 = vmul.f32 %v494, %v970
        %v990 = vmul.f32 %v495, %v970
        %v991 = vmul.f32 %v496, %v970
        %v992 = vmul.f32 %v497, %v970
        %v993 = vmul.f32 %v498, %v970
        %v994 = vmul.f32 %v499, %v970
        %v995 = vmul.f32 %v500, %v970
        %v996 = vmul.f32 %v501, %v970
        %v997 = vmul.f32 %v502, %v970
        %v998 = vmul.f32 %v503, %v970
        %v999 = vmul.f32 %v504, %v970
        %v1000 = vmul.f32 %v505, %v970
        %v1001 = vmul.f32 %v506, %v970
        %v1002 = vmul.f32 %v507, %v970
        %v1003 = vadd.f32 %v938, %v971
        %v1004 = vadd.f32 %v939, %v972
        %v1005 = vadd.f32 %v940, %v973
        %v1006 = vadd.f32 %v941, %v974
        %v1007 = vadd.f32 %v942, %v975
        %v1008 = vadd.f32 %v943, %v976
        %v1009 = vadd.f32 %v944, %v977
        %v1010 = vadd.f32 %v945, %v978
        %v1011 = vadd.f32 %v946, %v979
        %v1012 = vadd.f32 %v947, %v980
        %v1013 = vadd.f32 %v948, %v981
        %v1014 = vadd.f32 %v949, %v982
        %v1015 = vadd.f32 %v950, %v983
        %v1016 = vadd.f32 %v951, %v984
        %v1017 = vadd.f32 %v952, %v985
        %v1018 = vadd.f32 %v953, %v986
        %v1019 = vadd.f32 %v954, %v987
        %v1020 = vadd.f32 %v955, %v988
        %v1021 = vadd.f32 %v956, %v989
        %v1022 = vadd.f32 %v957, %v990
        %v1023 = vadd.f32 %v958, %v991
        %v1024 = vadd.f32 %v959, %v992
        %v1025 = vadd.f32 %v960, %v993
        %v1026 = vadd.f32 %v961, %v994
        %v1027 = vadd.f32 %v962, %v995
        %v1028 = vadd.f32 %v963, %v996
        %v1029 = vadd.f32 %v964, %v997
        %v1030 = vadd.f32 %v965, %v998
        %v1031 = vadd.f32 %v966, %v999
        %v1032 = vadd.f32 %v967, %v1000
        %v1033 = vadd.f32 %v968, %v1001
        %v1034 = vadd.f32 %v969, %v1002
        %v1035 = vperm.slane %v470, 7
        %v1036 = vmul.f32 %v512, %v1035
        %v1037 = vmul.f32 %v513, %v1035
        %v1038 = vmul.f32 %v514, %v1035
        %v1039 = vmul.f32 %v515, %v1035
        %v1040 = vmul.f32 %v516, %v1035
        %v1041 = vmul.f32 %v517, %v1035
        %v1042 = vmul.f32 %v518, %v1035
        %v1043 = vmul.f32 %v519, %v1035
        %v1044 = vmul.f32 %v520, %v1035
        %v1045 = vmul.f32 %v521, %v1035
        %v1046 = vmul.f32 %v522, %v1035
        %v1047 = vmul.f32 %v523, %v1035
        %v1048 = vmul.f32 %v524, %v1035
        %v1049 = vmul.f32 %v525, %v1035
        %v1050 = vmul.f32 %v526, %v1035
        %v1051 = vmul.f32 %v527, %v1035
        %v1052 = vmul.f32 %v528, %v1035
        %v1053 = vmul.f32 %v529, %v1035
        %v1054 = vmul.f32 %v530, %v1035
        %v1055 = vmul.f32 %v531, %v1035
        %v1056 = vmul.f32 %v532, %v1035
        %v1057 = vmul.f32 %v533, %v1035
        %v1058 = vmul.f32 %v534, %v1035
        %v1059 = vmul.f32 %v535, %v1035
        %v1060 = vmul.f32 %v536, %v1035
        %v1061 = vmul.f32 %v537, %v1035
        %v1062 = vmul.f32 %v538, %v1035
        %v1063 = vmul.f32 %v539, %v1035
        %v1064 = vmul.f32 %v540, %v1035
        %v1065 = vmul.f32 %v541, %v1035
        %v1066 = vmul.f32 %v542, %v1035
        %v1067 = vmul.f32 %v543, %v1035
        %v1068 = vadd.f32 %v1003, %v1036
        %v1069 = vadd.f32 %v1004, %v1037
        %v1070 = vadd.f32 %v1005, %v1038
        %v1071 = vadd.f32 %v1006, %v1039
        %v1072 = vadd.f32 %v1007, %v1040
        %v1073 = vadd.f32 %v1008, %v1041
        %v1074 = vadd.f32 %v1009, %v1042
        %v1075 = vadd.f32 %v1010, %v1043
        %v1076 = vadd.f32 %v1011, %v1044
        %v1077 = vadd.f32 %v1012, %v1045
        %v1078 = vadd.f32 %v1013, %v1046
        %v1079 = vadd.f32 %v1014, %v1047
        %v1080 = vadd.f32 %v1015, %v1048
        %v1081 = vadd.f32 %v1016, %v1049
        %v1082 = vadd.f32 %v1017, %v1050
        %v1083 = vadd.f32 %v1018, %v1051
        %v1084 = vadd.f32 %v1019, %v1052
        %v1085 = vadd.f32 %v1020, %v1053
        %v1086 = vadd.f32 %v1021, %v1054
        %v1087 = vadd.f32 %v1022, %v1055
        %v1088 = vadd.f32 %v1023, %v1056
        %v1089 = vadd.f32 %v1024, %v1057
        %v1090 = vadd.f32 %v1025, %v1058
        %v1091 = vadd.f32 %v1026, %v1059
        %v1092 = vadd.f32 %v1027, %v1060
        %v1093 = vadd.f32 %v1028, %v1061
        %v1094 = vadd.f32 %v1029, %v1062
        %v1095 = vadd.f32 %v1030, %v1063
        %v1096 = vadd.f32 %v1031, %v1064
        %v1097 = vadd.f32 %v1032, %v1065
        %v1098 = vadd.f32 %v1033, %v1066
        %v1099 = vadd.f32 %v1034, %v1067
        %v1100 = vperm.slane %v471, 0
        %v1101 = vmul.f32 %v548, %v1100
        %v1102 = vmul.f32 %v549, %v1100
        %v1103 = vmul.f32 %v550, %v1100
        %v1104 = vmul.f32 %v551, %v1100
        %v1105 = vmul.f32 %v552, %v1100
        %v1106 = vmul.f32 %v553, %v1100
        %v1107 = vmul.f32 %v554, %v1100
        %v1108 = vmul.f32 %v555, %v1100
        %v1109 = vmul.f32 %v556, %v1100
        %v1110 = vmul.f32 %v557, %v1100
        %v1111 = vmul.f32 %v558, %v1100
        %v1112 = vmul.f32 %v559, %v1100
        %v1113 = vmul.f32 %v560, %v1100
        %v1114 = vmul.f32 %v561, %v1100
        %v1115 = vmul.f32 %v562, %v1100
        %v1116 = vmul.f32 %v563, %v1100
        %v1117 = vmul.f32 %v564, %v1100
        %v1118 = vmul.f32 %v565, %v1100
        %v1119 = vmul.f32 %v566, %v1100
        %v1120 = vmul.f32 %v567, %v1100
        %v1121 = vmul.f32 %v568, %v1100
        %v1122 = vmul.f32 %v569, %v1100
        %v1123 = vmul.f32 %v570, %v1100
        %v1124 = vmul.f32 %v571, %v1100
        %v1125 = vmul.f32 %v572, %v1100
        %v1126 = vmul.f32 %v573, %v1100
        %v1127 = vmul.f32 %v574, %v1100
        %v1128 = vmul.f32 %v575, %v1100
        %v1129 = vmul.f32 %v576, %v1100
        %v1130 = vmul.f32 %v577, %v1100
        %v1131 = vmul.f32 %v578, %v1100
        %v1132 = vmul.f32 %v579, %v1100
        %v1133 = vadd.f32 %v1068, %v1101
        %v1134 = vadd.f32 %v1069, %v1102
        %v1135 = vadd.f32 %v1070, %v1103
        %v1136 = vadd.f32 %v1071, %v1104
        %v1137 = vadd.f32 %v1072, %v1105
        %v1138 = vadd.f32 %v1073, %v1106
        %v1139 = vadd.f32 %v1074, %v1107
        %v1140 = vadd.f32 %v1075, %v1108
        %v1141 = vadd.f32 %v1076, %v1109
        %v1142 = vadd.f32 %v1077, %v1110
        %v1143 = vadd.f32 %v1078, %v1111
        %v1144 = vadd.f32 %v1079, %v1112
        %v1145 = vadd.f32 %v1080, %v1113
        %v1146 = vadd.f32 %v1081, %v1114
        %v1147 = vadd.f32 %v1082, %v1115
        %v1148 = vadd.f32 %v1083, %v1116
        %v1149 = vadd.f32 %v1084, %v1117
        %v1150 = vadd.f32 %v1085, %v1118
        %v1151 = vadd.f32 %v1086, %v1119
        %v1152 = vadd.f32 %v1087, %v1120
        %v1153 = vadd.f32 %v1088, %v1121
        %v1154 = vadd.f32 %v1089, %v1122
        %v1155 = vadd.f32 %v1090, %v1123
        %v1156 = vadd.f32 %v1091, %v1124
        %v1157 = vadd.f32 %v1092, %v1125
        %v1158 = vadd.f32 %v1093, %v1126
        %v1159 = vadd.f32 %v1094, %v1127
        %v1160 = vadd.f32 %v1095, %v1128
        %v1161 = vadd.f32 %v1096, %v1129
        %v1162 = vadd.f32 %v1097, %v1130
        %v1163 = vadd.f32 %v1098, %v1131
        %v1164 = vadd.f32 %v1099, %v1132
        %v1165 = vld [vmem:[%s2] sm:$0x1]
        %v1167 = vperm.slane %v1165, 0
        %v1169 = vadd.f32 %v1133, %v1167
        %v1170 = vadd.f32 %v1134, %v1167
        %v1171 = vadd.f32 %v1135, %v1167
        %v1172 = vadd.f32 %v1136, %v1167
        %v1173 = vadd.f32 %v1137, %v1167
        %v1174 = vadd.f32 %v1138, %v1167
        %v1175 = vadd.f32 %v1139, %v1167
        %v1176 = vadd.f32 %v1140, %v1167
        %v1177 = vadd.f32 %v1141, %v1167
        %v1178 = vadd.f32 %v1142, %v1167
        %v1179 = vadd.f32 %v1143, %v1167
        %v1180 = vadd.f32 %v1144, %v1167
        %v1181 = vadd.f32 %v1145, %v1167
        %v1182 = vadd.f32 %v1146, %v1167
        %v1183 = vadd.f32 %v1147, %v1167
        %v1184 = vadd.f32 %v1148, %v1167
        %v1185 = vadd.f32 %v1149, %v1167
        %v1186 = vadd.f32 %v1150, %v1167
        %v1187 = vadd.f32 %v1151, %v1167
        %v1188 = vadd.f32 %v1152, %v1167
        %v1189 = vadd.f32 %v1153, %v1167
        %v1190 = vadd.f32 %v1154, %v1167
        %v1191 = vadd.f32 %v1155, %v1167
        %v1192 = vadd.f32 %v1156, %v1167
        %v1193 = vadd.f32 %v1157, %v1167
        %v1194 = vadd.f32 %v1158, %v1167
        %v1195 = vadd.f32 %v1159, %v1167
        %v1196 = vadd.f32 %v1160, %v1167
        %v1197 = vadd.f32 %v1161, %v1167
        %v1198 = vadd.f32 %v1162, %v1167
        %v1199 = vadd.f32 %v1163, %v1167
        %v1200 = vadd.f32 %v1164, %v1167
        %vm1201 = vcmp.ge.f32.partialorder %v1169, 0.0
        %vm1202 = vcmp.ge.f32.partialorder %v1170, 0.0
        %vm1203 = vcmp.ge.f32.partialorder %v1171, 0.0
        %vm1204 = vcmp.ge.f32.partialorder %v1172, 0.0
        %vm1205 = vcmp.ge.f32.partialorder %v1173, 0.0
        %vm1206 = vcmp.ge.f32.partialorder %v1174, 0.0
        %vm1207 = vcmp.ge.f32.partialorder %v1175, 0.0
        %vm1208 = vcmp.ge.f32.partialorder %v1176, 0.0
        %vm1209 = vcmp.ge.f32.partialorder %v1177, 0.0
        %vm1210 = vcmp.ge.f32.partialorder %v1178, 0.0
        %vm1211 = vcmp.ge.f32.partialorder %v1179, 0.0
        %vm1212 = vcmp.ge.f32.partialorder %v1180, 0.0
        %vm1213 = vcmp.ge.f32.partialorder %v1181, 0.0
        %vm1214 = vcmp.ge.f32.partialorder %v1182, 0.0
        %vm1215 = vcmp.ge.f32.partialorder %v1183, 0.0
        %vm1216 = vcmp.ge.f32.partialorder %v1184, 0.0
        %vm1217 = vcmp.ge.f32.partialorder %v1185, 0.0
        %vm1218 = vcmp.ge.f32.partialorder %v1186, 0.0
        %vm1219 = vcmp.ge.f32.partialorder %v1187, 0.0
        %vm1220 = vcmp.ge.f32.partialorder %v1188, 0.0
        %vm1221 = vcmp.ge.f32.partialorder %v1189, 0.0
        %vm1222 = vcmp.ge.f32.partialorder %v1190, 0.0
        %vm1223 = vcmp.ge.f32.partialorder %v1191, 0.0
        %vm1224 = vcmp.ge.f32.partialorder %v1192, 0.0
        %vm1225 = vcmp.ge.f32.partialorder %v1193, 0.0
        %vm1226 = vcmp.ge.f32.partialorder %v1194, 0.0
        %vm1227 = vcmp.ge.f32.partialorder %v1195, 0.0
        %vm1228 = vcmp.ge.f32.partialorder %v1196, 0.0
        %vm1229 = vcmp.ge.f32.partialorder %v1197, 0.0
        %vm1230 = vcmp.ge.f32.partialorder %v1198, 0.0
        %vm1231 = vcmp.ge.f32.partialorder %v1199, 0.0
        %vm1232 = vcmp.ge.f32.partialorder %v1200, 0.0
        %v1233 = vmul.f32 %v1169, 0.01
        %v1234 = vmul.f32 %v1170, 0.01
        %v1235 = vmul.f32 %v1171, 0.01
        %v1236 = vmul.f32 %v1172, 0.01
        %v1237 = vmul.f32 %v1173, 0.01
        %v1238 = vmul.f32 %v1174, 0.01
        %v1239 = vmul.f32 %v1175, 0.01
        %v1240 = vmul.f32 %v1176, 0.01
        %v1241 = vmul.f32 %v1177, 0.01
        %v1242 = vmul.f32 %v1178, 0.01
        %v1243 = vmul.f32 %v1179, 0.01
        %v1244 = vmul.f32 %v1180, 0.01
        %v1245 = vmul.f32 %v1181, 0.01
        %v1246 = vmul.f32 %v1182, 0.01
        %v1247 = vmul.f32 %v1183, 0.01
        %v1248 = vmul.f32 %v1184, 0.01
        %v1249 = vmul.f32 %v1185, 0.01
        %v1250 = vmul.f32 %v1186, 0.01
        %v1251 = vmul.f32 %v1187, 0.01
        %v1252 = vmul.f32 %v1188, 0.01
        %v1253 = vmul.f32 %v1189, 0.01
        %v1254 = vmul.f32 %v1190, 0.01
        %v1255 = vmul.f32 %v1191, 0.01
        %v1256 = vmul.f32 %v1192, 0.01
        %v1257 = vmul.f32 %v1193, 0.01
        %v1258 = vmul.f32 %v1194, 0.01
        %v1259 = vmul.f32 %v1195, 0.01
        %v1260 = vmul.f32 %v1196, 0.01
        %v1261 = vmul.f32 %v1197, 0.01
        %v1262 = vmul.f32 %v1198, 0.01
        %v1263 = vmul.f32 %v1199, 0.01
        %v1264 = vmul.f32 %v1200, 0.01
        %v1265 = vsel %vm1201, %v1169, %v1233
        %v1266 = vsel %vm1202, %v1170, %v1234
        %v1267 = vsel %vm1203, %v1171, %v1235
        %v1268 = vsel %vm1204, %v1172, %v1236
        %v1269 = vsel %vm1205, %v1173, %v1237
        %v1270 = vsel %vm1206, %v1174, %v1238
        %v1271 = vsel %vm1207, %v1175, %v1239
        %v1272 = vsel %vm1208, %v1176, %v1240
        %v1273 = vsel %vm1209, %v1177, %v1241
        %v1274 = vsel %vm1210, %v1178, %v1242
        %v1275 = vsel %vm1211, %v1179, %v1243
        %v1276 = vsel %vm1212, %v1180, %v1244
        %v1277 = vsel %vm1213, %v1181, %v1245
        %v1278 = vsel %vm1214, %v1182, %v1246
        %v1279 = vsel %vm1215, %v1183, %v1247
        %v1280 = vsel %vm1216, %v1184, %v1248
        %v1281 = vsel %vm1217, %v1185, %v1249
        %v1282 = vsel %vm1218, %v1186, %v1250
        %v1283 = vsel %vm1219, %v1187, %v1251
        %v1284 = vsel %vm1220, %v1188, %v1252
        %v1285 = vsel %vm1221, %v1189, %v1253
        %v1286 = vsel %vm1222, %v1190, %v1254
        %v1287 = vsel %vm1223, %v1191, %v1255
        %v1288 = vsel %vm1224, %v1192, %v1256
        %v1289 = vsel %vm1225, %v1193, %v1257
        %v1290 = vsel %vm1226, %v1194, %v1258
        %v1291 = vsel %vm1227, %v1195, %v1259
        %v1292 = vsel %vm1228, %v1196, %v1260
        %v1293 = vsel %vm1229, %v1197, %v1261
        %v1294 = vsel %vm1230, %v1198, %v1262
        %v1295 = vsel %vm1231, %v1199, %v1263
        %v1296 = vsel %vm1232, %v1200, %v1264
        %v1297 = vld [vmem:[%s3] sm:$0xf]
        %v1298 = vld [vmem:[%s4] sm:$0x1]
        %v1300 = vperm.slane %v1298, 0
        %v1303 = vsel %vm359, %v1265, 0
        %v1306 = vsel %vm359, %v1266, 0
        %v1309 = vsel %vm359, %v1267, 0
        %v1312 = vsel %vm359, %v1268, 0
        %v1315 = vsel %vm359, %v1269, 0
        %v1318 = vsel %vm359, %v1270, 0
        %v1321 = vsel %vm359, %v1271, 0
        %v1324 = vsel %vm359, %v1272, 0
        %v1327 = vsel %vm359, %v1273, 0
        %v1330 = vsel %vm359, %v1274, 0
        %v1333 = vsel %vm359, %v1275, 0
        %v1336 = vsel %vm359, %v1276, 0
        %v1339 = vsel %vm359, %v1277, 0
        %v1342 = vsel %vm359, %v1278, 0
        %v1345 = vsel %vm359, %v1279, 0
        %v1348 = vsel %vm359, %v1280, 0
        %v1351 = vsel %vm359, %v1281, 0
        %v1354 = vsel %vm359, %v1282, 0
        %v1357 = vsel %vm359, %v1283, 0
        %v1360 = vsel %vm359, %v1284, 0
        %v1363 = vsel %vm359, %v1285, 0
        %v1366 = vsel %vm359, %v1286, 0
        %v1369 = vsel %vm359, %v1287, 0
        %v1372 = vsel %vm359, %v1288, 0
        %v1375 = vsel %vm359, %v1289, 0
        %v1378 = vsel %vm359, %v1290, 0
        %v1381 = vsel %vm359, %v1291, 0
        %v1384 = vsel %vm359, %v1292, 0
        %v1387 = vsel %vm359, %v1293, 0
        %v1390 = vsel %vm359, %v1294, 0
        %v1393 = vsel %vm359, %v1295, 0
        %v1396 = vsel %vm359, %v1296, 0
        %vm1398 = vcmask 1043456
        %v1400 = vsel %vm1398, %v1297, 0
        %1402 = vmatpush.msra.mxu0 0.0
        %1403 = vmatpush.msra.mxu0 0.0
        %1404 = vmatpush.msra.mxu0 0.0
        %1405 = vmatpush.msra.mxu0 0.0
        %1406 = vmatpush.msra.mxu0 0.0
        %1407 = vmatpush.msra.mxu0 0.0
        %1408 = vmatpush.msra.mxu0 0.0
        %1409 = vmatpush.msra.mxu0 0.0
        %1410 = vmatpush.msra.mxu0 0.0
        %1411 = vmatpush.msra.mxu0 0.0
        %1412 = vmatpush.msra.mxu0 0.0
        %1413 = vmatpush.msra.mxu0 0.0
        %1414 = vmatpush.msra.mxu0 0.0
        %1415 = vmatpush.msra.mxu0 0.0
        %1416 = vmatpush.msra.mxu0 0.0
        %1417 = vmatpush.msra.mxu0 %v1400
        %1418 = vmatmul.f32.gmra.mxu0 %v1303
        %v1419 = vpop.f32.mrf.mxu0
        %v1420 = vadd.f32 %v1300, %v1419
        %1421 = vmatmul.f32.gmra.mxu0 %v1306
        %v1422 = vpop.f32.mrf.mxu0
        %v1423 = vadd.f32 %v1300, %v1422
        %1424 = vmatmul.f32.gmra.mxu0 %v1309
        %v1425 = vpop.f32.mrf.mxu0
        %v1426 = vadd.f32 %v1300, %v1425
        %1427 = vmatmul.f32.gmra.mxu0 %v1312
        %v1428 = vpop.f32.mrf.mxu0
        %v1429 = vadd.f32 %v1300, %v1428
        %1430 = vmatmul.f32.gmra.mxu0 %v1315
        %v1431 = vpop.f32.mrf.mxu0
        %v1432 = vadd.f32 %v1300, %v1431
        %1433 = vmatmul.f32.gmra.mxu0 %v1318
        %v1434 = vpop.f32.mrf.mxu0
        %v1435 = vadd.f32 %v1300, %v1434
        %1436 = vmatmul.f32.gmra.mxu0 %v1321
        %v1437 = vpop.f32.mrf.mxu0
        %v1438 = vadd.f32 %v1300, %v1437
        %1439 = vmatmul.f32.gmra.mxu0 %v1324
        %v1440 = vpop.f32.mrf.mxu0
        %v1441 = vadd.f32 %v1300, %v1440
        %1442 = vmatmul.f32.gmra.mxu0 %v1327
        %v1443 = vpop.f32.mrf.mxu0
        %v1444 = vadd.f32 %v1300, %v1443
        %1445 = vmatmul.f32.gmra.mxu0 %v1330
        %v1446 = vpop.f32.mrf.mxu0
        %v1447 = vadd.f32 %v1300, %v1446
        %1448 = vmatmul.f32.gmra.mxu0 %v1333
        %v1449 = vpop.f32.mrf.mxu0
        %v1450 = vadd.f32 %v1300, %v1449
        %1451 = vmatmul.f32.gmra.mxu0 %v1336
        %v1452 = vpop.f32.mrf.mxu0
        %v1453 = vadd.f32 %v1300, %v1452
        %1454 = vmatmul.f32.gmra.mxu0 %v1339
        %v1455 = vpop.f32.mrf.mxu0
        %v1456 = vadd.f32 %v1300, %v1455
        %1457 = vmatmul.f32.gmra.mxu0 %v1342
        %v1458 = vpop.f32.mrf.mxu0
        %v1459 = vadd.f32 %v1300, %v1458
        %1460 = vmatmul.f32.gmra.mxu0 %v1345
        %v1461 = vpop.f32.mrf.mxu0
        %v1462 = vadd.f32 %v1300, %v1461
        %1463 = vmatmul.f32.gmra.mxu0 %v1348
        %v1464 = vpop.f32.mrf.mxu0
        %v1465 = vadd.f32 %v1300, %v1464
        %1466 = vmatmul.f32.gmra.mxu0 %v1351
        %v1467 = vpop.f32.mrf.mxu0
        %v1468 = vadd.f32 %v1300, %v1467
        %1469 = vmatmul.f32.gmra.mxu0 %v1354
        %v1470 = vpop.f32.mrf.mxu0
        %v1471 = vadd.f32 %v1300, %v1470
        %1472 = vmatmul.f32.gmra.mxu0 %v1357
        %v1473 = vpop.f32.mrf.mxu0
        %v1474 = vadd.f32 %v1300, %v1473
        %1475 = vmatmul.f32.gmra.mxu0 %v1360
        %v1476 = vpop.f32.mrf.mxu0
        %v1477 = vadd.f32 %v1300, %v1476
        %1478 = vmatmul.f32.gmra.mxu0 %v1363
        %v1479 = vpop.f32.mrf.mxu0
        %v1480 = vadd.f32 %v1300, %v1479
        %1481 = vmatmul.f32.gmra.mxu0 %v1366
        %v1482 = vpop.f32.mrf.mxu0
        %v1483 = vadd.f32 %v1300, %v1482
        %1484 = vmatmul.f32.gmra.mxu0 %v1369
        %v1485 = vpop.f32.mrf.mxu0
        %v1486 = vadd.f32 %v1300, %v1485
        %1487 = vmatmul.f32.gmra.mxu0 %v1372
        %v1488 = vpop.f32.mrf.mxu0
        %v1489 = vadd.f32 %v1300, %v1488
        %1490 = vmatmul.f32.gmra.mxu0 %v1375
        %v1491 = vpop.f32.mrf.mxu0
        %v1492 = vadd.f32 %v1300, %v1491
        %1493 = vmatmul.f32.gmra.mxu0 %v1378
        %v1494 = vpop.f32.mrf.mxu0
        %v1495 = vadd.f32 %v1300, %v1494
        %1496 = vmatmul.f32.gmra.mxu0 %v1381
        %v1497 = vpop.f32.mrf.mxu0
        %v1498 = vadd.f32 %v1300, %v1497
        %1499 = vmatmul.f32.gmra.mxu0 %v1384
        %v1500 = vpop.f32.mrf.mxu0
        %v1501 = vadd.f32 %v1300, %v1500
        %1502 = vmatmul.f32.gmra.mxu0 %v1387
        %v1503 = vpop.f32.mrf.mxu0
        %v1504 = vadd.f32 %v1300, %v1503
        %1505 = vmatmul.f32.gmra.mxu0 %v1390
        %v1506 = vpop.f32.mrf.mxu0
        %v1507 = vadd.f32 %v1300, %v1506
        %1508 = vmatmul.f32.gmra.mxu0 %v1393
        %v1509 = vpop.f32.mrf.mxu0
        %v1510 = vadd.f32 %v1300, %v1509
        %1511 = vmatmul.f32.gmra.mxu0 %v1396
        %v1512 = vpop.f32.mrf.mxu0
        %v1513 = vadd.f32 %v1300, %v1512
        %1514 = vdwg.mxu0
        %vm1515 = vcmp.ge.f32.partialorder %v1420, 0.0
        %vm1516 = vcmp.ge.f32.partialorder %v1423, 0.0
        %vm1517 = vcmp.ge.f32.partialorder %v1426, 0.0
        %vm1518 = vcmp.ge.f32.partialorder %v1429, 0.0
        %vm1519 = vcmp.ge.f32.partialorder %v1432, 0.0
        %vm1520 = vcmp.ge.f32.partialorder %v1435, 0.0
        %vm1521 = vcmp.ge.f32.partialorder %v1438, 0.0
        %vm1522 = vcmp.ge.f32.partialorder %v1441, 0.0
        %vm1523 = vcmp.ge.f32.partialorder %v1444, 0.0
        %vm1524 = vcmp.ge.f32.partialorder %v1447, 0.0
        %vm1525 = vcmp.ge.f32.partialorder %v1450, 0.0
        %vm1526 = vcmp.ge.f32.partialorder %v1453, 0.0
        %vm1527 = vcmp.ge.f32.partialorder %v1456, 0.0
        %vm1528 = vcmp.ge.f32.partialorder %v1459, 0.0
        %vm1529 = vcmp.ge.f32.partialorder %v1462, 0.0
        %vm1530 = vcmp.ge.f32.partialorder %v1465, 0.0
        %vm1531 = vcmp.ge.f32.partialorder %v1468, 0.0
        %vm1532 = vcmp.ge.f32.partialorder %v1471, 0.0
        %vm1533 = vcmp.ge.f32.partialorder %v1474, 0.0
        %vm1534 = vcmp.ge.f32.partialorder %v1477, 0.0
        %vm1535 = vcmp.ge.f32.partialorder %v1480, 0.0
        %vm1536 = vcmp.ge.f32.partialorder %v1483, 0.0
        %vm1537 = vcmp.ge.f32.partialorder %v1486, 0.0
        %vm1538 = vcmp.ge.f32.partialorder %v1489, 0.0
        %vm1539 = vcmp.ge.f32.partialorder %v1492, 0.0
        %vm1540 = vcmp.ge.f32.partialorder %v1495, 0.0
        %vm1541 = vcmp.ge.f32.partialorder %v1498, 0.0
        %vm1542 = vcmp.ge.f32.partialorder %v1501, 0.0
        %vm1543 = vcmp.ge.f32.partialorder %v1504, 0.0
        %vm1544 = vcmp.ge.f32.partialorder %v1507, 0.0
        %vm1545 = vcmp.ge.f32.partialorder %v1510, 0.0
        %vm1546 = vcmp.ge.f32.partialorder %v1513, 0.0
        %v1547 = vmul.f32 %v1420, 0.01
        %v1548 = vmul.f32 %v1423, 0.01
        %v1549 = vmul.f32 %v1426, 0.01
        %v1550 = vmul.f32 %v1429, 0.01
        %v1551 = vmul.f32 %v1432, 0.01
        %v1552 = vmul.f32 %v1435, 0.01
        %v1553 = vmul.f32 %v1438, 0.01
        %v1554 = vmul.f32 %v1441, 0.01
        %v1555 = vmul.f32 %v1444, 0.01
        %v1556 = vmul.f32 %v1447, 0.01
        %v1557 = vmul.f32 %v1450, 0.01
        %v1558 = vmul.f32 %v1453, 0.01
        %v1559 = vmul.f32 %v1456, 0.01
        %v1560 = vmul.f32 %v1459, 0.01
        %v1561 = vmul.f32 %v1462, 0.01
        %v1562 = vmul.f32 %v1465, 0.01
        %v1563 = vmul.f32 %v1468, 0.01
        %v1564 = vmul.f32 %v1471, 0.01
        %v1565 = vmul.f32 %v1474, 0.01
        %v1566 = vmul.f32 %v1477, 0.01
        %v1567 = vmul.f32 %v1480, 0.01
        %v1568 = vmul.f32 %v1483, 0.01
        %v1569 = vmul.f32 %v1486, 0.01
        %v1570 = vmul.f32 %v1489, 0.01
        %v1571 = vmul.f32 %v1492, 0.01
        %v1572 = vmul.f32 %v1495, 0.01
        %v1573 = vmul.f32 %v1498, 0.01
        %v1574 = vmul.f32 %v1501, 0.01
        %v1575 = vmul.f32 %v1504, 0.01
        %v1576 = vmul.f32 %v1507, 0.01
        %v1577 = vmul.f32 %v1510, 0.01
        %v1578 = vmul.f32 %v1513, 0.01
        %v1579 = vsel %vm1515, %v1420, %v1547
        %v1580 = vsel %vm1516, %v1423, %v1548
        %v1581 = vsel %vm1517, %v1426, %v1549
        %v1582 = vsel %vm1518, %v1429, %v1550
        %v1583 = vsel %vm1519, %v1432, %v1551
        %v1584 = vsel %vm1520, %v1435, %v1552
        %v1585 = vsel %vm1521, %v1438, %v1553
        %v1586 = vsel %vm1522, %v1441, %v1554
        %v1587 = vsel %vm1523, %v1444, %v1555
        %v1588 = vsel %vm1524, %v1447, %v1556
        %v1589 = vsel %vm1525, %v1450, %v1557
        %v1590 = vsel %vm1526, %v1453, %v1558
        %v1591 = vsel %vm1527, %v1456, %v1559
        %v1592 = vsel %vm1528, %v1459, %v1560
        %v1593 = vsel %vm1529, %v1462, %v1561
        %v1594 = vsel %vm1530, %v1465, %v1562
        %v1595 = vsel %vm1531, %v1468, %v1563
        %v1596 = vsel %vm1532, %v1471, %v1564
        %v1597 = vsel %vm1533, %v1474, %v1565
        %v1598 = vsel %vm1534, %v1477, %v1566
        %v1599 = vsel %vm1535, %v1480, %v1567
        %v1600 = vsel %vm1536, %v1483, %v1568
        %v1601 = vsel %vm1537, %v1486, %v1569
        %v1602 = vsel %vm1538, %v1489, %v1570
        %v1603 = vsel %vm1539, %v1492, %v1571
        %v1604 = vsel %vm1540, %v1495, %v1572
        %v1605 = vsel %vm1541, %v1498, %v1573
        %v1606 = vsel %vm1542, %v1501, %v1574
        %v1607 = vsel %vm1543, %v1504, %v1575
        %v1608 = vsel %vm1544, %v1507, %v1576
        %v1609 = vsel %vm1545, %v1510, %v1577
        %v1610 = vsel %vm1546, %v1513, %v1578
        %1611 = vst [vmem:[#allocation3] sm:$0xff] 0.0
        %1612 = vst [vmem:[#allocation3 + $0x8] sm:$0xff] 0.0
        %1613 = vst [vmem:[#allocation3 + $0x10] sm:$0x3] 0.0
        %s1614 = scalar_lea.vmem [#allocation3], 408
        %1615 = vst [vmem:[%s1614] sm:$0xff] 0.0
        %1616 = vst [vmem:[%s1614 + $0x8] sm:$0xff] 0.0
        %1617 = vst [vmem:[%s1614 + $0x10] sm:$0x3] 0.0
        %1618 = vst [vmem:[#allocation3] sm:$0x1] 0.0
        %1619 = vst [vmem:[#allocation3 + $0x18] sm:$0x1] 0.0
        %1620 = vst [vmem:[#allocation3 + $0x30] sm:$0x1] 0.0
        %1621 = vst [vmem:[#allocation3 + $0x48] sm:$0x1] 0.0
        %1622 = vst [vmem:[#allocation3 + $0x60] sm:$0x1] 0.0
        %1623 = vst [vmem:[#allocation3 + $0x78] sm:$0x1] 0.0
        %1624 = vst [vmem:[#allocation3 + $0x90] sm:$0x1] 0.0
        %1625 = vst [vmem:[#allocation3 + $0xa8] sm:$0x1] 0.0
        %1626 = vst [vmem:[#allocation3 + $0xc0] sm:$0x1] 0.0
        %1627 = vst [vmem:[#allocation3 + $0xd8] sm:$0x1] 0.0
        %1628 = vst [vmem:[#allocation3 + $0xf0] sm:$0x1] 0.0
        %1629 = vst [vmem:[#allocation3 + $0x108] sm:$0x1] 0.0
        %1630 = vst [vmem:[#allocation3 + $0x120] sm:$0x1] 0.0
        %1631 = vst [vmem:[#allocation3 + $0x138] sm:$0x1] 0.0
        %1632 = vst [vmem:[#allocation3 + $0x150] sm:$0x1] 0.0
        %1633 = vst [vmem:[#allocation3 + $0x168] sm:$0x1] 0.0
        %1634 = vst [vmem:[#allocation3 + $0x180] sm:$0x1] 0.0
        %1635 = vst [vmem:[#allocation3 + $0x198] sm:$0x1] 0.0
        %1636 = vst [vmem:[#allocation3 + $0x11] sm:$0x1] 0.0
        %1637 = vst [vmem:[#allocation3 + $0x29] sm:$0x1] 0.0
        %1638 = vst [vmem:[#allocation3 + $0x41] sm:$0x1] 0.0
        %1639 = vst [vmem:[#allocation3 + $0x59] sm:$0x1] 0.0
        %1640 = vst [vmem:[#allocation3 + $0x71] sm:$0x1] 0.0
        %1641 = vst [vmem:[#allocation3 + $0x89] sm:$0x1] 0.0
        %1642 = vst [vmem:[#allocation3 + $0xa1] sm:$0x1] 0.0
        %1643 = vst [vmem:[#allocation3 + $0xb9] sm:$0x1] 0.0
        %1644 = vst [vmem:[#allocation3 + $0xd1] sm:$0x1] 0.0
        %1645 = vst [vmem:[#allocation3 + $0xe9] sm:$0x1] 0.0
        %1646 = vst [vmem:[#allocation3 + $0x101] sm:$0x1] 0.0
        %1647 = vst [vmem:[#allocation3 + $0x119] sm:$0x1] 0.0
        %1648 = vst [vmem:[#allocation3 + $0x131] sm:$0x1] 0.0
        %1649 = vst [vmem:[#allocation3 + $0x149] sm:$0x1] 0.0
        %1650 = vst [vmem:[#allocation3 + $0x161] sm:$0x1] 0.0
        %1651 = vst [vmem:[#allocation3 + $0x179] sm:$0x1] 0.0
        %1652 = vst [vmem:[#allocation3 + $0x191] sm:$0x1] 0.0
        %1653 = vst [vmem:[#allocation3 + $0x1a9] sm:$0x1] 0.0
        %s1654 = scalar_lea.vmem [#allocation3], 24
        %1655 = vst [vmem:[%s1654 + $0x1] sm:$0xff] %v1579
        %1656 = vst [vmem:[%s1654 + $0x9] sm:$0xff] %v1580
        %1657 = vst [vmem:[%s1654 + $0x19] sm:$0xff] %v1581
        %1658 = vst [vmem:[%s1654 + $0x21] sm:$0xff] %v1582
        %1659 = vst [vmem:[%s1654 + $0x31] sm:$0xff] %v1583
        %1660 = vst [vmem:[%s1654 + $0x39] sm:$0xff] %v1584
        %1661 = vst [vmem:[%s1654 + $0x49] sm:$0xff] %v1585
        %1662 = vst [vmem:[%s1654 + $0x51] sm:$0xff] %v1586
        %1663 = vst [vmem:[%s1654 + $0x61] sm:$0xff] %v1587
        %1664 = vst [vmem:[%s1654 + $0x69] sm:$0xff] %v1588
        %1665 = vst [vmem:[%s1654 + $0x79] sm:$0xff] %v1589
        %1666 = vst [vmem:[%s1654 + $0x81] sm:$0xff] %v1590
        %1667 = vst [vmem:[%s1654 + $0x91] sm:$0xff] %v1591
        %1668 = vst [vmem:[%s1654 + $0x99] sm:$0xff] %v1592
        %1669 = vst [vmem:[%s1654 + $0xa9] sm:$0xff] %v1593
        %1670 = vst [vmem:[%s1654 + $0xb1] sm:$0xff] %v1594
        %1671 = vst [vmem:[%s1654 + $0xc1] sm:$0xff] %v1595
        %1672 = vst [vmem:[%s1654 + $0xc9] sm:$0xff] %v1596
        %1673 = vst [vmem:[%s1654 + $0xd9] sm:$0xff] %v1597
        %1674 = vst [vmem:[%s1654 + $0xe1] sm:$0xff] %v1598
        %1675 = vst [vmem:[%s1654 + $0xf1] sm:$0xff] %v1599
        %1676 = vst [vmem:[%s1654 + $0xf9] sm:$0xff] %v1600
        %1677 = vst [vmem:[%s1654 + $0x109] sm:$0xff] %v1601
        %1678 = vst [vmem:[%s1654 + $0x111] sm:$0xff] %v1602
        %1679 = vst [vmem:[%s1654 + $0x121] sm:$0xff] %v1603
        %1680 = vst [vmem:[%s1654 + $0x129] sm:$0xff] %v1604
        %1681 = vst [vmem:[%s1654 + $0x139] sm:$0xff] %v1605
        %1682 = vst [vmem:[%s1654 + $0x141] sm:$0xff] %v1606
        %1683 = vst [vmem:[%s1654 + $0x151] sm:$0xff] %v1607
        %1684 = vst [vmem:[%s1654 + $0x159] sm:$0xff] %v1608
        %1685 = vst [vmem:[%s1654 + $0x169] sm:$0xff] %v1609
        %1686 = vst [vmem:[%s1654 + $0x171] sm:$0xff] %v1610
        %v1687 = vld [vmem:[%s5] sm:$0xff]
        %v1688 = vld [vmem:[%s5 + $0x8] sm:$0x1]
        %v1689 = vld [vmem:[#allocation3] sm:$0xff]
        %v1690 = vld [vmem:[#allocation3 + $0x8] sm:$0xff]
        %v1691 = vld [vmem:[#allocation3 + $0x18] sm:$0xff]
        %v1692 = vld [vmem:[#allocation3 + $0x20] sm:$0xff]
        %v1693 = vld [vmem:[#allocation3 + $0x30] sm:$0xff]
        %v1694 = vld [vmem:[#allocation3 + $0x38] sm:$0xff]
        %v1695 = vld [vmem:[#allocation3 + $0x48] sm:$0xff]
        %v1696 = vld [vmem:[#allocation3 + $0x50] sm:$0xff]
        %v1697 = vld [vmem:[#allocation3 + $0x60] sm:$0xff]
        %v1698 = vld [vmem:[#allocation3 + $0x68] sm:$0xff]
        %v1699 = vld [vmem:[#allocation3 + $0x78] sm:$0xff]
        %v1700 = vld [vmem:[#allocation3 + $0x80] sm:$0xff]
        %v1701 = vld [vmem:[#allocation3 + $0x90] sm:$0xff]
        %v1702 = vld [vmem:[#allocation3 + $0x98] sm:$0xff]
        %v1703 = vld [vmem:[#allocation3 + $0xa8] sm:$0xff]
        %v1704 = vld [vmem:[#allocation3 + $0xb0] sm:$0xff]
        %v1705 = vld [vmem:[#allocation3 + $0xc0] sm:$0xff]
        %v1706 = vld [vmem:[#allocation3 + $0xc8] sm:$0xff]
        %v1707 = vld [vmem:[#allocation3 + $0xd8] sm:$0xff]
        %v1708 = vld [vmem:[#allocation3 + $0xe0] sm:$0xff]
        %v1709 = vld [vmem:[#allocation3 + $0xf0] sm:$0xff]
        %v1710 = vld [vmem:[#allocation3 + $0xf8] sm:$0xff]
        %v1711 = vld [vmem:[#allocation3 + $0x108] sm:$0xff]
        %v1712 = vld [vmem:[#allocation3 + $0x110] sm:$0xff]
        %v1713 = vld [vmem:[#allocation3 + $0x120] sm:$0xff]
        %v1714 = vld [vmem:[#allocation3 + $0x128] sm:$0xff]
        %v1715 = vld [vmem:[#allocation3 + $0x138] sm:$0xff]
        %v1716 = vld [vmem:[#allocation3 + $0x140] sm:$0xff]
        %v1717 = vld [vmem:[#allocation3 + $0x150] sm:$0xff]
        %v1718 = vld [vmem:[#allocation3 + $0x158] sm:$0xff]
        %v1719 = vld [vmem:[#allocation3 + $0x168] sm:$0xff]
        %v1720 = vld [vmem:[#allocation3 + $0x170] sm:$0xff]
        %v1721 = vld [vmem:[#allocation3 + $0x180] sm:$0xff]
        %v1722 = vld [vmem:[#allocation3 + $0x188] sm:$0xff]
        %v1723 = vld [vmem:[#allocation3 + $0x198] sm:$0xff]
        %v1724 = vld [vmem:[#allocation3 + $0x1a0] sm:$0xff]
        %v1725 = vld [vmem:[#allocation3 + $0x1] sm:$0xff]
        %v1726 = vld [vmem:[#allocation3 + $0x9] sm:$0xff]
        %v1727 = vld [vmem:[#allocation3 + $0x19] sm:$0xff]
        %v1728 = vld [vmem:[#allocation3 + $0x21] sm:$0xff]
        %v1729 = vld [vmem:[#allocation3 + $0x31] sm:$0xff]
        %v1730 = vld [vmem:[#allocation3 + $0x39] sm:$0xff]
        %v1731 = vld [vmem:[#allocation3 + $0x49] sm:$0xff]
        %v1732 = vld [vmem:[#allocation3 + $0x51] sm:$0xff]
        %v1733 = vld [vmem:[#allocation3 + $0x61] sm:$0xff]
        %v1734 = vld [vmem:[#allocation3 + $0x69] sm:$0xff]
        %v1735 = vld [vmem:[#allocation3 + $0x79] sm:$0xff]
        %v1736 = vld [vmem:[#allocation3 + $0x81] sm:$0xff]
        %v1737 = vld [vmem:[#allocation3 + $0x91] sm:$0xff]
        %v1738 = vld [vmem:[#allocation3 + $0x99] sm:$0xff]
        %v1739 = vld [vmem:[#allocation3 + $0xa9] sm:$0xff]
        %v1740 = vld [vmem:[#allocation3 + $0xb1] sm:$0xff]
        %v1741 = vld [vmem:[#allocation3 + $0xc1] sm:$0xff]
        %v1742 = vld [vmem:[#allocation3 + $0xc9] sm:$0xff]
        %v1743 = vld [vmem:[#allocation3 + $0xd9] sm:$0xff]
        %v1744 = vld [vmem:[#allocation3 + $0xe1] sm:$0xff]
        %v1745 = vld [vmem:[#allocation3 + $0xf1] sm:$0xff]
        %v1746 = vld [vmem:[#allocation3 + $0xf9] sm:$0xff]
        %v1747 = vld [vmem:[#allocation3 + $0x109] sm:$0xff]
        %v1748 = vld [vmem:[#allocation3 + $0x111] sm:$0xff]
        %v1749 = vld [vmem:[#allocation3 + $0x121] sm:$0xff]
        %v1750 = vld [vmem:[#allocation3 + $0x129] sm:$0xff]
        %v1751 = vld [vmem:[#allocation3 + $0x139] sm:$0xff]
        %v1752 = vld [vmem:[#allocation3 + $0x141] sm:$0xff]
        %v1753 = vld [vmem:[#allocation3 + $0x151] sm:$0xff]
        %v1754 = vld [vmem:[#allocation3 + $0x159] sm:$0xff]
        %v1755 = vld [vmem:[#allocation3 + $0x169] sm:$0xff]
        %v1756 = vld [vmem:[#allocation3 + $0x171] sm:$0xff]
        %v1757 = vld [vmem:[#allocation3 + $0x181] sm:$0xff]
        %v1758 = vld [vmem:[#allocation3 + $0x189] sm:$0xff]
        %v1759 = vld [vmem:[#allocation3 + $0x199] sm:$0xff]
        %v1760 = vld [vmem:[#allocation3 + $0x1a1] sm:$0xff]
        %v1761 = vld [vmem:[#allocation3 + $0x2] sm:$0xff]
        %v1762 = vld [vmem:[#allocation3 + $0xa] sm:$0xff]
        %v1763 = vld [vmem:[#allocation3 + $0x1a] sm:$0xff]
        %v1764 = vld [vmem:[#allocation3 + $0x22] sm:$0xff]
        %v1765 = vld [vmem:[#allocation3 + $0x32] sm:$0xff]
        %v1766 = vld [vmem:[#allocation3 + $0x3a] sm:$0xff]
        %v1767 = vld [vmem:[#allocation3 + $0x4a] sm:$0xff]
        %v1768 = vld [vmem:[#allocation3 + $0x52] sm:$0xff]
        %v1769 = vld [vmem:[#allocation3 + $0x62] sm:$0xff]
        %v1770 = vld [vmem:[#allocation3 + $0x6a] sm:$0xff]
        %v1771 = vld [vmem:[#allocation3 + $0x7a] sm:$0xff]
        %v1772 = vld [vmem:[#allocation3 + $0x82] sm:$0xff]
        %v1773 = vld [vmem:[#allocation3 + $0x92] sm:$0xff]
        %v1774 = vld [vmem:[#allocation3 + $0x9a] sm:$0xff]
        %v1775 = vld [vmem:[#allocation3 + $0xaa] sm:$0xff]
        %v1776 = vld [vmem:[#allocation3 + $0xb2] sm:$0xff]
        %v1777 = vld [vmem:[#allocation3 + $0xc2] sm:$0xff]
        %v1778 = vld [vmem:[#allocation3 + $0xca] sm:$0xff]
        %v1779 = vld [vmem:[#allocation3 + $0xda] sm:$0xff]
        %v1780 = vld [vmem:[#allocation3 + $0xe2] sm:$0xff]
        %v1781 = vld [vmem:[#allocation3 + $0xf2] sm:$0xff]
        %v1782 = vld [vmem:[#allocation3 + $0xfa] sm:$0xff]
        %v1783 = vld [vmem:[#allocation3 + $0x10a] sm:$0xff]
        %v1784 = vld [vmem:[#allocation3 + $0x112] sm:$0xff]
        %v1785 = vld [vmem:[#allocation3 + $0x122] sm:$0xff]
        %v1786 = vld [vmem:[#allocation3 + $0x12a] sm:$0xff]
        %v1787 = vld [vmem:[#allocation3 + $0x13a] sm:$0xff]
        %v1788 = vld [vmem:[#allocation3 + $0x142] sm:$0xff]
        %v1789 = vld [vmem:[#allocation3 + $0x152] sm:$0xff]
        %v1790 = vld [vmem:[#allocation3 + $0x15a] sm:$0xff]
        %v1791 = vld [vmem:[#allocation3 + $0x16a] sm:$0xff]
        %v1792 = vld [vmem:[#allocation3 + $0x172] sm:$0xff]
        %v1793 = vld [vmem:[#allocation3 + $0x182] sm:$0xff]
        %v1794 = vld [vmem:[#allocation3 + $0x18a] sm:$0xff]
        %v1795 = vld [vmem:[#allocation3 + $0x19a] sm:$0xff]
        %v1796 = vld [vmem:[#allocation3 + $0x1a2] sm:$0xff]
        %v1797 = vperm.slane %v1687, 0
        %v1798 = vmul.f32 %v1689, %v1797
        %v1799 = vmul.f32 %v1690, %v1797
        %v1800 = vmul.f32 %v1691, %v1797
        %v1801 = vmul.f32 %v1692, %v1797
        %v1802 = vmul.f32 %v1693, %v1797
        %v1803 = vmul.f32 %v1694, %v1797
        %v1804 = vmul.f32 %v1695, %v1797
        %v1805 = vmul.f32 %v1696, %v1797
        %v1806 = vmul.f32 %v1697, %v1797
        %v1807 = vmul.f32 %v1698, %v1797
        %v1808 = vmul.f32 %v1699, %v1797
        %v1809 = vmul.f32 %v1700, %v1797
        %v1810 = vmul.f32 %v1701, %v1797
        %v1811 = vmul.f32 %v1702, %v1797
        %v1812 = vmul.f32 %v1703, %v1797
        %v1813 = vmul.f32 %v1704, %v1797
        %v1814 = vmul.f32 %v1705, %v1797
        %v1815 = vmul.f32 %v1706, %v1797
        %v1816 = vmul.f32 %v1707, %v1797
        %v1817 = vmul.f32 %v1708, %v1797
        %v1818 = vmul.f32 %v1709, %v1797
        %v1819 = vmul.f32 %v1710, %v1797
        %v1820 = vmul.f32 %v1711, %v1797
        %v1821 = vmul.f32 %v1712, %v1797
        %v1822 = vmul.f32 %v1713, %v1797
        %v1823 = vmul.f32 %v1714, %v1797
        %v1824 = vmul.f32 %v1715, %v1797
        %v1825 = vmul.f32 %v1716, %v1797
        %v1826 = vmul.f32 %v1717, %v1797
        %v1827 = vmul.f32 %v1718, %v1797
        %v1828 = vmul.f32 %v1719, %v1797
        %v1829 = vmul.f32 %v1720, %v1797
        %v1830 = vadd.f32 %v1798, 0.0
        %v1831 = vadd.f32 %v1799, 0.0
        %v1832 = vadd.f32 %v1800, 0.0
        %v1833 = vadd.f32 %v1801, 0.0
        %v1834 = vadd.f32 %v1802, 0.0
        %v1835 = vadd.f32 %v1803, 0.0
        %v1836 = vadd.f32 %v1804, 0.0
        %v1837 = vadd.f32 %v1805, 0.0
        %v1838 = vadd.f32 %v1806, 0.0
        %v1839 = vadd.f32 %v1807, 0.0
        %v1840 = vadd.f32 %v1808, 0.0
        %v1841 = vadd.f32 %v1809, 0.0
        %v1842 = vadd.f32 %v1810, 0.0
        %v1843 = vadd.f32 %v1811, 0.0
        %v1844 = vadd.f32 %v1812, 0.0
        %v1845 = vadd.f32 %v1813, 0.0
        %v1846 = vadd.f32 %v1814, 0.0
        %v1847 = vadd.f32 %v1815, 0.0
        %v1848 = vadd.f32 %v1816, 0.0
        %v1849 = vadd.f32 %v1817, 0.0
        %v1850 = vadd.f32 %v1818, 0.0
        %v1851 = vadd.f32 %v1819, 0.0
        %v1852 = vadd.f32 %v1820, 0.0
        %v1853 = vadd.f32 %v1821, 0.0
        %v1854 = vadd.f32 %v1822, 0.0
        %v1855 = vadd.f32 %v1823, 0.0
        %v1856 = vadd.f32 %v1824, 0.0
        %v1857 = vadd.f32 %v1825, 0.0
        %v1858 = vadd.f32 %v1826, 0.0
        %v1859 = vadd.f32 %v1827, 0.0
        %v1860 = vadd.f32 %v1828, 0.0
        %v1861 = vadd.f32 %v1829, 0.0
        %v1862 = vperm.slane %v1687, 1
        %v1863 = vmul.f32 %v1725, %v1862
        %v1864 = vmul.f32 %v1726, %v1862
        %v1865 = vmul.f32 %v1727, %v1862
        %v1866 = vmul.f32 %v1728, %v1862
        %v1867 = vmul.f32 %v1729, %v1862
        %v1868 = vmul.f32 %v1730, %v1862
        %v1869 = vmul.f32 %v1731, %v1862
        %v1870 = vmul.f32 %v1732, %v1862
        %v1871 = vmul.f32 %v1733, %v1862
        %v1872 = vmul.f32 %v1734, %v1862
        %v1873 = vmul.f32 %v1735, %v1862
        %v1874 = vmul.f32 %v1736, %v1862
        %v1875 = vmul.f32 %v1737, %v1862
        %v1876 = vmul.f32 %v1738, %v1862
        %v1877 = vmul.f32 %v1739, %v1862
        %v1878 = vmul.f32 %v1740, %v1862
        %v1879 = vmul.f32 %v1741, %v1862
        %v1880 = vmul.f32 %v1742, %v1862
        %v1881 = vmul.f32 %v1743, %v1862
        %v1882 = vmul.f32 %v1744, %v1862
        %v1883 = vmul.f32 %v1745, %v1862
        %v1884 = vmul.f32 %v1746, %v1862
        %v1885 = vmul.f32 %v1747, %v1862
        %v1886 = vmul.f32 %v1748, %v1862
        %v1887 = vmul.f32 %v1749, %v1862
        %v1888 = vmul.f32 %v1750, %v1862
        %v1889 = vmul.f32 %v1751, %v1862
        %v1890 = vmul.f32 %v1752, %v1862
        %v1891 = vmul.f32 %v1753, %v1862
        %v1892 = vmul.f32 %v1754, %v1862
        %v1893 = vmul.f32 %v1755, %v1862
        %v1894 = vmul.f32 %v1756, %v1862
        %v1895 = vadd.f32 %v1830, %v1863
        %v1896 = vadd.f32 %v1831, %v1864
        %v1897 = vadd.f32 %v1832, %v1865
        %v1898 = vadd.f32 %v1833, %v1866
        %v1899 = vadd.f32 %v1834, %v1867
        %v1900 = vadd.f32 %v1835, %v1868
        %v1901 = vadd.f32 %v1836, %v1869
        %v1902 = vadd.f32 %v1837, %v1870
        %v1903 = vadd.f32 %v1838, %v1871
        %v1904 = vadd.f32 %v1839, %v1872
        %v1905 = vadd.f32 %v1840, %v1873
        %v1906 = vadd.f32 %v1841, %v1874
        %v1907 = vadd.f32 %v1842, %v1875
        %v1908 = vadd.f32 %v1843, %v1876
        %v1909 = vadd.f32 %v1844, %v1877
        %v1910 = vadd.f32 %v1845, %v1878
        %v1911 = vadd.f32 %v1846, %v1879
        %v1912 = vadd.f32 %v1847, %v1880
        %v1913 = vadd.f32 %v1848, %v1881
        %v1914 = vadd.f32 %v1849, %v1882
        %v1915 = vadd.f32 %v1850, %v1883
        %v1916 = vadd.f32 %v1851, %v1884
        %v1917 = vadd.f32 %v1852, %v1885
        %v1918 = vadd.f32 %v1853, %v1886
        %v1919 = vadd.f32 %v1854, %v1887
        %v1920 = vadd.f32 %v1855, %v1888
        %v1921 = vadd.f32 %v1856, %v1889
        %v1922 = vadd.f32 %v1857, %v1890
        %v1923 = vadd.f32 %v1858, %v1891
        %v1924 = vadd.f32 %v1859, %v1892
        %v1925 = vadd.f32 %v1860, %v1893
        %v1926 = vadd.f32 %v1861, %v1894
        %v1927 = vperm.slane %v1687, 2
        %v1928 = vmul.f32 %v1761, %v1927
        %v1929 = vmul.f32 %v1762, %v1927
        %v1930 = vmul.f32 %v1763, %v1927
        %v1931 = vmul.f32 %v1764, %v1927
        %v1932 = vmul.f32 %v1765, %v1927
        %v1933 = vmul.f32 %v1766, %v1927
        %v1934 = vmul.f32 %v1767, %v1927
        %v1935 = vmul.f32 %v1768, %v1927
        %v1936 = vmul.f32 %v1769, %v1927
        %v1937 = vmul.f32 %v1770, %v1927
        %v1938 = vmul.f32 %v1771, %v1927
        %v1939 = vmul.f32 %v1772, %v1927
        %v1940 = vmul.f32 %v1773, %v1927
        %v1941 = vmul.f32 %v1774, %v1927
        %v1942 = vmul.f32 %v1775, %v1927
        %v1943 = vmul.f32 %v1776, %v1927
        %v1944 = vmul.f32 %v1777, %v1927
        %v1945 = vmul.f32 %v1778, %v1927
        %v1946 = vmul.f32 %v1779, %v1927
        %v1947 = vmul.f32 %v1780, %v1927
        %v1948 = vmul.f32 %v1781, %v1927
        %v1949 = vmul.f32 %v1782, %v1927
        %v1950 = vmul.f32 %v1783, %v1927
        %v1951 = vmul.f32 %v1784, %v1927
        %v1952 = vmul.f32 %v1785, %v1927
        %v1953 = vmul.f32 %v1786, %v1927
        %v1954 = vmul.f32 %v1787, %v1927
        %v1955 = vmul.f32 %v1788, %v1927
        %v1956 = vmul.f32 %v1789, %v1927
        %v1957 = vmul.f32 %v1790, %v1927
        %v1958 = vmul.f32 %v1791, %v1927
        %v1959 = vmul.f32 %v1792, %v1927
        %v1960 = vadd.f32 %v1895, %v1928
        %v1961 = vadd.f32 %v1896, %v1929
        %v1962 = vadd.f32 %v1897, %v1930
        %v1963 = vadd.f32 %v1898, %v1931
        %v1964 = vadd.f32 %v1899, %v1932
        %v1965 = vadd.f32 %v1900, %v1933
        %v1966 = vadd.f32 %v1901, %v1934
        %v1967 = vadd.f32 %v1902, %v1935
        %v1968 = vadd.f32 %v1903, %v1936
        %v1969 = vadd.f32 %v1904, %v1937
        %v1970 = vadd.f32 %v1905, %v1938
        %v1971 = vadd.f32 %v1906, %v1939
        %v1972 = vadd.f32 %v1907, %v1940
        %v1973 = vadd.f32 %v1908, %v1941
        %v1974 = vadd.f32 %v1909, %v1942
        %v1975 = vadd.f32 %v1910, %v1943
        %v1976 = vadd.f32 %v1911, %v1944
        %v1977 = vadd.f32 %v1912, %v1945
        %v1978 = vadd.f32 %v1913, %v1946
        %v1979 = vadd.f32 %v1914, %v1947
        %v1980 = vadd.f32 %v1915, %v1948
        %v1981 = vadd.f32 %v1916, %v1949
        %v1982 = vadd.f32 %v1917, %v1950
        %v1983 = vadd.f32 %v1918, %v1951
        %v1984 = vadd.f32 %v1919, %v1952
        %v1985 = vadd.f32 %v1920, %v1953
        %v1986 = vadd.f32 %v1921, %v1954
        %v1987 = vadd.f32 %v1922, %v1955
        %v1988 = vadd.f32 %v1923, %v1956
        %v1989 = vadd.f32 %v1924, %v1957
        %v1990 = vadd.f32 %v1925, %v1958
        %v1991 = vadd.f32 %v1926, %v1959
        %v1992 = vperm.slane %v1687, 3
        %v1993 = vmul.f32 %v1691, %v1992
        %v1994 = vmul.f32 %v1692, %v1992
        %v1995 = vmul.f32 %v1693, %v1992
        %v1996 = vmul.f32 %v1694, %v1992
        %v1997 = vmul.f32 %v1695, %v1992
        %v1998 = vmul.f32 %v1696, %v1992
        %v1999 = vmul.f32 %v1697, %v1992
        %v2000 = vmul.f32 %v1698, %v1992
        %v2001 = vmul.f32 %v1699, %v1992
        %v2002 = vmul.f32 %v1700, %v1992
        %v2003 = vmul.f32 %v1701, %v1992
        %v2004 = vmul.f32 %v1702, %v1992
        %v2005 = vmul.f32 %v1703, %v1992
        %v2006 = vmul.f32 %v1704, %v1992
        %v2007 = vmul.f32 %v1705, %v1992
        %v2008 = vmul.f32 %v1706, %v1992
        %v2009 = vmul.f32 %v1707, %v1992
        %v2010 = vmul.f32 %v1708, %v1992
        %v2011 = vmul.f32 %v1709, %v1992
        %v2012 = vmul.f32 %v1710, %v1992
        %v2013 = vmul.f32 %v1711, %v1992
        %v2014 = vmul.f32 %v1712, %v1992
        %v2015 = vmul.f32 %v1713, %v1992
        %v2016 = vmul.f32 %v1714, %v1992
        %v2017 = vmul.f32 %v1715, %v1992
        %v2018 = vmul.f32 %v1716, %v1992
        %v2019 = vmul.f32 %v1717, %v1992
        %v2020 = vmul.f32 %v1718, %v1992
        %v2021 = vmul.f32 %v1719, %v1992
        %v2022 = vmul.f32 %v1720, %v1992
        %v2023 = vmul.f32 %v1721, %v1992
        %v2024 = vmul.f32 %v1722, %v1992
        %v2025 = vadd.f32 %v1960, %v1993
        %v2026 = vadd.f32 %v1961, %v1994
        %v2027 = vadd.f32 %v1962, %v1995
        %v2028 = vadd.f32 %v1963, %v1996
        %v2029 = vadd.f32 %v1964, %v1997
        %v2030 = vadd.f32 %v1965, %v1998
        %v2031 = vadd.f32 %v1966, %v1999
        %v2032 = vadd.f32 %v1967, %v2000
        %v2033 = vadd.f32 %v1968, %v2001
        %v2034 = vadd.f32 %v1969, %v2002
        %v2035 = vadd.f32 %v1970, %v2003
        %v2036 = vadd.f32 %v1971, %v2004
        %v2037 = vadd.f32 %v1972, %v2005
        %v2038 = vadd.f32 %v1973, %v2006
        %v2039 = vadd.f32 %v1974, %v2007
        %v2040 = vadd.f32 %v1975, %v2008
        %v2041 = vadd.f32 %v1976, %v2009
        %v2042 = vadd.f32 %v1977, %v2010
        %v2043 = vadd.f32 %v1978, %v2011
        %v2044 = vadd.f32 %v1979, %v2012
        %v2045 = vadd.f32 %v1980, %v2013
        %v2046 = vadd.f32 %v1981, %v2014
        %v2047 = vadd.f32 %v1982, %v2015
        %v2048 = vadd.f32 %v1983, %v2016
        %v2049 = vadd.f32 %v1984, %v2017
        %v2050 = vadd.f32 %v1985, %v2018
        %v2051 = vadd.f32 %v1986, %v2019
        %v2052 = vadd.f32 %v1987, %v2020
        %v2053 = vadd.f32 %v1988, %v2021
        %v2054 = vadd.f32 %v1989, %v2022
        %v2055 = vadd.f32 %v1990, %v2023
        %v2056 = vadd.f32 %v1991, %v2024
        %v2057 = vperm.slane %v1687, 4
        %v2058 = vmul.f32 %v1727, %v2057
        %v2059 = vmul.f32 %v1728, %v2057
        %v2060 = vmul.f32 %v1729, %v2057
        %v2061 = vmul.f32 %v1730, %v2057
        %v2062 = vmul.f32 %v1731, %v2057
        %v2063 = vmul.f32 %v1732, %v2057
        %v2064 = vmul.f32 %v1733, %v2057
        %v2065 = vmul.f32 %v1734, %v2057
        %v2066 = vmul.f32 %v1735, %v2057
        %v2067 = vmul.f32 %v1736, %v2057
        %v2068 = vmul.f32 %v1737, %v2057
        %v2069 = vmul.f32 %v1738, %v2057
        %v2070 = vmul.f32 %v1739, %v2057
        %v2071 = vmul.f32 %v1740, %v2057
        %v2072 = vmul.f32 %v1741, %v2057
        %v2073 = vmul.f32 %v1742, %v2057
        %v2074 = vmul.f32 %v1743, %v2057
        %v2075 = vmul.f32 %v1744, %v2057
        %v2076 = vmul.f32 %v1745, %v2057
        %v2077 = vmul.f32 %v1746, %v2057
        %v2078 = vmul.f32 %v1747, %v2057
        %v2079 = vmul.f32 %v1748, %v2057
        %v2080 = vmul.f32 %v1749, %v2057
        %v2081 = vmul.f32 %v1750, %v2057
        %v2082 = vmul.f32 %v1751, %v2057
        %v2083 = vmul.f32 %v1752, %v2057
        %v2084 = vmul.f32 %v1753, %v2057
        %v2085 = vmul.f32 %v1754, %v2057
        %v2086 = vmul.f32 %v1755, %v2057
        %v2087 = vmul.f32 %v1756, %v2057
        %v2088 = vmul.f32 %v1757, %v2057
        %v2089 = vmul.f32 %v1758, %v2057
        %v2090 = vadd.f32 %v2025, %v2058
        %v2091 = vadd.f32 %v2026, %v2059
        %v2092 = vadd.f32 %v2027, %v2060
        %v2093 = vadd.f32 %v2028, %v2061
        %v2094 = vadd.f32 %v2029, %v2062
        %v2095 = vadd.f32 %v2030, %v2063
        %v2096 = vadd.f32 %v2031, %v2064
        %v2097 = vadd.f32 %v2032, %v2065
        %v2098 = vadd.f32 %v2033, %v2066
        %v2099 = vadd.f32 %v2034, %v2067
        %v2100 = vadd.f32 %v2035, %v2068
        %v2101 = vadd.f32 %v2036, %v2069
        %v2102 = vadd.f32 %v2037, %v2070
        %v2103 = vadd.f32 %v2038, %v2071
        %v2104 = vadd.f32 %v2039, %v2072
        %v2105 = vadd.f32 %v2040, %v2073
        %v2106 = vadd.f32 %v2041, %v2074
        %v2107 = vadd.f32 %v2042, %v2075
        %v2108 = vadd.f32 %v2043, %v2076
        %v2109 = vadd.f32 %v2044, %v2077
        %v2110 = vadd.f32 %v2045, %v2078
        %v2111 = vadd.f32 %v2046, %v2079
        %v2112 = vadd.f32 %v2047, %v2080
        %v2113 = vadd.f32 %v2048, %v2081
        %v2114 = vadd.f32 %v2049, %v2082
        %v2115 = vadd.f32 %v2050, %v2083
        %v2116 = vadd.f32 %v2051, %v2084
        %v2117 = vadd.f32 %v2052, %v2085
        %v2118 = vadd.f32 %v2053, %v2086
        %v2119 = vadd.f32 %v2054, %v2087
        %v2120 = vadd.f32 %v2055, %v2088
        %v2121 = vadd.f32 %v2056, %v2089
        %v2122 = vperm.slane %v1687, 5
        %v2123 = vmul.f32 %v1763, %v2122
        %v2124 = vmul.f32 %v1764, %v2122
        %v2125 = vmul.f32 %v1765, %v2122
        %v2126 = vmul.f32 %v1766, %v2122
        %v2127 = vmul.f32 %v1767, %v2122
        %v2128 = vmul.f32 %v1768, %v2122
        %v2129 = vmul.f32 %v1769, %v2122
        %v2130 = vmul.f32 %v1770, %v2122
        %v2131 = vmul.f32 %v1771, %v2122
        %v2132 = vmul.f32 %v1772, %v2122
        %v2133 = vmul.f32 %v1773, %v2122
        %v2134 = vmul.f32 %v1774, %v2122
        %v2135 = vmul.f32 %v1775, %v2122
        %v2136 = vmul.f32 %v1776, %v2122
        %v2137 = vmul.f32 %v1777, %v2122
        %v2138 = vmul.f32 %v1778, %v2122
        %v2139 = vmul.f32 %v1779, %v2122
        %v2140 = vmul.f32 %v1780, %v2122
        %v2141 = vmul.f32 %v1781, %v2122
        %v2142 = vmul.f32 %v1782, %v2122
        %v2143 = vmul.f32 %v1783, %v2122
        %v2144 = vmul.f32 %v1784, %v2122
        %v2145 = vmul.f32 %v1785, %v2122
        %v2146 = vmul.f32 %v1786, %v2122
        %v2147 = vmul.f32 %v1787, %v2122
        %v2148 = vmul.f32 %v1788, %v2122
        %v2149 = vmul.f32 %v1789, %v2122
        %v2150 = vmul.f32 %v1790, %v2122
        %v2151 = vmul.f32 %v1791, %v2122
        %v2152 = vmul.f32 %v1792, %v2122
        %v2153 = vmul.f32 %v1793, %v2122
        %v2154 = vmul.f32 %v1794, %v2122
        %v2155 = vadd.f32 %v2090, %v2123
        %v2156 = vadd.f32 %v2091, %v2124
        %v2157 = vadd.f32 %v2092, %v2125
        %v2158 = vadd.f32 %v2093, %v2126
        %v2159 = vadd.f32 %v2094, %v2127
        %v2160 = vadd.f32 %v2095, %v2128
        %v2161 = vadd.f32 %v2096, %v2129
        %v2162 = vadd.f32 %v2097, %v2130
        %v2163 = vadd.f32 %v2098, %v2131
        %v2164 = vadd.f32 %v2099, %v2132
        %v2165 = vadd.f32 %v2100, %v2133
        %v2166 = vadd.f32 %v2101, %v2134
        %v2167 = vadd.f32 %v2102, %v2135
        %v2168 = vadd.f32 %v2103, %v2136
        %v2169 = vadd.f32 %v2104, %v2137
        %v2170 = vadd.f32 %v2105, %v2138
        %v2171 = vadd.f32 %v2106, %v2139
        %v2172 = vadd.f32 %v2107, %v2140
        %v2173 = vadd.f32 %v2108, %v2141
        %v2174 = vadd.f32 %v2109, %v2142
        %v2175 = vadd.f32 %v2110, %v2143
        %v2176 = vadd.f32 %v2111, %v2144
        %v2177 = vadd.f32 %v2112, %v2145
        %v2178 = vadd.f32 %v2113, %v2146
        %v2179 = vadd.f32 %v2114, %v2147
        %v2180 = vadd.f32 %v2115, %v2148
        %v2181 = vadd.f32 %v2116, %v2149
        %v2182 = vadd.f32 %v2117, %v2150
        %v2183 = vadd.f32 %v2118, %v2151
        %v2184 = vadd.f32 %v2119, %v2152
        %v2185 = vadd.f32 %v2120, %v2153
        %v2186 = vadd.f32 %v2121, %v2154
        %v2187 = vperm.slane %v1687, 6
        %v2188 = vmul.f32 %v1693, %v2187
        %v2189 = vmul.f32 %v1694, %v2187
        %v2190 = vmul.f32 %v1695, %v2187
        %v2191 = vmul.f32 %v1696, %v2187
        %v2192 = vmul.f32 %v1697, %v2187
        %v2193 = vmul.f32 %v1698, %v2187
        %v2194 = vmul.f32 %v1699, %v2187
        %v2195 = vmul.f32 %v1700, %v2187
        %v2196 = vmul.f32 %v1701, %v2187
        %v2197 = vmul.f32 %v1702, %v2187
        %v2198 = vmul.f32 %v1703, %v2187
        %v2199 = vmul.f32 %v1704, %v2187
        %v2200 = vmul.f32 %v1705, %v2187
        %v2201 = vmul.f32 %v1706, %v2187
        %v2202 = vmul.f32 %v1707, %v2187
        %v2203 = vmul.f32 %v1708, %v2187
        %v2204 = vmul.f32 %v1709, %v2187
        %v2205 = vmul.f32 %v1710, %v2187
        %v2206 = vmul.f32 %v1711, %v2187
        %v2207 = vmul.f32 %v1712, %v2187
        %v2208 = vmul.f32 %v1713, %v2187
        %v2209 = vmul.f32 %v1714, %v2187
        %v2210 = vmul.f32 %v1715, %v2187
        %v2211 = vmul.f32 %v1716, %v2187
        %v2212 = vmul.f32 %v1717, %v2187
        %v2213 = vmul.f32 %v1718, %v2187
        %v2214 = vmul.f32 %v1719, %v2187
        %v2215 = vmul.f32 %v1720, %v2187
        %v2216 = vmul.f32 %v1721, %v2187
        %v2217 = vmul.f32 %v1722, %v2187
        %v2218 = vmul.f32 %v1723, %v2187
        %v2219 = vmul.f32 %v1724, %v2187
        %v2220 = vadd.f32 %v2155, %v2188
        %v2221 = vadd.f32 %v2156, %v2189
        %v2222 = vadd.f32 %v2157, %v2190
        %v2223 = vadd.f32 %v2158, %v2191
        %v2224 = vadd.f32 %v2159, %v2192
        %v2225 = vadd.f32 %v2160, %v2193
        %v2226 = vadd.f32 %v2161, %v2194
        %v2227 = vadd.f32 %v2162, %v2195
        %v2228 = vadd.f32 %v2163, %v2196
        %v2229 = vadd.f32 %v2164, %v2197
        %v2230 = vadd.f32 %v2165, %v2198
        %v2231 = vadd.f32 %v2166, %v2199
        %v2232 = vadd.f32 %v2167, %v2200
        %v2233 = vadd.f32 %v2168, %v2201
        %v2234 = vadd.f32 %v2169, %v2202
        %v2235 = vadd.f32 %v2170, %v2203
        %v2236 = vadd.f32 %v2171, %v2204
        %v2237 = vadd.f32 %v2172, %v2205
        %v2238 = vadd.f32 %v2173, %v2206
        %v2239 = vadd.f32 %v2174, %v2207
        %v2240 = vadd.f32 %v2175, %v2208
        %v2241 = vadd.f32 %v2176, %v2209
        %v2242 = vadd.f32 %v2177, %v2210
        %v2243 = vadd.f32 %v2178, %v2211
        %v2244 = vadd.f32 %v2179, %v2212
        %v2245 = vadd.f32 %v2180, %v2213
        %v2246 = vadd.f32 %v2181, %v2214
        %v2247 = vadd.f32 %v2182, %v2215
        %v2248 = vadd.f32 %v2183, %v2216
        %v2249 = vadd.f32 %v2184, %v2217
        %v2250 = vadd.f32 %v2185, %v2218
        %v2251 = vadd.f32 %v2186, %v2219
        %v2252 = vperm.slane %v1687, 7
        %v2253 = vmul.f32 %v1729, %v2252
        %v2254 = vmul.f32 %v1730, %v2252
        %v2255 = vmul.f32 %v1731, %v2252
        %v2256 = vmul.f32 %v1732, %v2252
        %v2257 = vmul.f32 %v1733, %v2252
        %v2258 = vmul.f32 %v1734, %v2252
        %v2259 = vmul.f32 %v1735, %v2252
        %v2260 = vmul.f32 %v1736, %v2252
        %v2261 = vmul.f32 %v1737, %v2252
        %v2262 = vmul.f32 %v1738, %v2252
        %v2263 = vmul.f32 %v1739, %v2252
        %v2264 = vmul.f32 %v1740, %v2252
        %v2265 = vmul.f32 %v1741, %v2252
        %v2266 = vmul.f32 %v1742, %v2252
        %v2267 = vmul.f32 %v1743, %v2252
        %v2268 = vmul.f32 %v1744, %v2252
        %v2269 = vmul.f32 %v1745, %v2252
        %v2270 = vmul.f32 %v1746, %v2252
        %v2271 = vmul.f32 %v1747, %v2252
        %v2272 = vmul.f32 %v1748, %v2252
        %v2273 = vmul.f32 %v1749, %v2252
        %v2274 = vmul.f32 %v1750, %v2252
        %v2275 = vmul.f32 %v1751, %v2252
        %v2276 = vmul.f32 %v1752, %v2252
        %v2277 = vmul.f32 %v1753, %v2252
        %v2278 = vmul.f32 %v1754, %v2252
        %v2279 = vmul.f32 %v1755, %v2252
        %v2280 = vmul.f32 %v1756, %v2252
        %v2281 = vmul.f32 %v1757, %v2252
        %v2282 = vmul.f32 %v1758, %v2252
        %v2283 = vmul.f32 %v1759, %v2252
        %v2284 = vmul.f32 %v1760, %v2252
        %v2285 = vadd.f32 %v2220, %v2253
        %v2286 = vadd.f32 %v2221, %v2254
        %v2287 = vadd.f32 %v2222, %v2255
        %v2288 = vadd.f32 %v2223, %v2256
        %v2289 = vadd.f32 %v2224, %v2257
        %v2290 = vadd.f32 %v2225, %v2258
        %v2291 = vadd.f32 %v2226, %v2259
        %v2292 = vadd.f32 %v2227, %v2260
        %v2293 = vadd.f32 %v2228, %v2261
        %v2294 = vadd.f32 %v2229, %v2262
        %v2295 = vadd.f32 %v2230, %v2263
        %v2296 = vadd.f32 %v2231, %v2264
        %v2297 = vadd.f32 %v2232, %v2265
        %v2298 = vadd.f32 %v2233, %v2266
        %v2299 = vadd.f32 %v2234, %v2267
        %v2300 = vadd.f32 %v2235, %v2268
        %v2301 = vadd.f32 %v2236, %v2269
        %v2302 = vadd.f32 %v2237, %v2270
        %v2303 = vadd.f32 %v2238, %v2271
        %v2304 = vadd.f32 %v2239, %v2272
        %v2305 = vadd.f32 %v2240, %v2273
        %v2306 = vadd.f32 %v2241, %v2274
        %v2307 = vadd.f32 %v2242, %v2275
        %v2308 = vadd.f32 %v2243, %v2276
        %v2309 = vadd.f32 %v2244, %v2277
        %v2310 = vadd.f32 %v2245, %v2278
        %v2311 = vadd.f32 %v2246, %v2279
        %v2312 = vadd.f32 %v2247, %v2280
        %v2313 = vadd.f32 %v2248, %v2281
        %v2314 = vadd.f32 %v2249, %v2282
        %v2315 = vadd.f32 %v2250, %v2283
        %v2316 = vadd.f32 %v2251, %v2284
        %v2317 = vperm.slane %v1688, 0
        %v2318 = vmul.f32 %v1765, %v2317
        %v2319 = vmul.f32 %v1766, %v2317
        %v2320 = vmul.f32 %v1767, %v2317
        %v2321 = vmul.f32 %v1768, %v2317
        %v2322 = vmul.f32 %v1769, %v2317
        %v2323 = vmul.f32 %v1770, %v2317
        %v2324 = vmul.f32 %v1771, %v2317
        %v2325 = vmul.f32 %v1772, %v2317
        %v2326 = vmul.f32 %v1773, %v2317
        %v2327 = vmul.f32 %v1774, %v2317
        %v2328 = vmul.f32 %v1775, %v2317
        %v2329 = vmul.f32 %v1776, %v2317
        %v2330 = vmul.f32 %v1777, %v2317
        %v2331 = vmul.f32 %v1778, %v2317
        %v2332 = vmul.f32 %v1779, %v2317
        %v2333 = vmul.f32 %v1780, %v2317
        %v2334 = vmul.f32 %v1781, %v2317
        %v2335 = vmul.f32 %v1782, %v2317
        %v2336 = vmul.f32 %v1783, %v2317
        %v2337 = vmul.f32 %v1784, %v2317
        %v2338 = vmul.f32 %v1785, %v2317
        %v2339 = vmul.f32 %v1786, %v2317
        %v2340 = vmul.f32 %v1787, %v2317
        %v2341 = vmul.f32 %v1788, %v2317
        %v2342 = vmul.f32 %v1789, %v2317
        %v2343 = vmul.f32 %v1790, %v2317
        %v2344 = vmul.f32 %v1791, %v2317
        %v2345 = vmul.f32 %v1792, %v2317
        %v2346 = vmul.f32 %v1793, %v2317
        %v2347 = vmul.f32 %v1794, %v2317
        %v2348 = vmul.f32 %v1795, %v2317
        %v2349 = vmul.f32 %v1796, %v2317
        %v2350 = vadd.f32 %v2285, %v2318
        %v2351 = vadd.f32 %v2286, %v2319
        %v2352 = vadd.f32 %v2287, %v2320
        %v2353 = vadd.f32 %v2288, %v2321
        %v2354 = vadd.f32 %v2289, %v2322
        %v2355 = vadd.f32 %v2290, %v2323
        %v2356 = vadd.f32 %v2291, %v2324
        %v2357 = vadd.f32 %v2292, %v2325
        %v2358 = vadd.f32 %v2293, %v2326
        %v2359 = vadd.f32 %v2294, %v2327
        %v2360 = vadd.f32 %v2295, %v2328
        %v2361 = vadd.f32 %v2296, %v2329
        %v2362 = vadd.f32 %v2297, %v2330
        %v2363 = vadd.f32 %v2298, %v2331
        %v2364 = vadd.f32 %v2299, %v2332
        %v2365 = vadd.f32 %v2300, %v2333
        %v2366 = vadd.f32 %v2301, %v2334
        %v2367 = vadd.f32 %v2302, %v2335
        %v2368 = vadd.f32 %v2303, %v2336
        %v2369 = vadd.f32 %v2304, %v2337
        %v2370 = vadd.f32 %v2305, %v2338
        %v2371 = vadd.f32 %v2306, %v2339
        %v2372 = vadd.f32 %v2307, %v2340
        %v2373 = vadd.f32 %v2308, %v2341
        %v2374 = vadd.f32 %v2309, %v2342
        %v2375 = vadd.f32 %v2310, %v2343
        %v2376 = vadd.f32 %v2311, %v2344
        %v2377 = vadd.f32 %v2312, %v2345
        %v2378 = vadd.f32 %v2313, %v2346
        %v2379 = vadd.f32 %v2314, %v2347
        %v2380 = vadd.f32 %v2315, %v2348
        %v2381 = vadd.f32 %v2316, %v2349
        %v2382 = vld [vmem:[%s6] sm:$0x1]
        %v2384 = vperm.slane %v2382, 0
        %v2386 = vadd.f32 %v2350, %v2384
        %v2387 = vadd.f32 %v2351, %v2384
        %v2388 = vadd.f32 %v2352, %v2384
        %v2389 = vadd.f32 %v2353, %v2384
        %v2390 = vadd.f32 %v2354, %v2384
        %v2391 = vadd.f32 %v2355, %v2384
        %v2392 = vadd.f32 %v2356, %v2384
        %v2393 = vadd.f32 %v2357, %v2384
        %v2394 = vadd.f32 %v2358, %v2384
        %v2395 = vadd.f32 %v2359, %v2384
        %v2396 = vadd.f32 %v2360, %v2384
        %v2397 = vadd.f32 %v2361, %v2384
        %v2398 = vadd.f32 %v2362, %v2384
        %v2399 = vadd.f32 %v2363, %v2384
        %v2400 = vadd.f32 %v2364, %v2384
        %v2401 = vadd.f32 %v2365, %v2384
        %v2402 = vadd.f32 %v2366, %v2384
        %v2403 = vadd.f32 %v2367, %v2384
        %v2404 = vadd.f32 %v2368, %v2384
        %v2405 = vadd.f32 %v2369, %v2384
        %v2406 = vadd.f32 %v2370, %v2384
        %v2407 = vadd.f32 %v2371, %v2384
        %v2408 = vadd.f32 %v2372, %v2384
        %v2409 = vadd.f32 %v2373, %v2384
        %v2410 = vadd.f32 %v2374, %v2384
        %v2411 = vadd.f32 %v2375, %v2384
        %v2412 = vadd.f32 %v2376, %v2384
        %v2413 = vadd.f32 %v2377, %v2384
        %v2414 = vadd.f32 %v2378, %v2384
        %v2415 = vadd.f32 %v2379, %v2384
        %v2416 = vadd.f32 %v2380, %v2384
        %v2417 = vadd.f32 %v2381, %v2384
        %vm2418 = vcmp.ge.f32.partialorder %v2386, 0.0
        %vm2419 = vcmp.ge.f32.partialorder %v2387, 0.0
        %vm2420 = vcmp.ge.f32.partialorder %v2388, 0.0
        %vm2421 = vcmp.ge.f32.partialorder %v2389, 0.0
        %vm2422 = vcmp.ge.f32.partialorder %v2390, 0.0
        %vm2423 = vcmp.ge.f32.partialorder %v2391, 0.0
        %vm2424 = vcmp.ge.f32.partialorder %v2392, 0.0
        %vm2425 = vcmp.ge.f32.partialorder %v2393, 0.0
        %vm2426 = vcmp.ge.f32.partialorder %v2394, 0.0
        %vm2427 = vcmp.ge.f32.partialorder %v2395, 0.0
        %vm2428 = vcmp.ge.f32.partialorder %v2396, 0.0
        %vm2429 = vcmp.ge.f32.partialorder %v2397, 0.0
        %vm2430 = vcmp.ge.f32.partialorder %v2398, 0.0
        %vm2431 = vcmp.ge.f32.partialorder %v2399, 0.0
        %vm2432 = vcmp.ge.f32.partialorder %v2400, 0.0
        %vm2433 = vcmp.ge.f32.partialorder %v2401, 0.0
        %vm2434 = vcmp.ge.f32.partialorder %v2402, 0.0
        %vm2435 = vcmp.ge.f32.partialorder %v2403, 0.0
        %vm2436 = vcmp.ge.f32.partialorder %v2404, 0.0
        %vm2437 = vcmp.ge.f32.partialorder %v2405, 0.0
        %vm2438 = vcmp.ge.f32.partialorder %v2406, 0.0
        %vm2439 = vcmp.ge.f32.partialorder %v2407, 0.0
        %vm2440 = vcmp.ge.f32.partialorder %v2408, 0.0
        %vm2441 = vcmp.ge.f32.partialorder %v2409, 0.0
        %vm2442 = vcmp.ge.f32.partialorder %v2410, 0.0
        %vm2443 = vcmp.ge.f32.partialorder %v2411, 0.0
        %vm2444 = vcmp.ge.f32.partialorder %v2412, 0.0
        %vm2445 = vcmp.ge.f32.partialorder %v2413, 0.0
        %vm2446 = vcmp.ge.f32.partialorder %v2414, 0.0
        %vm2447 = vcmp.ge.f32.partialorder %v2415, 0.0
        %vm2448 = vcmp.ge.f32.partialorder %v2416, 0.0
        %vm2449 = vcmp.ge.f32.partialorder %v2417, 0.0
        %v2450 = vmul.f32 %v2386, 0.01
        %v2451 = vmul.f32 %v2387, 0.01
        %v2452 = vmul.f32 %v2388, 0.01
        %v2453 = vmul.f32 %v2389, 0.01
        %v2454 = vmul.f32 %v2390, 0.01
        %v2455 = vmul.f32 %v2391, 0.01
        %v2456 = vmul.f32 %v2392, 0.01
        %v2457 = vmul.f32 %v2393, 0.01
        %v2458 = vmul.f32 %v2394, 0.01
        %v2459 = vmul.f32 %v2395, 0.01
        %v2460 = vmul.f32 %v2396, 0.01
        %v2461 = vmul.f32 %v2397, 0.01
        %v2462 = vmul.f32 %v2398, 0.01
        %v2463 = vmul.f32 %v2399, 0.01
        %v2464 = vmul.f32 %v2400, 0.01
        %v2465 = vmul.f32 %v2401, 0.01
        %v2466 = vmul.f32 %v2402, 0.01
        %v2467 = vmul.f32 %v2403, 0.01
        %v2468 = vmul.f32 %v2404, 0.01
        %v2469 = vmul.f32 %v2405, 0.01
        %v2470 = vmul.f32 %v2406, 0.01
        %v2471 = vmul.f32 %v2407, 0.01
        %v2472 = vmul.f32 %v2408, 0.01
        %v2473 = vmul.f32 %v2409, 0.01
        %v2474 = vmul.f32 %v2410, 0.01
        %v2475 = vmul.f32 %v2411, 0.01
        %v2476 = vmul.f32 %v2412, 0.01
        %v2477 = vmul.f32 %v2413, 0.01
        %v2478 = vmul.f32 %v2414, 0.01
        %v2479 = vmul.f32 %v2415, 0.01
        %v2480 = vmul.f32 %v2416, 0.01
        %v2481 = vmul.f32 %v2417, 0.01
        %v2482 = vsel %vm2418, %v2386, %v2450
        %v2483 = vsel %vm2419, %v2387, %v2451
        %v2484 = vsel %vm2420, %v2388, %v2452
        %v2485 = vsel %vm2421, %v2389, %v2453
        %v2486 = vsel %vm2422, %v2390, %v2454
        %v2487 = vsel %vm2423, %v2391, %v2455
        %v2488 = vsel %vm2424, %v2392, %v2456
        %v2489 = vsel %vm2425, %v2393, %v2457
        %v2490 = vsel %vm2426, %v2394, %v2458
        %v2491 = vsel %vm2427, %v2395, %v2459
        %v2492 = vsel %vm2428, %v2396, %v2460
        %v2493 = vsel %vm2429, %v2397, %v2461
        %v2494 = vsel %vm2430, %v2398, %v2462
        %v2495 = vsel %vm2431, %v2399, %v2463
        %v2496 = vsel %vm2432, %v2400, %v2464
        %v2497 = vsel %vm2433, %v2401, %v2465
        %v2498 = vsel %vm2434, %v2402, %v2466
        %v2499 = vsel %vm2435, %v2403, %v2467
        %v2500 = vsel %vm2436, %v2404, %v2468
        %v2501 = vsel %vm2437, %v2405, %v2469
        %v2502 = vsel %vm2438, %v2406, %v2470
        %v2503 = vsel %vm2439, %v2407, %v2471
        %v2504 = vsel %vm2440, %v2408, %v2472
        %v2505 = vsel %vm2441, %v2409, %v2473
        %v2506 = vsel %vm2442, %v2410, %v2474
        %v2507 = vsel %vm2443, %v2411, %v2475
        %v2508 = vsel %vm2444, %v2412, %v2476
        %v2509 = vsel %vm2445, %v2413, %v2477
        %v2510 = vsel %vm2446, %v2414, %v2478
        %v2511 = vsel %vm2447, %v2415, %v2479
        %v2512 = vsel %vm2448, %v2416, %v2480
        %v2513 = vsel %vm2449, %v2417, %v2481
        %v2514 = vpack.c.bf16 %v2483, %v2482
        %v2515 = vpack.c.bf16 %v2485, %v2484
        %v2516 = vpack.c.bf16 %v2487, %v2486
        %v2517 = vpack.c.bf16 %v2489, %v2488
        %v2518 = vpack.c.bf16 %v2491, %v2490
        %v2519 = vpack.c.bf16 %v2493, %v2492
        %v2520 = vpack.c.bf16 %v2495, %v2494
        %v2521 = vpack.c.bf16 %v2497, %v2496
        %v2522 = vpack.c.bf16 %v2499, %v2498
        %v2523 = vpack.c.bf16 %v2501, %v2500
        %v2524 = vpack.c.bf16 %v2503, %v2502
        %v2525 = vpack.c.bf16 %v2505, %v2504
        %v2526 = vpack.c.bf16 %v2507, %v2506
        %v2527 = vpack.c.bf16 %v2509, %v2508
        %v2528 = vpack.c.bf16 %v2511, %v2510
        %v2529 = vpack.c.bf16 %v2513, %v2512
        %v2530 = vld [vmem:[%s7] sm:$0xf]
        %v2531 = vld [vmem:[%s7 + $0x4] sm:$0xf]
        %v2532 = vld [vmem:[%s7 + $0x8] sm:$0xf]
        %v2533 = vld [vmem:[%s7 + $0xc] sm:$0xf]
        %v2534 = vld [vmem:[%s7 + $0x10] sm:$0xf]
        %v2535 = vld [vmem:[%s7 + $0x14] sm:$0xf]
        %v2536 = vld [vmem:[%s7 + $0x18] sm:$0xf]
        %v2537 = vld [vmem:[%s7 + $0x1c] sm:$0xf]
        %v2538 = vld [vmem:[%s7 + $0x20] sm:$0xf]
        %v2539 = vld [vmem:[%s7 + $0x24] sm:$0xf]
        %v2540 = vld [vmem:[%s7 + $0x28] sm:$0xf]
        %v2541 = vld [vmem:[%s7 + $0x2c] sm:$0xf]
        %v2542 = vld [vmem:[%s7 + $0x30] sm:$0xf]
        %v2543 = vld [vmem:[%s7 + $0x34] sm:$0xf]
        %v2544 = vld [vmem:[%s7 + $0x38] sm:$0xf]
        %v2545 = vld [vmem:[%s7 + $0x3c] sm:$0xf]
        %v2546 = vld [vmem:[%s8] sm:$0x1]
        %v2548 = vperm.slane %v2546, 0
        %v2566 = vunpack.c.l.b16 %v2530
        %v2567 = vunpack.c.l.b16 %v2531
        %v2568 = vunpack.c.l.b16 %v2532
        %v2569 = vunpack.c.l.b16 %v2533
        %v2570 = vunpack.c.l.b16 %v2534
        %v2571 = vunpack.c.l.b16 %v2535
        %v2572 = vunpack.c.l.b16 %v2536
        %v2573 = vunpack.c.l.b16 %v2537
        %v2574 = vunpack.c.l.b16 %v2538
        %v2575 = vunpack.c.l.b16 %v2539
        %v2576 = vunpack.c.l.b16 %v2540
        %v2577 = vunpack.c.l.b16 %v2541
        %v2578 = vunpack.c.l.b16 %v2542
        %v2579 = vunpack.c.l.b16 %v2543
        %v2580 = vunpack.c.l.b16 %v2544
        %v2581 = vunpack.c.l.b16 %v2545
        %v2582 = vpack.c.b16 %v2567, %v2566
        %v2583 = vpack.c.b16 %v2569, %v2568
        %v2584 = vpack.c.b16 %v2571, %v2570
        %v2585 = vpack.c.b16 %v2573, %v2572
        %v2586 = vpack.c.b16 %v2575, %v2574
        %v2587 = vpack.c.b16 %v2577, %v2576
        %v2588 = vpack.c.b16 %v2579, %v2578
        %v2589 = vpack.c.b16 %v2581, %v2580
        %2598 = vmatpush.bf16.msra.mxu0 %v2589
        %2599 = vmatpush.bf16.msra.mxu0 %v2588
        %2600 = vmatpush.bf16.msra.mxu0 %v2587
        %2601 = vmatpush.bf16.msra.mxu0 %v2586
        %2602 = vmatpush.bf16.msra.mxu0 %v2585
        %2603 = vmatpush.bf16.msra.mxu0 %v2584
        %2604 = vmatpush.bf16.msra.mxu0 %v2583
        %2605 = vmatpush.bf16.msra.mxu0 %v2582
        %2606 = vmatmul.bf16.gmra.mxu0 %v2514
        %v2607 = vpop.f32.mrf.mxu0
        %v2608 = vadd.f32 %v2548, %v2607
        %v2609 = vpop.f32.mrf.mxu0
        %v2610 = vadd.f32 %v2548, %v2609
        %2611 = vmatmul.bf16.gmra.mxu0 %v2515
        %v2612 = vpop.f32.mrf.mxu0
        %v2613 = vadd.f32 %v2548, %v2612
        %v2614 = vpop.f32.mrf.mxu0
        %v2615 = vadd.f32 %v2548, %v2614
        %2616 = vmatmul.bf16.gmra.mxu0 %v2516
        %v2617 = vpop.f32.mrf.mxu0
        %v2618 = vadd.f32 %v2548, %v2617
        %v2619 = vpop.f32.mrf.mxu0
        %v2620 = vadd.f32 %v2548, %v2619
        %2621 = vmatmul.bf16.gmra.mxu0 %v2517
        %v2622 = vpop.f32.mrf.mxu0
        %v2623 = vadd.f32 %v2548, %v2622
        %v2624 = vpop.f32.mrf.mxu0
        %v2625 = vadd.f32 %v2548, %v2624
        %2626 = vmatmul.bf16.gmra.mxu0 %v2518
        %v2627 = vpop.f32.mrf.mxu0
        %v2628 = vadd.f32 %v2548, %v2627
        %v2629 = vpop.f32.mrf.mxu0
        %v2630 = vadd.f32 %v2548, %v2629
        %2631 = vmatmul.bf16.gmra.mxu0 %v2519
        %v2632 = vpop.f32.mrf.mxu0
        %v2633 = vadd.f32 %v2548, %v2632
        %v2634 = vpop.f32.mrf.mxu0
        %v2635 = vadd.f32 %v2548, %v2634
        %2636 = vmatmul.bf16.gmra.mxu0 %v2520
        %v2637 = vpop.f32.mrf.mxu0
        %v2638 = vadd.f32 %v2548, %v2637
        %v2639 = vpop.f32.mrf.mxu0
        %v2640 = vadd.f32 %v2548, %v2639
        %2641 = vmatmul.bf16.gmra.mxu0 %v2521
        %v2642 = vpop.f32.mrf.mxu0
        %v2643 = vadd.f32 %v2548, %v2642
        %v2644 = vpop.f32.mrf.mxu0
        %v2645 = vadd.f32 %v2548, %v2644
        %2646 = vmatmul.bf16.gmra.mxu0 %v2522
        %v2647 = vpop.f32.mrf.mxu0
        %v2648 = vadd.f32 %v2548, %v2647
        %v2649 = vpop.f32.mrf.mxu0
        %v2650 = vadd.f32 %v2548, %v2649
        %2651 = vmatmul.bf16.gmra.mxu0 %v2523
        %v2652 = vpop.f32.mrf.mxu0
        %v2653 = vadd.f32 %v2548, %v2652
        %v2654 = vpop.f32.mrf.mxu0
        %v2655 = vadd.f32 %v2548, %v2654
        %2656 = vmatmul.bf16.gmra.mxu0 %v2524
        %v2657 = vpop.f32.mrf.mxu0
        %v2658 = vadd.f32 %v2548, %v2657
        %v2659 = vpop.f32.mrf.mxu0
        %v2660 = vadd.f32 %v2548, %v2659
        %2661 = vmatmul.bf16.gmra.mxu0 %v2525
        %v2662 = vpop.f32.mrf.mxu0
        %v2663 = vadd.f32 %v2548, %v2662
        %v2664 = vpop.f32.mrf.mxu0
        %v2665 = vadd.f32 %v2548, %v2664
        %2666 = vmatmul.bf16.gmra.mxu0 %v2526
        %v2667 = vpop.f32.mrf.mxu0
        %v2668 = vadd.f32 %v2548, %v2667
        %v2669 = vpop.f32.mrf.mxu0
        %v2670 = vadd.f32 %v2548, %v2669
        %2671 = vmatmul.bf16.gmra.mxu0 %v2527
        %v2672 = vpop.f32.mrf.mxu0
        %v2673 = vadd.f32 %v2548, %v2672
        %v2674 = vpop.f32.mrf.mxu0
        %v2675 = vadd.f32 %v2548, %v2674
        %2676 = vmatmul.bf16.gmra.mxu0 %v2528
        %v2677 = vpop.f32.mrf.mxu0
        %v2678 = vadd.f32 %v2548, %v2677
        %v2679 = vpop.f32.mrf.mxu0
        %v2680 = vadd.f32 %v2548, %v2679
        %2681 = vmatmul.bf16.gmra.mxu0 %v2529
        %v2682 = vpop.f32.mrf.mxu0
        %v2683 = vadd.f32 %v2548, %v2682
        %v2684 = vpop.f32.mrf.mxu0
        %v2685 = vadd.f32 %v2548, %v2684
        %2686 = vdwg.mxu0
        %vm2687 = vcmp.ge.f32.partialorder %v2608, 0.0
        %vm2688 = vcmp.ge.f32.partialorder %v2610, 0.0
        %vm2689 = vcmp.ge.f32.partialorder %v2613, 0.0
        %vm2690 = vcmp.ge.f32.partialorder %v2615, 0.0
        %vm2691 = vcmp.ge.f32.partialorder %v2618, 0.0
        %vm2692 = vcmp.ge.f32.partialorder %v2620, 0.0
        %vm2693 = vcmp.ge.f32.partialorder %v2623, 0.0
        %vm2694 = vcmp.ge.f32.partialorder %v2625, 0.0
        %vm2695 = vcmp.ge.f32.partialorder %v2628, 0.0
        %vm2696 = vcmp.ge.f32.partialorder %v2630, 0.0
        %vm2697 = vcmp.ge.f32.partialorder %v2633, 0.0
        %vm2698 = vcmp.ge.f32.partialorder %v2635, 0.0
        %vm2699 = vcmp.ge.f32.partialorder %v2638, 0.0
        %vm2700 = vcmp.ge.f32.partialorder %v2640, 0.0
        %vm2701 = vcmp.ge.f32.partialorder %v2643, 0.0
        %vm2702 = vcmp.ge.f32.partialorder %v2645, 0.0
        %vm2703 = vcmp.ge.f32.partialorder %v2648, 0.0
        %vm2704 = vcmp.ge.f32.partialorder %v2650, 0.0
        %vm2705 = vcmp.ge.f32.partialorder %v2653, 0.0
        %vm2706 = vcmp.ge.f32.partialorder %v2655, 0.0
        %vm2707 = vcmp.ge.f32.partialorder %v2658, 0.0
        %vm2708 = vcmp.ge.f32.partialorder %v2660, 0.0
        %vm2709 = vcmp.ge.f32.partialorder %v2663, 0.0
        %vm2710 = vcmp.ge.f32.partialorder %v2665, 0.0
        %vm2711 = vcmp.ge.f32.partialorder %v2668, 0.0
        %vm2712 = vcmp.ge.f32.partialorder %v2670, 0.0
        %vm2713 = vcmp.ge.f32.partialorder %v2673, 0.0
        %vm2714 = vcmp.ge.f32.partialorder %v2675, 0.0
        %vm2715 = vcmp.ge.f32.partialorder %v2678, 0.0
        %vm2716 = vcmp.ge.f32.partialorder %v2680, 0.0
        %vm2717 = vcmp.ge.f32.partialorder %v2683, 0.0
        %vm2718 = vcmp.ge.f32.partialorder %v2685, 0.0
        %v2719 = vmul.f32 %v2608, 0.01
        %v2720 = vmul.f32 %v2610, 0.01
        %v2721 = vmul.f32 %v2613, 0.01
        %v2722 = vmul.f32 %v2615, 0.01
        %v2723 = vmul.f32 %v2618, 0.01
        %v2724 = vmul.f32 %v2620, 0.01
        %v2725 = vmul.f32 %v2623, 0.01
        %v2726 = vmul.f32 %v2625, 0.01
        %v2727 = vmul.f32 %v2628, 0.01
        %v2728 = vmul.f32 %v2630, 0.01
        %v2729 = vmul.f32 %v2633, 0.01
        %v2730 = vmul.f32 %v2635, 0.01
        %v2731 = vmul.f32 %v2638, 0.01
        %v2732 = vmul.f32 %v2640, 0.01
        %v2733 = vmul.f32 %v2643, 0.01
        %v2734 = vmul.f32 %v2645, 0.01
        %v2735 = vmul.f32 %v2648, 0.01
        %v2736 = vmul.f32 %v2650, 0.01
        %v2737 = vmul.f32 %v2653, 0.01
        %v2738 = vmul.f32 %v2655, 0.01
        %v2739 = vmul.f32 %v2658, 0.01
        %v2740 = vmul.f32 %v2660, 0.01
        %v2741 = vmul.f32 %v2663, 0.01
        %v2742 = vmul.f32 %v2665, 0.01
        %v2743 = vmul.f32 %v2668, 0.01
        %v2744 = vmul.f32 %v2670, 0.01
        %v2745 = vmul.f32 %v2673, 0.01
        %v2746 = vmul.f32 %v2675, 0.01
        %v2747 = vmul.f32 %v2678, 0.01
        %v2748 = vmul.f32 %v2680, 0.01
        %v2749 = vmul.f32 %v2683, 0.01
        %v2750 = vmul.f32 %v2685, 0.01
        %v2751 = vsel %vm2687, %v2608, %v2719
        %v2752 = vsel %vm2688, %v2610, %v2720
        %v2753 = vsel %vm2689, %v2613, %v2721
        %v2754 = vsel %vm2690, %v2615, %v2722
        %v2755 = vsel %vm2691, %v2618, %v2723
        %v2756 = vsel %vm2692, %v2620, %v2724
        %v2757 = vsel %vm2693, %v2623, %v2725
        %v2758 = vsel %vm2694, %v2625, %v2726
        %v2759 = vsel %vm2695, %v2628, %v2727
        %v2760 = vsel %vm2696, %v2630, %v2728
        %v2761 = vsel %vm2697, %v2633, %v2729
        %v2762 = vsel %vm2698, %v2635, %v2730
        %v2763 = vsel %vm2699, %v2638, %v2731
        %v2764 = vsel %vm2700, %v2640, %v2732
        %v2765 = vsel %vm2701, %v2643, %v2733
        %v2766 = vsel %vm2702, %v2645, %v2734
        %v2767 = vsel %vm2703, %v2648, %v2735
        %v2768 = vsel %vm2704, %v2650, %v2736
        %v2769 = vsel %vm2705, %v2653, %v2737
        %v2770 = vsel %vm2706, %v2655, %v2738
        %v2771 = vsel %vm2707, %v2658, %v2739
        %v2772 = vsel %vm2708, %v2660, %v2740
        %v2773 = vsel %vm2709, %v2663, %v2741
        %v2774 = vsel %vm2710, %v2665, %v2742
        %v2775 = vsel %vm2711, %v2668, %v2743
        %v2776 = vsel %vm2712, %v2670, %v2744
        %v2777 = vsel %vm2713, %v2673, %v2745
        %v2778 = vsel %vm2714, %v2675, %v2746
        %v2779 = vsel %vm2715, %v2678, %v2747
        %v2780 = vsel %vm2716, %v2680, %v2748
        %v2781 = vsel %vm2717, %v2683, %v2749
        %v2782 = vsel %vm2718, %v2685, %v2750
        %v2783 = vpack.c.bf16 %v2751, %v2751
        %v2784 = vpack.c.bf16 %v2752, %v2752
        %v2785 = vpack.c.bf16 %v2753, %v2753
        %v2786 = vpack.c.bf16 %v2754, %v2754
        %v2787 = vpack.c.bf16 %v2755, %v2755
        %v2788 = vpack.c.bf16 %v2756, %v2756
        %v2789 = vpack.c.bf16 %v2757, %v2757
        %v2790 = vpack.c.bf16 %v2758, %v2758
        %v2791 = vpack.c.bf16 %v2759, %v2759
        %v2792 = vpack.c.bf16 %v2760, %v2760
        %v2793 = vpack.c.bf16 %v2761, %v2761
        %v2794 = vpack.c.bf16 %v2762, %v2762
        %v2795 = vpack.c.bf16 %v2763, %v2763
        %v2796 = vpack.c.bf16 %v2764, %v2764
        %v2797 = vpack.c.bf16 %v2765, %v2765
        %v2798 = vpack.c.bf16 %v2766, %v2766
        %v2799 = vpack.c.bf16 %v2767, %v2767
        %v2800 = vpack.c.bf16 %v2768, %v2768
        %v2801 = vpack.c.bf16 %v2769, %v2769
        %v2802 = vpack.c.bf16 %v2770, %v2770
        %v2803 = vpack.c.bf16 %v2771, %v2771
        %v2804 = vpack.c.bf16 %v2772, %v2772
        %v2805 = vpack.c.bf16 %v2773, %v2773
        %v2806 = vpack.c.bf16 %v2774, %v2774
        %v2807 = vpack.c.bf16 %v2775, %v2775
        %v2808 = vpack.c.bf16 %v2776, %v2776
        %v2809 = vpack.c.bf16 %v2777, %v2777
        %v2810 = vpack.c.bf16 %v2778, %v2778
        %v2811 = vpack.c.bf16 %v2779, %v2779
        %v2812 = vpack.c.bf16 %v2780, %v2780
        %v2813 = vpack.c.bf16 %v2781, %v2781
        %v2814 = vpack.c.bf16 %v2782, %v2782
        %v2815 = vld [vmem:[%s9] sm:$0xf]
        %v2816 = vld [vmem:[%s9 + $0x4] sm:$0xf]
        %v2817 = vld [vmem:[%s9 + $0x8] sm:$0xf]
        %v2818 = vld [vmem:[%s9 + $0xc] sm:$0xf]
        %v2823 = vunpack.c.l.b16 %v2815
        %v2824 = vunpack.c.l.b16 %v2816
        %v2825 = vunpack.c.l.b16 %v2817
        %v2826 = vunpack.c.l.b16 %v2818
        %v2827 = vpack.c.b16 %v2824, %v2823
        %v2828 = vpack.c.b16 %v2826, %v2825
        %v2831 = vunpack.c.l.b16 %v2783
        %v2832 = vunpack.c.l.b16 %v2784
        %v2833 = vpack.c.b16 %v2832, %v2831
        %vm2835 = vcmask 130048
        %v2837 = vsel %vm2835, %v2827, 0
        %v2840 = vsel %vm2835, %v2828, 0
        %2842 = vmatpush.bf16.msra.mxu0 0
        %2843 = vmatpush.bf16.msra.mxu0 0
        %2844 = vmatpush.bf16.msra.mxu0 0
        %2845 = vmatpush.bf16.msra.mxu0 0
        %2846 = vmatpush.bf16.msra.mxu0 0
        %2847 = vmatpush.bf16.msra.mxu0 0
        %2848 = vmatpush.bf16.msra.mxu0 0
        %2849 = vmatpush.bf16.msra.mxu0 %v2833
        %2850 = vmatmul.bf16.gmra.mxu0 %v2837
        %v2851 = vpop.f32.mrf.mxu0
        %v2852 = vadd.f32 0.0, %v2851
        %v2853 = vpop.f32.mrf.mxu0
        %v2854 = vadd.f32 0.0, %v2853
        %2855 = vmatmul.bf16.gmra.mxu0 %v2840
        %v2856 = vpop.f32.mrf.mxu0
        %v2857 = vadd.f32 0.0, %v2856
        %v2858 = vpop.f32.mrf.mxu0
        %v2859 = vadd.f32 0.0, %v2858
        %2860 = vdwg.mxu0
        %v2863 = vunpack.c.l.b16 %v2785
        %v2864 = vunpack.c.l.b16 %v2786
        %v2865 = vpack.c.b16 %v2864, %v2863
        %2867 = vmatpush.bf16.msra.mxu0 0
        %2868 = vmatpush.bf16.msra.mxu0 0
        %2869 = vmatpush.bf16.msra.mxu0 0
        %2870 = vmatpush.bf16.msra.mxu0 0
        %2871 = vmatpush.bf16.msra.mxu0 0
        %2872 = vmatpush.bf16.msra.mxu0 0
        %2873 = vmatpush.bf16.msra.mxu0 0
        %2874 = vmatpush.bf16.msra.mxu0 %v2865
        %2875 = vmatmul.bf16.gmra.mxu0 %v2837
        %v2876 = vpop.f32.mrf.mxu0
        %v2877 = vadd.f32 0.0, %v2876
        %v2878 = vpop.f32.mrf.mxu0
        %v2879 = vadd.f32 0.0, %v2878
        %2880 = vmatmul.bf16.gmra.mxu0 %v2840
        %v2881 = vpop.f32.mrf.mxu0
        %v2882 = vadd.f32 0.0, %v2881
        %v2883 = vpop.f32.mrf.mxu0
        %v2884 = vadd.f32 0.0, %v2883
        %2885 = vdwg.mxu0
        %v2888 = vunpack.c.l.b16 %v2787
        %v2889 = vunpack.c.l.b16 %v2788
        %v2890 = vpack.c.b16 %v2889, %v2888
        %2892 = vmatpush.bf16.msra.mxu0 0
        %2893 = vmatpush.bf16.msra.mxu0 0
        %2894 = vmatpush.bf16.msra.mxu0 0
        %2895 = vmatpush.bf16.msra.mxu0 0
        %2896 = vmatpush.bf16.msra.mxu0 0
        %2897 = vmatpush.bf16.msra.mxu0 0
        %2898 = vmatpush.bf16.msra.mxu0 0
        %2899 = vmatpush.bf16.msra.mxu0 %v2890
        %2900 = vmatmul.bf16.gmra.mxu0 %v2837
        %v2901 = vpop.f32.mrf.mxu0
        %v2902 = vadd.f32 0.0, %v2901
        %v2903 = vpop.f32.mrf.mxu0
        %v2904 = vadd.f32 0.0, %v2903
        %2905 = vmatmul.bf16.gmra.mxu0 %v2840
        %v2906 = vpop.f32.mrf.mxu0
        %v2907 = vadd.f32 0.0, %v2906
        %v2908 = vpop.f32.mrf.mxu0
        %v2909 = vadd.f32 0.0, %v2908
        %2910 = vdwg.mxu0
        %v2913 = vunpack.c.l.b16 %v2789
        %v2914 = vunpack.c.l.b16 %v2790
        %v2915 = vpack.c.b16 %v2914, %v2913
        %2917 = vmatpush.bf16.msra.mxu0 0
        %2918 = vmatpush.bf16.msra.mxu0 0
        %2919 = vmatpush.bf16.msra.mxu0 0
        %2920 = vmatpush.bf16.msra.mxu0 0
        %2921 = vmatpush.bf16.msra.mxu0 0
        %2922 = vmatpush.bf16.msra.mxu0 0
        %2923 = vmatpush.bf16.msra.mxu0 0
        %2924 = vmatpush.bf16.msra.mxu0 %v2915
        %2925 = vmatmul.bf16.gmra.mxu0 %v2837
        %v2926 = vpop.f32.mrf.mxu0
        %v2927 = vadd.f32 0.0, %v2926
        %v2928 = vpop.f32.mrf.mxu0
        %v2929 = vadd.f32 0.0, %v2928
        %2930 = vmatmul.bf16.gmra.mxu0 %v2840
        %v2931 = vpop.f32.mrf.mxu0
        %v2932 = vadd.f32 0.0, %v2931
        %v2933 = vpop.f32.mrf.mxu0
        %v2934 = vadd.f32 0.0, %v2933
        %2935 = vdwg.mxu0
        %v2938 = vunpack.c.l.b16 %v2791
        %v2939 = vunpack.c.l.b16 %v2792
        %v2940 = vpack.c.b16 %v2939, %v2938
        %2942 = vmatpush.bf16.msra.mxu0 0
        %2943 = vmatpush.bf16.msra.mxu0 0
        %2944 = vmatpush.bf16.msra.mxu0 0
        %2945 = vmatpush.bf16.msra.mxu0 0
        %2946 = vmatpush.bf16.msra.mxu0 0
        %2947 = vmatpush.bf16.msra.mxu0 0
        %2948 = vmatpush.bf16.msra.mxu0 0
        %2949 = vmatpush.bf16.msra.mxu0 %v2940
        %2950 = vmatmul.bf16.gmra.mxu0 %v2837
        %v2951 = vpop.f32.mrf.mxu0
        %v2952 = vadd.f32 0.0, %v2951
        %v2953 = vpop.f32.mrf.mxu0
        %v2954 = vadd.f32 0.0, %v2953
        %2955 = vmatmul.bf16.gmra.mxu0 %v2840
        %v2956 = vpop.f32.mrf.mxu0
        %v2957 = vadd.f32 0.0, %v2956
        %v2958 = vpop.f32.mrf.mxu0
        %v2959 = vadd.f32 0.0, %v2958
        %2960 = vdwg.mxu0
        %v2963 = vunpack.c.l.b16 %v2793
        %v2964 = vunpack.c.l.b16 %v2794
        %v2965 = vpack.c.b16 %v2964, %v2963
        %2967 = vmatpush.bf16.msra.mxu0 0
        %2968 = vmatpush.bf16.msra.mxu0 0
        %2969 = vmatpush.bf16.msra.mxu0 0
        %2970 = vmatpush.bf16.msra.mxu0 0
        %2971 = vmatpush.bf16.msra.mxu0 0
        %2972 = vmatpush.bf16.msra.mxu0 0
        %2973 = vmatpush.bf16.msra.mxu0 0
        %2974 = vmatpush.bf16.msra.mxu0 %v2965
        %2975 = vmatmul.bf16.gmra.mxu0 %v2837
        %v2976 = vpop.f32.mrf.mxu0
        %v2977 = vadd.f32 0.0, %v2976
        %v2978 = vpop.f32.mrf.mxu0
        %v2979 = vadd.f32 0.0, %v2978
        %2980 = vmatmul.bf16.gmra.mxu0 %v2840
        %v2981 = vpop.f32.mrf.mxu0
        %v2982 = vadd.f32 0.0, %v2981
        %v2983 = vpop.f32.mrf.mxu0
        %v2984 = vadd.f32 0.0, %v2983
        %2985 = vdwg.mxu0
        %v2988 = vunpack.c.l.b16 %v2795
        %v2989 = vunpack.c.l.b16 %v2796
        %v2990 = vpack.c.b16 %v2989, %v2988
        %2992 = vmatpush.bf16.msra.mxu0 0
        %2993 = vmatpush.bf16.msra.mxu0 0
        %2994 = vmatpush.bf16.msra.mxu0 0
        %2995 = vmatpush.bf16.msra.mxu0 0
        %2996 = vmatpush.bf16.msra.mxu0 0
        %2997 = vmatpush.bf16.msra.mxu0 0
        %2998 = vmatpush.bf16.msra.mxu0 0
        %2999 = vmatpush.bf16.msra.mxu0 %v2990
        %3000 = vmatmul.bf16.gmra.mxu0 %v2837
        %v3001 = vpop.f32.mrf.mxu0
        %v3002 = vadd.f32 0.0, %v3001
        %v3003 = vpop.f32.mrf.mxu0
        %v3004 = vadd.f32 0.0, %v3003
        %3005 = vmatmul.bf16.gmra.mxu0 %v2840
        %v3006 = vpop.f32.mrf.mxu0
        %v3007 = vadd.f32 0.0, %v3006
        %v3008 = vpop.f32.mrf.mxu0
        %v3009 = vadd.f32 0.0, %v3008
        %3010 = vdwg.mxu0
        %v3013 = vunpack.c.l.b16 %v2797
        %v3014 = vunpack.c.l.b16 %v2798
        %v3015 = vpack.c.b16 %v3014, %v3013
        %3017 = vmatpush.bf16.msra.mxu0 0
        %3018 = vmatpush.bf16.msra.mxu0 0
        %3019 = vmatpush.bf16.msra.mxu0 0
        %3020 = vmatpush.bf16.msra.mxu0 0
        %3021 = vmatpush.bf16.msra.mxu0 0
        %3022 = vmatpush.bf16.msra.mxu0 0
        %3023 = vmatpush.bf16.msra.mxu0 0
        %3024 = vmatpush.bf16.msra.mxu0 %v3015
        %3025 = vmatmul.bf16.gmra.mxu0 %v2837
        %v3026 = vpop.f32.mrf.mxu0
        %v3027 = vadd.f32 0.0, %v3026
        %v3028 = vpop.f32.mrf.mxu0
        %v3029 = vadd.f32 0.0, %v3028
        %3030 = vmatmul.bf16.gmra.mxu0 %v2840
        %v3031 = vpop.f32.mrf.mxu0
        %v3032 = vadd.f32 0.0, %v3031
        %v3033 = vpop.f32.mrf.mxu0
        %v3034 = vadd.f32 0.0, %v3033
        %3035 = vdwg.mxu0
        %v3038 = vunpack.c.l.b16 %v2799
        %v3039 = vunpack.c.l.b16 %v2800
        %v3040 = vpack.c.b16 %v3039, %v3038
        %3042 = vmatpush.bf16.msra.mxu0 0
        %3043 = vmatpush.bf16.msra.mxu0 0
        %3044 = vmatpush.bf16.msra.mxu0 0
        %3045 = vmatpush.bf16.msra.mxu0 0
        %3046 = vmatpush.bf16.msra.mxu0 0
        %3047 = vmatpush.bf16.msra.mxu0 0
        %3048 = vmatpush.bf16.msra.mxu0 0
        %3049 = vmatpush.bf16.msra.mxu0 %v3040
        %3050 = vmatmul.bf16.gmra.mxu0 %v2837
        %v3051 = vpop.f32.mrf.mxu0
        %v3052 = vadd.f32 0.0, %v3051
        %v3053 = vpop.f32.mrf.mxu0
        %v3054 = vadd.f32 0.0, %v3053
        %3055 = vmatmul.bf16.gmra.mxu0 %v2840
        %v3056 = vpop.f32.mrf.mxu0
        %v3057 = vadd.f32 0.0, %v3056
        %v3058 = vpop.f32.mrf.mxu0
        %v3059 = vadd.f32 0.0, %v3058
        %3060 = vdwg.mxu0
        %v3063 = vunpack.c.l.b16 %v2801
        %v3064 = vunpack.c.l.b16 %v2802
        %v3065 = vpack.c.b16 %v3064, %v3063
        %3067 = vmatpush.bf16.msra.mxu0 0
        %3068 = vmatpush.bf16.msra.mxu0 0
        %3069 = vmatpush.bf16.msra.mxu0 0
        %3070 = vmatpush.bf16.msra.mxu0 0
        %3071 = vmatpush.bf16.msra.mxu0 0
        %3072 = vmatpush.bf16.msra.mxu0 0
        %3073 = vmatpush.bf16.msra.mxu0 0
        %3074 = vmatpush.bf16.msra.mxu0 %v3065
        %3075 = vmatmul.bf16.gmra.mxu0 %v2837
        %v3076 = vpop.f32.mrf.mxu0
        %v3077 = vadd.f32 0.0, %v3076
        %v3078 = vpop.f32.mrf.mxu0
        %v3079 = vadd.f32 0.0, %v3078
        %3080 = vmatmul.bf16.gmra.mxu0 %v2840
        %v3081 = vpop.f32.mrf.mxu0
        %v3082 = vadd.f32 0.0, %v3081
        %v3083 = vpop.f32.mrf.mxu0
        %v3084 = vadd.f32 0.0, %v3083
        %3085 = vdwg.mxu0
        %v3088 = vunpack.c.l.b16 %v2803
        %v3089 = vunpack.c.l.b16 %v2804
        %v3090 = vpack.c.b16 %v3089, %v3088
        %3092 = vmatpush.bf16.msra.mxu0 0
        %3093 = vmatpush.bf16.msra.mxu0 0
        %3094 = vmatpush.bf16.msra.mxu0 0
        %3095 = vmatpush.bf16.msra.mxu0 0
        %3096 = vmatpush.bf16.msra.mxu0 0
        %3097 = vmatpush.bf16.msra.mxu0 0
        %3098 = vmatpush.bf16.msra.mxu0 0
        %3099 = vmatpush.bf16.msra.mxu0 %v3090
        %3100 = vmatmul.bf16.gmra.mxu0 %v2837
        %v3101 = vpop.f32.mrf.mxu0
        %v3102 = vadd.f32 0.0, %v3101
        %v3103 = vpop.f32.mrf.mxu0
        %v3104 = vadd.f32 0.0, %v3103
        %3105 = vmatmul.bf16.gmra.mxu0 %v2840
        %v3106 = vpop.f32.mrf.mxu0
        %v3107 = vadd.f32 0.0, %v3106
        %v3108 = vpop.f32.mrf.mxu0
        %v3109 = vadd.f32 0.0, %v3108
        %3110 = vdwg.mxu0
        %v3113 = vunpack.c.l.b16 %v2805
        %v3114 = vunpack.c.l.b16 %v2806
        %v3115 = vpack.c.b16 %v3114, %v3113
        %3117 = vmatpush.bf16.msra.mxu0 0
        %3118 = vmatpush.bf16.msra.mxu0 0
        %3119 = vmatpush.bf16.msra.mxu0 0
        %3120 = vmatpush.bf16.msra.mxu0 0
        %3121 = vmatpush.bf16.msra.mxu0 0
        %3122 = vmatpush.bf16.msra.mxu0 0
        %3123 = vmatpush.bf16.msra.mxu0 0
        %3124 = vmatpush.bf16.msra.mxu0 %v3115
        %3125 = vmatmul.bf16.gmra.mxu0 %v2837
        %v3126 = vpop.f32.mrf.mxu0
        %v3127 = vadd.f32 0.0, %v3126
        %v3128 = vpop.f32.mrf.mxu0
        %v3129 = vadd.f32 0.0, %v3128
        %3130 = vmatmul.bf16.gmra.mxu0 %v2840
        %v3131 = vpop.f32.mrf.mxu0
        %v3132 = vadd.f32 0.0, %v3131
        %v3133 = vpop.f32.mrf.mxu0
        %v3134 = vadd.f32 0.0, %v3133
        %3135 = vdwg.mxu0
        %v3138 = vunpack.c.l.b16 %v2807
        %v3139 = vunpack.c.l.b16 %v2808
        %v3140 = vpack.c.b16 %v3139, %v3138
        %3142 = vmatpush.bf16.msra.mxu0 0
        %3143 = vmatpush.bf16.msra.mxu0 0
        %3144 = vmatpush.bf16.msra.mxu0 0
        %3145 = vmatpush.bf16.msra.mxu0 0
        %3146 = vmatpush.bf16.msra.mxu0 0
        %3147 = vmatpush.bf16.msra.mxu0 0
        %3148 = vmatpush.bf16.msra.mxu0 0
        %3149 = vmatpush.bf16.msra.mxu0 %v3140
        %3150 = vmatmul.bf16.gmra.mxu0 %v2837
        %v3151 = vpop.f32.mrf.mxu0
        %v3152 = vadd.f32 0.0, %v3151
        %v3153 = vpop.f32.mrf.mxu0
        %v3154 = vadd.f32 0.0, %v3153
        %3155 = vmatmul.bf16.gmra.mxu0 %v2840
        %v3156 = vpop.f32.mrf.mxu0
        %v3157 = vadd.f32 0.0, %v3156
        %v3158 = vpop.f32.mrf.mxu0
        %v3159 = vadd.f32 0.0, %v3158
        %3160 = vdwg.mxu0
        %v3163 = vunpack.c.l.b16 %v2809
        %v3164 = vunpack.c.l.b16 %v2810
        %v3165 = vpack.c.b16 %v3164, %v3163
        %3167 = vmatpush.bf16.msra.mxu0 0
        %3168 = vmatpush.bf16.msra.mxu0 0
        %3169 = vmatpush.bf16.msra.mxu0 0
        %3170 = vmatpush.bf16.msra.mxu0 0
        %3171 = vmatpush.bf16.msra.mxu0 0
        %3172 = vmatpush.bf16.msra.mxu0 0
        %3173 = vmatpush.bf16.msra.mxu0 0
        %3174 = vmatpush.bf16.msra.mxu0 %v3165
        %3175 = vmatmul.bf16.gmra.mxu0 %v2837
        %v3176 = vpop.f32.mrf.mxu0
        %v3177 = vadd.f32 0.0, %v3176
        %v3178 = vpop.f32.mrf.mxu0
        %v3179 = vadd.f32 0.0, %v3178
        %3180 = vmatmul.bf16.gmra.mxu0 %v2840
        %v3181 = vpop.f32.mrf.mxu0
        %v3182 = vadd.f32 0.0, %v3181
        %v3183 = vpop.f32.mrf.mxu0
        %v3184 = vadd.f32 0.0, %v3183
        %3185 = vdwg.mxu0
        %v3188 = vunpack.c.l.b16 %v2811
        %v3189 = vunpack.c.l.b16 %v2812
        %v3190 = vpack.c.b16 %v3189, %v3188
        %3192 = vmatpush.bf16.msra.mxu0 0
        %3193 = vmatpush.bf16.msra.mxu0 0
        %3194 = vmatpush.bf16.msra.mxu0 0
        %3195 = vmatpush.bf16.msra.mxu0 0
        %3196 = vmatpush.bf16.msra.mxu0 0
        %3197 = vmatpush.bf16.msra.mxu0 0
        %3198 = vmatpush.bf16.msra.mxu0 0
        %3199 = vmatpush.bf16.msra.mxu0 %v3190
        %3200 = vmatmul.bf16.gmra.mxu0 %v2837
        %v3201 = vpop.f32.mrf.mxu0
        %v3202 = vadd.f32 0.0, %v3201
        %v3203 = vpop.f32.mrf.mxu0
        %v3204 = vadd.f32 0.0, %v3203
        %3205 = vmatmul.bf16.gmra.mxu0 %v2840
        %v3206 = vpop.f32.mrf.mxu0
        %v3207 = vadd.f32 0.0, %v3206
        %v3208 = vpop.f32.mrf.mxu0
        %v3209 = vadd.f32 0.0, %v3208
        %3210 = vdwg.mxu0
        %v3213 = vunpack.c.l.b16 %v2813
        %v3214 = vunpack.c.l.b16 %v2814
        %v3215 = vpack.c.b16 %v3214, %v3213
        %3217 = vmatpush.bf16.msra.mxu0 0
        %3218 = vmatpush.bf16.msra.mxu0 0
        %3219 = vmatpush.bf16.msra.mxu0 0
        %3220 = vmatpush.bf16.msra.mxu0 0
        %3221 = vmatpush.bf16.msra.mxu0 0
        %3222 = vmatpush.bf16.msra.mxu0 0
        %3223 = vmatpush.bf16.msra.mxu0 0
        %3224 = vmatpush.bf16.msra.mxu0 %v3215
        %3225 = vmatmul.bf16.gmra.mxu0 %v2837
        %v3226 = vpop.f32.mrf.mxu0
        %v3227 = vadd.f32 0.0, %v3226
        %v3228 = vpop.f32.mrf.mxu0
        %v3229 = vadd.f32 0.0, %v3228
        %3230 = vmatmul.bf16.gmra.mxu0 %v2840
        %v3231 = vpop.f32.mrf.mxu0
        %v3232 = vadd.f32 0.0, %v3231
        %v3233 = vpop.f32.mrf.mxu0
        %v3234 = vadd.f32 0.0, %v3233
        %3235 = vdwg.mxu0
        %v3236 = vmul.f32 %v2852, 0.75
        %v3237 = vmul.f32 %v2854, 0.75
        %v3238 = vmul.f32 %v2857, 0.75
        %v3239 = vmul.f32 %v2859, 0.75
        %v3240 = vmul.f32 %v2877, 0.75
        %v3241 = vmul.f32 %v2879, 0.75
        %v3242 = vmul.f32 %v2882, 0.75
        %v3243 = vmul.f32 %v2884, 0.75
        %v3244 = vmul.f32 %v2902, 0.75
        %v3245 = vmul.f32 %v2904, 0.75
        %v3246 = vmul.f32 %v2907, 0.75
        %v3247 = vmul.f32 %v2909, 0.75
        %v3248 = vmul.f32 %v2927, 0.75
        %v3249 = vmul.f32 %v2929, 0.75
        %v3250 = vmul.f32 %v2932, 0.75
        %v3251 = vmul.f32 %v2934, 0.75
        %v3252 = vmul.f32 %v2952, 0.75
        %v3253 = vmul.f32 %v2954, 0.75
        %v3254 = vmul.f32 %v2957, 0.75
        %v3255 = vmul.f32 %v2959, 0.75
        %v3256 = vmul.f32 %v2977, 0.75
        %v3257 = vmul.f32 %v2979, 0.75
        %v3258 = vmul.f32 %v2982, 0.75
        %v3259 = vmul.f32 %v2984, 0.75
        %v3260 = vmul.f32 %v3002, 0.75
        %v3261 = vmul.f32 %v3004, 0.75
        %v3262 = vmul.f32 %v3007, 0.75
        %v3263 = vmul.f32 %v3009, 0.75
        %v3264 = vmul.f32 %v3027, 0.75
        %v3265 = vmul.f32 %v3029, 0.75
        %v3266 = vmul.f32 %v3032, 0.75
        %v3267 = vmul.f32 %v3034, 0.75
        %v3268 = vmul.f32 %v3052, 0.75
        %v3269 = vmul.f32 %v3054, 0.75
        %v3270 = vmul.f32 %v3057, 0.75
        %v3271 = vmul.f32 %v3059, 0.75
        %v3272 = vmul.f32 %v3077, 0.75
        %v3273 = vmul.f32 %v3079, 0.75
        %v3274 = vmul.f32 %v3082, 0.75
        %v3275 = vmul.f32 %v3084, 0.75
        %v3276 = vmul.f32 %v3102, 0.75
        %v3277 = vmul.f32 %v3104, 0.75
        %v3278 = vmul.f32 %v3107, 0.75
        %v3279 = vmul.f32 %v3109, 0.75
        %v3280 = vmul.f32 %v3127, 0.75
        %v3281 = vmul.f32 %v3129, 0.75
        %v3282 = vmul.f32 %v3132, 0.75
        %v3283 = vmul.f32 %v3134, 0.75
        %v3284 = vmul.f32 %v3152, 0.75
        %v3285 = vmul.f32 %v3154, 0.75
        %v3286 = vmul.f32 %v3157, 0.75
        %v3287 = vmul.f32 %v3159, 0.75
        %v3288 = vmul.f32 %v3177, 0.75
        %v3289 = vmul.f32 %v3179, 0.75
        %v3290 = vmul.f32 %v3182, 0.75
        %v3291 = vmul.f32 %v3184, 0.75
        %v3292 = vmul.f32 %v3202, 0.75
        %v3293 = vmul.f32 %v3204, 0.75
        %v3294 = vmul.f32 %v3207, 0.75
        %v3295 = vmul.f32 %v3209, 0.75
        %v3296 = vmul.f32 %v3227, 0.75
        %v3297 = vmul.f32 %v3229, 0.75
        %v3298 = vmul.f32 %v3232, 0.75
        %v3299 = vmul.f32 %v3234, 0.75
        %v3300 = vmul.f32 %v2852, 0.25
        %v3301 = vmul.f32 %v2854, 0.25
        %v3302 = vmul.f32 %v2857, 0.25
        %v3303 = vmul.f32 %v2859, 0.25
        %v3304 = vmul.f32 %v2877, 0.25
        %v3305 = vmul.f32 %v2879, 0.25
        %v3306 = vmul.f32 %v2882, 0.25
        %v3307 = vmul.f32 %v2884, 0.25
        %v3308 = vmul.f32 %v2902, 0.25
        %v3309 = vmul.f32 %v2904, 0.25
        %v3310 = vmul.f32 %v2907, 0.25
        %v3311 = vmul.f32 %v2909, 0.25
        %v3312 = vmul.f32 %v2927, 0.25
        %v3313 = vmul.f32 %v2929, 0.25
        %v3314 = vmul.f32 %v2932, 0.25
        %v3315 = vmul.f32 %v2934, 0.25
        %v3316 = vmul.f32 %v2952, 0.25
        %v3317 = vmul.f32 %v2954, 0.25
        %v3318 = vmul.f32 %v2957, 0.25
        %v3319 = vmul.f32 %v2959, 0.25
        %v3320 = vmul.f32 %v2977, 0.25
        %v3321 = vmul.f32 %v2979, 0.25
        %v3322 = vmul.f32 %v2982, 0.25
        %v3323 = vmul.f32 %v2984, 0.25
        %v3324 = vmul.f32 %v3002, 0.25
        %v3325 = vmul.f32 %v3004, 0.25
        %v3326 = vmul.f32 %v3007, 0.25
        %v3327 = vmul.f32 %v3009, 0.25
        %v3328 = vmul.f32 %v3027, 0.25
        %v3329 = vmul.f32 %v3029, 0.25
        %v3330 = vmul.f32 %v3032, 0.25
        %v3331 = vmul.f32 %v3034, 0.25
        %v3332 = vmul.f32 %v3052, 0.25
        %v3333 = vmul.f32 %v3054, 0.25
        %v3334 = vmul.f32 %v3057, 0.25
        %v3335 = vmul.f32 %v3059, 0.25
        %v3336 = vmul.f32 %v3077, 0.25
        %v3337 = vmul.f32 %v3079, 0.25
        %v3338 = vmul.f32 %v3082, 0.25
        %v3339 = vmul.f32 %v3084, 0.25
        %v3340 = vmul.f32 %v3102, 0.25
        %v3341 = vmul.f32 %v3104, 0.25
        %v3342 = vmul.f32 %v3107, 0.25
        %v3343 = vmul.f32 %v3109, 0.25
        %v3344 = vmul.f32 %v3127, 0.25
        %v3345 = vmul.f32 %v3129, 0.25
        %v3346 = vmul.f32 %v3132, 0.25
        %v3347 = vmul.f32 %v3134, 0.25
        %v3348 = vmul.f32 %v3152, 0.25
        %v3349 = vmul.f32 %v3154, 0.25
        %v3350 = vmul.f32 %v3157, 0.25
        %v3351 = vmul.f32 %v3159, 0.25
        %v3352 = vmul.f32 %v3177, 0.25
        %v3353 = vmul.f32 %v3179, 0.25
        %v3354 = vmul.f32 %v3182, 0.25
        %v3355 = vmul.f32 %v3184, 0.25
        %v3356 = vmul.f32 %v3202, 0.25
        %v3357 = vmul.f32 %v3204, 0.25
        %v3358 = vmul.f32 %v3207, 0.25
        %v3359 = vmul.f32 %v3209, 0.25
        %v3360 = vadd.f32 %v3236, %v3300
        %v3361 = vadd.f32 %v3237, %v3301
        %v3362 = vadd.f32 %v3238, %v3302
        %v3363 = vadd.f32 %v3239, %v3303
        %v3364 = vadd.f32 %v3240, %v3300
        %v3365 = vadd.f32 %v3241, %v3301
        %v3366 = vadd.f32 %v3242, %v3302
        %v3367 = vadd.f32 %v3243, %v3303
        %v3368 = vadd.f32 %v3244, %v3304
        %v3369 = vadd.f32 %v3245, %v3305
        %v3370 = vadd.f32 %v3246, %v3306
        %v3371 = vadd.f32 %v3247, %v3307
        %v3372 = vadd.f32 %v3248, %v3308
        %v3373 = vadd.f32 %v3249, %v3309
        %v3374 = vadd.f32 %v3250, %v3310
        %v3375 = vadd.f32 %v3251, %v3311
        %v3376 = vadd.f32 %v3252, %v3312
        %v3377 = vadd.f32 %v3253, %v3313
        %v3378 = vadd.f32 %v3254, %v3314
        %v3379 = vadd.f32 %v3255, %v3315
        %v3380 = vadd.f32 %v3256, %v3316
        %v3381 = vadd.f32 %v3257, %v3317
        %v3382 = vadd.f32 %v3258, %v3318
        %v3383 = vadd.f32 %v3259, %v3319
        %v3384 = vadd.f32 %v3260, %v3320
        %v3385 = vadd.f32 %v3261, %v3321
        %v3386 = vadd.f32 %v3262, %v3322
        %v3387 = vadd.f32 %v3263, %v3323
        %v3388 = vadd.f32 %v3264, %v3324
        %v3389 = vadd.f32 %v3265, %v3325
        %v3390 = vadd.f32 %v3266, %v3326
        %v3391 = vadd.f32 %v3267, %v3327
        %v3392 = vadd.f32 %v3268, %v3328
        %v3393 = vadd.f32 %v3269, %v3329
        %v3394 = vadd.f32 %v3270, %v3330
        %v3395 = vadd.f32 %v3271, %v3331
        %v3396 = vadd.f32 %v3272, %v3332
        %v3397 = vadd.f32 %v3273, %v3333
        %v3398 = vadd.f32 %v3274, %v3334
        %v3399 = vadd.f32 %v3275, %v3335
        %v3400 = vadd.f32 %v3276, %v3336
        %v3401 = vadd.f32 %v3277, %v3337
        %v3402 = vadd.f32 %v3278, %v3338
        %v3403 = vadd.f32 %v3279, %v3339
        %v3404 = vadd.f32 %v3280, %v3340
        %v3405 = vadd.f32 %v3281, %v3341
        %v3406 = vadd.f32 %v3282, %v3342
        %v3407 = vadd.f32 %v3283, %v3343
        %v3408 = vadd.f32 %v3284, %v3344
        %v3409 = vadd.f32 %v3285, %v3345
        %v3410 = vadd.f32 %v3286, %v3346
        %v3411 = vadd.f32 %v3287, %v3347
        %v3412 = vadd.f32 %v3288, %v3348
        %v3413 = vadd.f32 %v3289, %v3349
        %v3414 = vadd.f32 %v3290, %v3350
        %v3415 = vadd.f32 %v3291, %v3351
        %v3416 = vadd.f32 %v3292, %v3352
        %v3417 = vadd.f32 %v3293, %v3353
        %v3418 = vadd.f32 %v3294, %v3354
        %v3419 = vadd.f32 %v3295, %v3355
        %v3420 = vadd.f32 %v3296, %v3356
        %v3421 = vadd.f32 %v3297, %v3357
        %v3422 = vadd.f32 %v3298, %v3358
        %v3423 = vadd.f32 %v3299, %v3359
        %v3424 = vmul.f32 %v3227, 0.25
        %v3425 = vmul.f32 %v3229, 0.25
        %v3426 = vmul.f32 %v3232, 0.25
        %v3427 = vmul.f32 %v3234, 0.25
        %v3428 = vadd.f32 %v3236, %v3304
        %v3429 = vadd.f32 %v3237, %v3305
        %v3430 = vadd.f32 %v3238, %v3306
        %v3431 = vadd.f32 %v3239, %v3307
        %v3432 = vadd.f32 %v3240, %v3308
        %v3433 = vadd.f32 %v3241, %v3309
        %v3434 = vadd.f32 %v3242, %v3310
        %v3435 = vadd.f32 %v3243, %v3311
        %v3436 = vadd.f32 %v3244, %v3312
        %v3437 = vadd.f32 %v3245, %v3313
        %v3438 = vadd.f32 %v3246, %v3314
        %v3439 = vadd.f32 %v3247, %v3315
        %v3440 = vadd.f32 %v3248, %v3316
        %v3441 = vadd.f32 %v3249, %v3317
        %v3442 = vadd.f32 %v3250, %v3318
        %v3443 = vadd.f32 %v3251, %v3319
        %v3444 = vadd.f32 %v3252, %v3320
        %v3445 = vadd.f32 %v3253, %v3321
        %v3446 = vadd.f32 %v3254, %v3322
        %v3447 = vadd.f32 %v3255, %v3323
        %v3448 = vadd.f32 %v3256, %v3324
        %v3449 = vadd.f32 %v3257, %v3325
        %v3450 = vadd.f32 %v3258, %v3326
        %v3451 = vadd.f32 %v3259, %v3327
        %v3452 = vadd.f32 %v3260, %v3328
        %v3453 = vadd.f32 %v3261, %v3329
        %v3454 = vadd.f32 %v3262, %v3330
        %v3455 = vadd.f32 %v3263, %v3331
        %v3456 = vadd.f32 %v3264, %v3332
        %v3457 = vadd.f32 %v3265, %v3333
        %v3458 = vadd.f32 %v3266, %v3334
        %v3459 = vadd.f32 %v3267, %v3335
        %v3460 = vadd.f32 %v3268, %v3336
        %v3461 = vadd.f32 %v3269, %v3337
        %v3462 = vadd.f32 %v3270, %v3338
        %v3463 = vadd.f32 %v3271, %v3339
        %v3464 = vadd.f32 %v3272, %v3340
        %v3465 = vadd.f32 %v3273, %v3341
        %v3466 = vadd.f32 %v3274, %v3342
        %v3467 = vadd.f32 %v3275, %v3343
        %v3468 = vadd.f32 %v3276, %v3344
        %v3469 = vadd.f32 %v3277, %v3345
        %v3470 = vadd.f32 %v3278, %v3346
        %v3471 = vadd.f32 %v3279, %v3347
        %v3472 = vadd.f32 %v3280, %v3348
        %v3473 = vadd.f32 %v3281, %v3349
        %v3474 = vadd.f32 %v3282, %v3350
        %v3475 = vadd.f32 %v3283, %v3351
        %v3476 = vadd.f32 %v3284, %v3352
        %v3477 = vadd.f32 %v3285, %v3353
        %v3478 = vadd.f32 %v3286, %v3354
        %v3479 = vadd.f32 %v3287, %v3355
        %v3480 = vadd.f32 %v3288, %v3356
        %v3481 = vadd.f32 %v3289, %v3357
        %v3482 = vadd.f32 %v3290, %v3358
        %v3483 = vadd.f32 %v3291, %v3359
        %v3484 = vadd.f32 %v3292, %v3424
        %v3485 = vadd.f32 %v3293, %v3425
        %v3486 = vadd.f32 %v3294, %v3426
        %v3487 = vadd.f32 %v3295, %v3427
        %v3488 = vadd.f32 %v3296, %v3424
        %v3489 = vadd.f32 %v3297, %v3425
        %v3490 = vadd.f32 %v3298, %v3426
        %v3491 = vadd.f32 %v3299, %v3427
        %3492 = vst [vmem:[%s352] sm:$0xff] %v3360
        %3493 = vst [vmem:[%s352 + $0x8] sm:$0xff] %v3361
        %3494 = vst [vmem:[%s352 + $0x10] sm:$0xff] %v3362
        %3495 = vst [vmem:[%s352 + $0x18] sm:$0xff] %v3363
        %3496 = vst [vmem:[%s352 + $0x20] sm:$0xff] %v3428
        %3497 = vst [vmem:[%s352 + $0x28] sm:$0xff] %v3429
        %3498 = vst [vmem:[%s352 + $0x30] sm:$0xff] %v3430
        %3499 = vst [vmem:[%s352 + $0x38] sm:$0xff] %v3431
        %3500 = vst [vmem:[%s352 + $0x40] sm:$0xff] %v3364
        %3501 = vst [vmem:[%s352 + $0x48] sm:$0xff] %v3365
        %3502 = vst [vmem:[%s352 + $0x50] sm:$0xff] %v3366
        %3503 = vst [vmem:[%s352 + $0x58] sm:$0xff] %v3367
        %3504 = vst [vmem:[%s352 + $0x60] sm:$0xff] %v3432
        %3505 = vst [vmem:[%s352 + $0x68] sm:$0xff] %v3433
        %3506 = vst [vmem:[%s352 + $0x70] sm:$0xff] %v3434
        %3507 = vst [vmem:[%s352 + $0x78] sm:$0xff] %v3435
        %3508 = vst [vmem:[%s352 + $0x80] sm:$0xff] %v3368
        %3509 = vst [vmem:[%s352 + $0x88] sm:$0xff] %v3369
        %3510 = vst [vmem:[%s352 + $0x90] sm:$0xff] %v3370
        %3511 = vst [vmem:[%s352 + $0x98] sm:$0xff] %v3371
        %3512 = vst [vmem:[%s352 + $0xa0] sm:$0xff] %v3436
        %3513 = vst [vmem:[%s352 + $0xa8] sm:$0xff] %v3437
        %3514 = vst [vmem:[%s352 + $0xb0] sm:$0xff] %v3438
        %3515 = vst [vmem:[%s352 + $0xb8] sm:$0xff] %v3439
        %3516 = vst [vmem:[%s352 + $0xc0] sm:$0xff] %v3372
        %3517 = vst [vmem:[%s352 + $0xc8] sm:$0xff] %v3373
        %3518 = vst [vmem:[%s352 + $0xd0] sm:$0xff] %v3374
        %3519 = vst [vmem:[%s352 + $0xd8] sm:$0xff] %v3375
        %3520 = vst [vmem:[%s352 + $0xe0] sm:$0xff] %v3440
        %3521 = vst [vmem:[%s352 + $0xe8] sm:$0xff] %v3441
        %3522 = vst [vmem:[%s352 + $0xf0] sm:$0xff] %v3442
        %3523 = vst [vmem:[%s352 + $0xf8] sm:$0xff] %v3443
        %3524 = vst [vmem:[%s352 + $0x100] sm:$0xff] %v3376
        %3525 = vst [vmem:[%s352 + $0x108] sm:$0xff] %v3377
        %3526 = vst [vmem:[%s352 + $0x110] sm:$0xff] %v3378
        %3527 = vst [vmem:[%s352 + $0x118] sm:$0xff] %v3379
        %3528 = vst [vmem:[%s352 + $0x120] sm:$0xff] %v3444
        %3529 = vst [vmem:[%s352 + $0x128] sm:$0xff] %v3445
        %3530 = vst [vmem:[%s352 + $0x130] sm:$0xff] %v3446
        %3531 = vst [vmem:[%s352 + $0x138] sm:$0xff] %v3447
        %3532 = vst [vmem:[%s352 + $0x140] sm:$0xff] %v3380
        %3533 = vst [vmem:[%s352 + $0x148] sm:$0xff] %v3381
        %3534 = vst [vmem:[%s352 + $0x150] sm:$0xff] %v3382
        %3535 = vst [vmem:[%s352 + $0x158] sm:$0xff] %v3383
        %3536 = vst [vmem:[%s352 + $0x160] sm:$0xff] %v3448
        %3537 = vst [vmem:[%s352 + $0x168] sm:$0xff] %v3449
        %3538 = vst [vmem:[%s352 + $0x170] sm:$0xff] %v3450
        %3539 = vst [vmem:[%s352 + $0x178] sm:$0xff] %v3451
        %3540 = vst [vmem:[%s352 + $0x180] sm:$0xff] %v3384
        %3541 = vst [vmem:[%s352 + $0x188] sm:$0xff] %v3385
        %3542 = vst [vmem:[%s352 + $0x190] sm:$0xff] %v3386
        %3543 = vst [vmem:[%s352 + $0x198] sm:$0xff] %v3387
        %3544 = vst [vmem:[%s352 + $0x1a0] sm:$0xff] %v3452
        %3545 = vst [vmem:[%s352 + $0x1a8] sm:$0xff] %v3453
        %3546 = vst [vmem:[%s352 + $0x1b0] sm:$0xff] %v3454
        %3547 = vst [vmem:[%s352 + $0x1b8] sm:$0xff] %v3455
        %3548 = vst [vmem:[%s352 + $0x1c0] sm:$0xff] %v3388
        %3549 = vst [vmem:[%s352 + $0x1c8] sm:$0xff] %v3389
        %3550 = vst [vmem:[%s352 + $0x1d0] sm:$0xff] %v3390
        %3551 = vst [vmem:[%s352 + $0x1d8] sm:$0xff] %v3391
        %3552 = vst [vmem:[%s352 + $0x1e0] sm:$0xff] %v3456
        %3553 = vst [vmem:[%s352 + $0x1e8] sm:$0xff] %v3457
        %3554 = vst [vmem:[%s352 + $0x1f0] sm:$0xff] %v3458
        %3555 = vst [vmem:[%s352 + $0x1f8] sm:$0xff] %v3459
        %3556 = vst [vmem:[%s352 + $0x200] sm:$0xff] %v3392
        %3557 = vst [vmem:[%s352 + $0x208] sm:$0xff] %v3393
        %3558 = vst [vmem:[%s352 + $0x210] sm:$0xff] %v3394
        %3559 = vst [vmem:[%s352 + $0x218] sm:$0xff] %v3395
        %3560 = vst [vmem:[%s352 + $0x220] sm:$0xff] %v3460
        %3561 = vst [vmem:[%s352 + $0x228] sm:$0xff] %v3461
        %3562 = vst [vmem:[%s352 + $0x230] sm:$0xff] %v3462
        %3563 = vst [vmem:[%s352 + $0x238] sm:$0xff] %v3463
        %3564 = vst [vmem:[%s352 + $0x240] sm:$0xff] %v3396
        %3565 = vst [vmem:[%s352 + $0x248] sm:$0xff] %v3397
        %3566 = vst [vmem:[%s352 + $0x250] sm:$0xff] %v3398
        %3567 = vst [vmem:[%s352 + $0x258] sm:$0xff] %v3399
        %3568 = vst [vmem:[%s352 + $0x260] sm:$0xff] %v3464
        %3569 = vst [vmem:[%s352 + $0x268] sm:$0xff] %v3465
        %3570 = vst [vmem:[%s352 + $0x270] sm:$0xff] %v3466
        %3571 = vst [vmem:[%s352 + $0x278] sm:$0xff] %v3467
        %3572 = vst [vmem:[%s352 + $0x280] sm:$0xff] %v3400
        %3573 = vst [vmem:[%s352 + $0x288] sm:$0xff] %v3401
        %3574 = vst [vmem:[%s352 + $0x290] sm:$0xff] %v3402
        %3575 = vst [vmem:[%s352 + $0x298] sm:$0xff] %v3403
        %3576 = vst [vmem:[%s352 + $0x2a0] sm:$0xff] %v3468
        %3577 = vst [vmem:[%s352 + $0x2a8] sm:$0xff] %v3469
        %3578 = vst [vmem:[%s352 + $0x2b0] sm:$0xff] %v3470
        %3579 = vst [vmem:[%s352 + $0x2b8] sm:$0xff] %v3471
        %3580 = vst [vmem:[%s352 + $0x2c0] sm:$0xff] %v3404
        %3581 = vst [vmem:[%s352 + $0x2c8] sm:$0xff] %v3405
        %3582 = vst [vmem:[%s352 + $0x2d0] sm:$0xff] %v3406
        %3583 = vst [vmem:[%s352 + $0x2d8] sm:$0xff] %v3407
        %3584 = vst [vmem:[%s352 + $0x2e0] sm:$0xff] %v3472
        %3585 = vst [vmem:[%s352 + $0x2e8] sm:$0xff] %v3473
        %3586 = vst [vmem:[%s352 + $0x2f0] sm:$0xff] %v3474
        %3587 = vst [vmem:[%s352 + $0x2f8] sm:$0xff] %v3475
        %3588 = vst [vmem:[%s352 + $0x300] sm:$0xff] %v3408
        %3589 = vst [vmem:[%s352 + $0x308] sm:$0xff] %v3409
        %3590 = vst [vmem:[%s352 + $0x310] sm:$0xff] %v3410
        %3591 = vst [vmem:[%s352 + $0x318] sm:$0xff] %v3411
        %3592 = vst [vmem:[%s352 + $0x320] sm:$0xff] %v3476
        %3593 = vst [vmem:[%s352 + $0x328] sm:$0xff] %v3477
        %3594 = vst [vmem:[%s352 + $0x330] sm:$0xff] %v3478
        %3595 = vst [vmem:[%s352 + $0x338] sm:$0xff] %v3479
        %3596 = vst [vmem:[%s352 + $0x340] sm:$0xff] %v3412
        %3597 = vst [vmem:[%s352 + $0x348] sm:$0xff] %v3413
        %3598 = vst [vmem:[%s352 + $0x350] sm:$0xff] %v3414
        %3599 = vst [vmem:[%s352 + $0x358] sm:$0xff] %v3415
        %3600 = vst [vmem:[%s352 + $0x360] sm:$0xff] %v3480
        %3601 = vst [vmem:[%s352 + $0x368] sm:$0xff] %v3481
        %3602 = vst [vmem:[%s352 + $0x370] sm:$0xff] %v3482
        %3603 = vst [vmem:[%s352 + $0x378] sm:$0xff] %v3483
        %3604 = vst [vmem:[%s352 + $0x380] sm:$0xff] %v3416
        %3605 = vst [vmem:[%s352 + $0x388] sm:$0xff] %v3417
        %3606 = vst [vmem:[%s352 + $0x390] sm:$0xff] %v3418
        %3607 = vst [vmem:[%s352 + $0x398] sm:$0xff] %v3419
        %3608 = vst [vmem:[%s352 + $0x3a0] sm:$0xff] %v3484
        %3609 = vst [vmem:[%s352 + $0x3a8] sm:$0xff] %v3485
        %3610 = vst [vmem:[%s352 + $0x3b0] sm:$0xff] %v3486
        %3611 = vst [vmem:[%s352 + $0x3b8] sm:$0xff] %v3487
        %3612 = vst [vmem:[%s352 + $0x3c0] sm:$0xff] %v3420
        %3613 = vst [vmem:[%s352 + $0x3c8] sm:$0xff] %v3421
        %3614 = vst [vmem:[%s352 + $0x3d0] sm:$0xff] %v3422
        %3615 = vst [vmem:[%s352 + $0x3d8] sm:$0xff] %v3423
        %3616 = vst [vmem:[%s352 + $0x3e0] sm:$0xff] %v3488
        %3617 = vst [vmem:[%s352 + $0x3e8] sm:$0xff] %v3489
        %3618 = vst [vmem:[%s352 + $0x3f0] sm:$0xff] %v3490
        %3619 = vst [vmem:[%s352 + $0x3f8] sm:$0xff] %v3491
        %s3620 = sand.u32 %s247, 1
        %s3621 = scalar_lea.sflag [#allocation5], %s3620
        %s3622 = sand.u32 %s247, 1
        %s3623 = smul.addr %s3622, 1024
        %s3624 = scalar_lea.vmem [#allocation4], %s3623
        // Predicated region
        $region61: #{tpu_custom_call.1} parent=59 // pred_check
          %p3625 = pneg %p257
        $region62: #{tpu_custom_call.1} parent=59 // pred_check_branch
          %3627 = sbr.rel (%p3625) target = $region64
        $region63: #{tpu_custom_call.1} parent=59 // pred_region
          %3629 = vsyncadd %s3621, 0
          %s3630 = smul.addr %s24, 128
          %s3631 = smul.addr %s3630, 8
          %s3632 = scalar_lea.hbm %s10, %s3631
          %s3633 = sshll.u32 %s3624, 4
          %s3634 = int_to_ptr.vmem [resolvable:$true] %s3633
          %s3635 = sshll.u32 %s3632, 4
          %s3636 = int_to_ptr.hbm [resolvable:$true] %s3635
          %3641 = dma.vmem_to_hbm [thread:$0]  %s3634, 16384, %s3636, %s3621, 128, 128, 8
        $region64: #{tpu_custom_call.1} parent=59 // pred_fallthru
          _
      $region60: #{tpu_custom_call.1} parent=5 // pred_fallthru
        _
      %p3642 = scmp.le.s32.totalorder 2, %s19
      // Predicated region
      $region65: #{tpu_custom_call.1} parent=5 // pred_check
        %p3643 = pneg %p3642
      $region66: #{tpu_custom_call.1} parent=5 // pred_check_branch
        %3645 = sbr.rel (%p3643) target = $region68
      $region67: #{tpu_custom_call.1} parent=5 // pred_region
        %s3646 = ssub.s32 %s19, 2
        // Predicated region
        $region69: #{tpu_custom_call.1} parent=67 // pred_check
          %p3647 = pneg %p263
        $region70: #{tpu_custom_call.1} parent=67 // pred_check_branch
          %3649 = sbr.rel (%p3647) target = $region72
        $region71: #{tpu_custom_call.1} parent=67 // pred_region
          %s3650 = sand.u32 %s248, 1
          %s3651 = scalar_lea.sflag [#allocation5], %s3650
          %s3652 = sand.u32 %s248, 1
          %s3653 = smul.addr %s3652, 1024
          %s3654 = scalar_lea.vmem [#allocation4], %s3653
          %3656 = dma.done %s3651, 16384
        $region72: #{tpu_custom_call.1} parent=67 // pred_fallthru
          _
      $region68: #{tpu_custom_call.1} parent=5 // pred_fallthru
        _
    $region6: #{tpu_custom_call.1} parent=1 // loop_footer
      %s23 = sadd.s32 1, %s19
    $region7: #{tpu_custom_call.1} parent=1 // loop_footer_branch
      %18 = sbr.rel target = $region3
    $region8: #{tpu_custom_call.1} parent=1 // loop_exit
      _
    %3657 = vsyncpa [#allocation5], 1
    %s3658 = scalar_lea.sflag [#allocation5], 1
    %3659 = vsyncpa %s3658, 1

</llo_original>
